<compile_context>
chip_gen: v7x
topology: tpu7x:2x2x1
jax: 0.10.0
libtpu: 0.0.40
codegen_flags: <defaults>
</compile_context>

<pallas_src>
import functools

import jax
import jax.numpy as jnp
from jax import lax
from jax.experimental import pallas as pl
from jax.experimental.pallas import tpu as pltpu


WINDOW_SIZE = 11
SIGMA = 1.5
ALPHA = 0.8
C1 = 0.01 ** 2
C2 = 0.03 ** 2


# ----------------------------- blur building blocks -----------------------------
def gaussian_1d(window_size=WINDOW_SIZE, sigma=SIGMA):
    x = jnp.arange(window_size, dtype=jnp.float32) - window_size // 2
    g = jnp.exp(-0.5 * (x / sigma) ** 2)
    return g / jnp.sum(g)


def toeplitz_band(size, g, window_size=WINDOW_SIZE):
    """T[i, j] = g[j - i + pad] if in-band else 0 (zero-padded conv).

    The Gaussian window is symmetric, so T is symmetric and
    T_h @ x @ T_w == conv2d(x, g g^T, padding=pad) with zero padding.
    """
    pad = window_size // 2
    idx = jnp.arange(size)
    diff = idx[None, :] - idx[:, None] + pad
    inband = (diff >= 0) & (diff < window_size)
    return jnp.where(inband, g[jnp.clip(diff, 0, window_size - 1)], 0.0).astype(
        jnp.float32
    )


def _split_hi_lo(x):
    """Split f32 into bf16 hi + bf16 lo with x ~= hi + lo."""
    hi = x.astype(jnp.bfloat16)
    lo = (x - hi.astype(jnp.float32)).astype(jnp.bfloat16)
    return hi, lo


def _bf16x3_matmul(a_hi, a_lo, b_hi, b_lo):
    """(M, K) @ (K, N) at ~f32 accuracy via 3 plain bf16 MXU passes."""
    out = jnp.dot(a_hi, b_hi, preferred_element_type=jnp.float32)
    out += jnp.dot(a_hi, b_lo, preferred_element_type=jnp.float32)
    out += jnp.dot(a_lo, b_hi, preferred_element_type=jnp.float32)
    return out


# ------------------------------------ kernel ------------------------------------
def _combined_loss_kernel(pred_ref, tgt_ref, th_hi_ref, th_lo_ref,
                          tw_hi_ref, tw_lo_ref, out_ref, *, h_valid, w_valid):
    x1 = pred_ref[...].astype(jnp.float32)      # (B, Hp, Wp)  (C squeezed away)
    x2 = tgt_ref[...].astype(jnp.float32)
    b, hp, wp = x1.shape
    nmaps = 5 * b

    # Five blur inputs stacked directly as bf16 hi / bf16 lo (no f32 concat).
    hi_maps, lo_maps = [], []
    for m in (x1, x2, x1 * x1, x2 * x2, x1 * x2):
        m_hi, m_lo = _split_hi_lo(m)
        hi_maps.append(m_hi)
        lo_maps.append(m_lo)
    stack_hi = jnp.concatenate(hi_maps, axis=0).reshape(nmaps * hp, wp)
    stack_lo = jnp.concatenate(lo_maps, axis=0).reshape(nmaps * hp, wp)

    # Right (W) blur: ONE fused (5B*Hp, Wp) @ (Wp, Wp) bf16x3 matmul.
    right = _bf16x3_matmul(stack_hi, stack_lo, tw_hi_ref[...], tw_lo_ref[...])

    # One transpose of the intermediate, then the left (H) blur as ONE flat
    # (5B*Wp, Hp) @ (Hp, Hp) bf16x3 matmul (T_h is symmetric).  The epilogue
    # stays in this transposed (W, H) layout (elementwise + global sum only).
    right_t = jnp.transpose(right.reshape(nmaps, hp, wp), (0, 2, 1))  # (5B,Wp,Hp)
    r_hi, r_lo = _split_hi_lo(right_t)
    blurred = _bf16x3_matmul(
        r_hi.reshape(nmaps * wp, hp), r_lo.reshape(nmaps * wp, hp),
        th_hi_ref[...], th_lo_ref[...],
    ).reshape(nmaps, wp, hp)

    mu1 = blurred[0 * b:1 * b]
    mu2 = blurred[1 * b:2 * b]
    e11 = blurred[2 * b:3 * b]
    e22 = blurred[3 * b:4 * b]
    e12 = blurred[4 * b:5 * b]

    mu1_sq = mu1 * mu1
    mu2_sq = mu2 * mu2
    mu1_mu2 = mu1 * mu2
    sigma1_sq = e11 - mu1_sq
    sigma2_sq = e22 - mu2_sq
    sigma12 = e12 - mu1_mu2

    ssim_map = ((2.0 * mu1_mu2 + C1) * (2.0 * sigma12 + C2)) / (
        (mu1_sq + mu2_sq + C1) * (sigma1_sq + sigma2_sq + C2)
    )

    if h_valid != hp or w_valid != wp:
        # Mask lane/sublane padding out of the SSIM sum.  In the transposed
        # layout axis 1 indexes W and axis 2 indexes H.
        w_idx = lax.broadcasted_iota(jnp.int32, (b, wp, hp), 1)
        h_idx = lax.broadcasted_iota(jnp.int32, (b, wp, hp), 2)
        ssim_map = jnp.where((w_idx < w_valid) & (h_idx < h_valid), ssim_map, 0.0)

    diff = x1 - x2   # padded pixels are zero in both images -> contribute 0.
    # Merged per-block partial sums; final mean / alpha mix happens in the
    # wrapper, so grid steps are fully independent ("parallel", megacore-safe).
    out_ref[:, :, 0:1] = jnp.sum(ssim_map, keepdims=True)
    out_ref[:, :, 1:2] = jnp.sum(diff * diff, keepdims=True)


# ------------------------------- tiling / VMEM model -------------------------------
def _round_up(x, m):
    return ((x + m - 1) // m) * m


def _tpu_vmem_bytes():
    """Generation-aware physical VMEM per TensorCore (conservative on failure)."""
    candidates = []
    try:
        v = int(pltpu.get_tpu_info().vmem_capacity_bytes)
        if v > 0:
            candidates.append(v)
    except Exception:
        pass
    try:
        kind = jax.devices()[0].device_kind.lower()
        candidates.append(64 * 1024 * 1024 if "v7" in kind else 128 * 1024 * 1024)
    except Exception:
        pass
    return min(candidates) if candidates else 64 * 1024 * 1024


def _block_vmem_bytes(bt, hp, wp):
    """Rough per-grid-step VMEM footprint: pipeline buffers + live temporaries."""
    img = hp * wp
    in_pipeline = 2 * 2 * bt * img * 4                 # 2 inputs x 2 buffers, f32
    toeplitz = 2 * 2 * 2 * (hp * hp + wp * wp)         # 4 bf16 matrices, 2 buffers
    # Live intermediates: x1/x2 f32 (2) + 5-map bf16 hi/lo (5) + right f32 (5)
    # + transposed f32 (5) + its bf16 hi/lo (5) + blurred f32 (5) + ~6 f32
    # epilogue temps  ->  ~33 f32-map equivalents per image in the tile.
    work = 33 * bt * img * 4
    return in_pipeline + toeplitz + work


def _pick_batch_tile(n, hp, wp, budget_bytes):
    """Largest divisor of n that fits the budget, keeping num_blocks >= 2."""
    divisors = [d for d in range(1, n + 1) if n % d == 0]
    fitting = [d for d in divisors if _block_vmem_bytes(d, hp, wp) <= budget_bytes]
    if not fitting:
        return 1
    # Keep num_blocks >= 2 so the "parallel" axis can span both v7x TensorCores,
    # preferring an even number of blocks.
    for need_even in (True, False):
        cands = [d for d in fitting
                 if (n // d) >= 2 and (not need_even or (n // d) % 2 == 0)]
        if cands:
            return max(cands)
    return max(fitting)


# ------------------------------------ wrapper ------------------------------------
def combined_loss(pred, target, alpha=ALPHA):
    """pred, target: (N, 1, H, W) float32 (NCHW, C == 1). Returns scalar loss."""
    assert pred.shape == target.shape and pred.ndim == 4 and pred.shape[1] == 1
    n, _, h, w = pred.shape

    hp = _round_up(h, 8)
    wp = _round_up(w, 128)
    if (hp, wp) != (h, w):
        pad = ((0, 0), (0, 0), (0, hp - h), (0, wp - w))
        pred = jnp.pad(pred, pad)
        target = jnp.pad(target, pad)

    g1d = gaussian_1d()
    th_hi, th_lo = _split_hi_lo(toeplitz_band(hp, g1d))   # loop-invariant splits
    tw_hi, tw_lo = _split_hi_lo(toeplitz_band(wp, g1d))   # done once, in bf16

    vmem_phys = _tpu_vmem_bytes()
    vmem_limit = (vmem_phys * 3) // 4           # 48 MiB on v7x, 96 MiB on v5e/v6e
    bt = _pick_batch_tile(n, hp, wp, (vmem_limit * 85) // 100)
    num_blocks = n // bt

    kernel = functools.partial(_combined_loss_kernel, h_valid=h, w_valid=w)

    partials = pl.pallas_call(
        kernel,
        out_shape=jax.ShapeDtypeStruct((num_blocks, 1, 2), jnp.float32),
        grid_spec=pltpu.PrefetchScalarGridSpec(
            num_scalar_prefetch=0,
            grid=(num_blocks,),
            in_specs=[
                # NCHW fed directly; the C == 1 dim is squeezed by the BlockSpec.
                pl.BlockSpec((bt, None, hp, wp), lambda i: (i, 0, 0, 0)),
                pl.BlockSpec((bt, None, hp, wp), lambda i: (i, 0, 0, 0)),
                # Toeplitz hi/lo blocks (constant block index -> fetched once).
                pl.BlockSpec((hp, hp), lambda i: (0, 0)),
                pl.BlockSpec((hp, hp), lambda i: (0, 0)),
                pl.BlockSpec((wp, wp), lambda i: (0, 0)),
                pl.BlockSpec((wp, wp), lambda i: (0, 0)),
            ],
            out_specs=pl.BlockSpec((1, 1, 2), lambda i: (i, 0, 0)),
        ),
        compiler_params=pltpu.CompilerParams(
            dimension_semantics=("parallel",),       # megacore on v7x
            vmem_limit_bytes=int(vmem_limit),
        ),
    )(pred, target, th_hi, th_lo, tw_hi, tw_lo)

    denom = jnp.float32(n * h * w)
    mse_loss = jnp.sum(partials[:, 0, 1]) / denom
    ssim_loss = 1.0 - jnp.sum(partials[:, 0, 0]) / denom
    return alpha * mse_loss + (1.0 - alpha) * ssim_loss


# ----------------------- pure-JAX reference (for verification) -----------------------
def _reference_loss(pred, target, alpha=ALPHA):
    g = gaussian_1d()
    window = (g[:, None] @ g[None, :])[None, None, :, :]   # (1, 1, 11, 11)
    pad = WINDOW_SIZE // 2

    def conv(x):
        return lax.conv_general_dilated(
            x, window, window_strides=(1, 1),
            padding=[(pad, pad), (pad, pad)],
            dimension_numbers=("NCHW", "OIHW", "NCHW"),
            precision=lax.Precision.HIGHEST,
        )

    mu1, mu2 = conv(pred), conv(target)
    mu1_sq, mu2_sq, mu1_mu2 = mu1 ** 2, mu2 ** 2, mu1 * mu2
    s1 = conv(pred * pred) - mu1_sq
    s2 = conv(target * target) - mu2_sq
    s12 = conv(pred * target) - mu1_mu2
    ssim_map = ((2 * mu1_mu2 + C1) * (2 * s12 + C2)) / (
        (mu1_sq + mu2_sq + C1) * (s1 + s2 + C2)
    )
    ssim_loss = 1.0 - jnp.mean(ssim_map)
    mse_loss = jnp.mean((pred - target) ** 2)
    return alpha * mse_loss + (1 - alpha) * ssim_loss


if __name__ == "__main__":
    key = jax.random.PRNGKey(0)
    k1, k2 = jax.random.split(key)
    N, C, H, W = 2, 1, 16, 16          # SSIM's grouped conv requires C == 1
    pred = jax.random.uniform(k1, (N, C, H, W), dtype=jnp.float32)
    target = jax.random.uniform(k2, (N, C, H, W), dtype=jnp.float32)

    loss = jax.block_until_ready(jax.jit(combined_loss)(pred, target))
    ref = jax.block_until_ready(_reference_loss(pred, target))

    assert jnp.isfinite(loss), f"non-finite loss: {loss}"
    # bf16x3 matmuls are near-f32; allow a slightly relaxed (still tight) tol.
    assert jnp.allclose(loss, ref, rtol=1e-3, atol=1e-4), (loss, ref)
    print("KERNEL_OK")
</pallas_src>

<mosaic_0001>
module attributes {stable_mosaic.version = 11 : i64} {
  func.func @_combined_loss_kernel(%arg0: i32, %arg1: memref<1x1x16x128xf32, #tpu.memory_space<vmem>>, %arg2: memref<1x1x16x128xf32, #tpu.memory_space<vmem>>, %arg3: memref<16x16xbf16, #tpu.memory_space<vmem>>, %arg4: memref<16x16xbf16, #tpu.memory_space<vmem>>, %arg5: memref<128x128xbf16, #tpu.memory_space<vmem>>, %arg6: memref<128x128xbf16, #tpu.memory_space<vmem>>, %arg7: memref<1x1x2xf32, #tpu.memory_space<vmem>>) attributes {dimension_semantics = [#tpu.dimension_semantics<parallel>], iteration_bounds = array<i64: 2>, scalar_prefetch = 0 : i64, scratch_operands = 0 : i64, tpu.core_type = #tpu.core_type<tc>, window_params = [{transform_indices = @transform_0, window_bounds = array<i64: 1, 1, 16, 128>}, {transform_indices = @transform_1, window_bounds = array<i64: 1, 1, 16, 128>}, {pipeline_mode = #tpu.pipeline_mode<synchronous>, transform_indices = @transform_2, window_bounds = array<i64: 16, 16>}, {pipeline_mode = #tpu.pipeline_mode<synchronous>, transform_indices = @transform_3, window_bounds = array<i64: 16, 16>}, {pipeline_mode = #tpu.pipeline_mode<synchronous>, transform_indices = @transform_4, window_bounds = array<i64: 128, 128>}, {pipeline_mode = #tpu.pipeline_mode<synchronous>, transform_indices = @transform_5, window_bounds = array<i64: 128, 128>}, {transform_indices = @transform_6, window_bounds = array<i64: 1, 1, 2>}]} {
    %c0 = arith.constant 0 : index
    %c0_0 = arith.constant 0 : index
    %c0_1 = arith.constant 0 : index
    %c0_2 = arith.constant 0 : index
    %0 = vector.load %arg1[%c0, %c0_0, %c0_1, %c0_2] : memref<1x1x16x128xf32, #tpu.memory_space<vmem>>, vector<1x1x16x128xf32>
    %1 = vector.shape_cast %0 : vector<1x1x16x128xf32> to vector<1x16x128xf32>
    %c0_3 = arith.constant 0 : index
    %c0_4 = arith.constant 0 : index
    %c0_5 = arith.constant 0 : index
    %c0_6 = arith.constant 0 : index
    %2 = vector.load %arg2[%c0_3, %c0_4, %c0_5, %c0_6] : memref<1x1x16x128xf32, #tpu.memory_space<vmem>>, vector<1x1x16x128xf32>
    %3 = vector.shape_cast %2 : vector<1x1x16x128xf32> to vector<1x16x128xf32>
    %4 = arith.mulf %1, %1 : vector<1x16x128xf32>
    %5 = arith.mulf %3, %3 : vector<1x16x128xf32>
    %6 = arith.mulf %1, %3 : vector<1x16x128xf32>
    %7 = arith.truncf %1 : vector<1x16x128xf32> to vector<1x16x128xbf16>
    %8 = arith.extf %7 : vector<1x16x128xbf16> to vector<1x16x128xf32>
    %9 = arith.subf %1, %8 : vector<1x16x128xf32>
    %10 = arith.truncf %9 : vector<1x16x128xf32> to vector<1x16x128xbf16>
    %11 = arith.truncf %3 : vector<1x16x128xf32> to vector<1x16x128xbf16>
    %12 = arith.extf %11 : vector<1x16x128xbf16> to vector<1x16x128xf32>
    %13 = arith.subf %3, %12 : vector<1x16x128xf32>
    %14 = arith.truncf %13 : vector<1x16x128xf32> to vector<1x16x128xbf16>
    %15 = arith.truncf %4 : vector<1x16x128xf32> to vector<1x16x128xbf16>
    %16 = arith.extf %15 : vector<1x16x128xbf16> to vector<1x16x128xf32>
    %17 = arith.subf %4, %16 : vector<1x16x128xf32>
    %18 = arith.truncf %17 : vector<1x16x128xf32> to vector<1x16x128xbf16>
    %19 = arith.truncf %5 : vector<1x16x128xf32> to vector<1x16x128xbf16>
    %20 = arith.extf %19 : vector<1x16x128xbf16> to vector<1x16x128xf32>
    %21 = arith.subf %5, %20 : vector<1x16x128xf32>
    %22 = arith.truncf %21 : vector<1x16x128xf32> to vector<1x16x128xbf16>
    %23 = arith.truncf %6 : vector<1x16x128xf32> to vector<1x16x128xbf16>
    %24 = arith.extf %23 : vector<1x16x128xbf16> to vector<1x16x128xf32>
    %25 = arith.subf %6, %24 : vector<1x16x128xf32>
    %26 = arith.truncf %25 : vector<1x16x128xf32> to vector<1x16x128xbf16>
    %27 = tpu.concatenate %7, %11, %15, %19, %23 in 0 : vector<1x16x128xbf16>, vector<1x16x128xbf16>, vector<1x16x128xbf16>, vector<1x16x128xbf16>, vector<1x16x128xbf16> -> vector<5x16x128xbf16>
    %28 = vector.shape_cast %27 : vector<5x16x128xbf16> to vector<80x128xbf16>
    %29 = tpu.concatenate %10, %14, %18, %22, %26 in 0 : vector<1x16x128xbf16>, vector<1x16x128xbf16>, vector<1x16x128xbf16>, vector<1x16x128xbf16>, vector<1x16x128xbf16> -> vector<5x16x128xbf16>
    %30 = vector.shape_cast %29 : vector<5x16x128xbf16> to vector<80x128xbf16>
    %c0_7 = arith.constant 0 : index
    %c0_8 = arith.constant 0 : index
    %31 = vector.load %arg5[%c0_7, %c0_8] : memref<128x128xbf16, #tpu.memory_space<vmem>>, vector<128x128xbf16>
    %c0_9 = arith.constant 0 : index
    %c0_10 = arith.constant 0 : index
    %32 = vector.load %arg6[%c0_9, %c0_10] : memref<128x128xbf16, #tpu.memory_space<vmem>>, vector<128x128xbf16>
    %cst = arith.constant dense<0.000000e+00> : vector<80x128xf32>
    %33 = tpu.matmul %28, %31, %cst {dimension_numbers = #tpu.dot_dimension_numbers<[1], [0], [0], [1], [0, 0, 1, 1], [], []>} : vector<80x128xbf16>, vector<128x128xbf16>, vector<80x128xf32> -> vector<80x128xf32>
    %cst_11 = arith.constant dense<0.000000e+00> : vector<80x128xf32>
    %34 = tpu.matmul %28, %32, %cst_11 {dimension_numbers = #tpu.dot_dimension_numbers<[1], [0], [0], [1], [0, 0, 1, 1], [], []>} : vector<80x128xbf16>, vector<128x128xbf16>, vector<80x128xf32> -> vector<80x128xf32>
    %35 = arith.addf %33, %34 : vector<80x128xf32>
    %cst_12 = arith.constant dense<0.000000e+00> : vector<80x128xf32>
    %36 = tpu.matmul %30, %31, %cst_12 {dimension_numbers = #tpu.dot_dimension_numbers<[1], [0], [0], [1], [0, 0, 1, 1], [], []>} : vector<80x128xbf16>, vector<128x128xbf16>, vector<80x128xf32> -> vector<80x128xf32>
    %37 = arith.addf %35, %36 : vector<80x128xf32>
    %38 = vector.shape_cast %37 : vector<80x128xf32> to vector<5x16x128xf32>
    %39 = tpu.transpose %38, [0, 2, 1] : vector<5x16x128xf32> -> vector<5x128x16xf32>
    %40 = arith.truncf %39 : vector<5x128x16xf32> to vector<5x128x16xbf16>
    %41 = arith.extf %40 : vector<5x128x16xbf16> to vector<5x128x16xf32>
    %42 = arith.subf %39, %41 : vector<5x128x16xf32>
    %43 = arith.truncf %42 : vector<5x128x16xf32> to vector<5x128x16xbf16>
    %44 = vector.shape_cast %40 : vector<5x128x16xbf16> to vector<640x16xbf16>
    %45 = vector.shape_cast %43 : vector<5x128x16xbf16> to vector<640x16xbf16>
    %c0_13 = arith.constant 0 : index
    %c0_14 = arith.constant 0 : index
    %46 = vector.load %arg3[%c0_13, %c0_14] : memref<16x16xbf16, #tpu.memory_space<vmem>>, vector<16x16xbf16>
    %c0_15 = arith.constant 0 : index
    %c0_16 = arith.constant 0 : index
    %47 = vector.load %arg4[%c0_15, %c0_16] : memref<16x16xbf16, #tpu.memory_space<vmem>>, vector<16x16xbf16>
    %cst_17 = arith.constant dense<0.000000e+00> : vector<640x16xf32>
    %48 = tpu.matmul %44, %46, %cst_17 {dimension_numbers = #tpu.dot_dimension_numbers<[1], [0], [0], [1], [0, 0, 1, 1], [], []>} : vector<640x16xbf16>, vector<16x16xbf16>, vector<640x16xf32> -> vector<640x16xf32>
    %cst_18 = arith.constant dense<0.000000e+00> : vector<640x16xf32>
    %49 = tpu.matmul %44, %47, %cst_18 {dimension_numbers = #tpu.dot_dimension_numbers<[1], [0], [0], [1], [0, 0, 1, 1], [], []>} : vector<640x16xbf16>, vector<16x16xbf16>, vector<640x16xf32> -> vector<640x16xf32>
    %50 = arith.addf %48, %49 : vector<640x16xf32>
    %cst_19 = arith.constant dense<0.000000e+00> : vector<640x16xf32>
    %51 = tpu.matmul %45, %46, %cst_19 {dimension_numbers = #tpu.dot_dimension_numbers<[1], [0], [0], [1], [0, 0, 1, 1], [], []>} : vector<640x16xbf16>, vector<16x16xbf16>, vector<640x16xf32> -> vector<640x16xf32>
    %52 = arith.addf %50, %51 : vector<640x16xf32>
    %53 = vector.shape_cast %52 : vector<640x16xf32> to vector<5x128x16xf32>
    %54 = vector.extract_strided_slice %53 {offsets = [0, 0, 0], sizes = [1, 128, 16], strides = [1, 1, 1]} : vector<5x128x16xf32> to vector<1x128x16xf32>
    %55 = vector.extract_strided_slice %53 {offsets = [1, 0, 0], sizes = [1, 128, 16], strides = [1, 1, 1]} : vector<5x128x16xf32> to vector<1x128x16xf32>
    %56 = vector.extract_strided_slice %53 {offsets = [2, 0, 0], sizes = [1, 128, 16], strides = [1, 1, 1]} : vector<5x128x16xf32> to vector<1x128x16xf32>
    %57 = vector.extract_strided_slice %53 {offsets = [3, 0, 0], sizes = [1, 128, 16], strides = [1, 1, 1]} : vector<5x128x16xf32> to vector<1x128x16xf32>
    %58 = vector.extract_strided_slice %53 {offsets = [4, 0, 0], sizes = [1, 128, 16], strides = [1, 1, 1]} : vector<5x128x16xf32> to vector<1x128x16xf32>
    %59 = arith.mulf %54, %54 : vector<1x128x16xf32>
    %60 = arith.mulf %55, %55 : vector<1x128x16xf32>
    %61 = arith.mulf %54, %55 : vector<1x128x16xf32>
    %62 = arith.subf %56, %59 : vector<1x128x16xf32>
    %63 = arith.subf %57, %60 : vector<1x128x16xf32>
    %64 = arith.subf %58, %61 : vector<1x128x16xf32>
    %cst_20 = arith.constant 2.000000e+00 : f32
    %65 = vector.broadcast %cst_20 : f32 to vector<1x128x16xf32>
    %66 = arith.mulf %65, %61 : vector<1x128x16xf32>
    %cst_21 = arith.constant 9.99999974E-5 : f32
    %67 = vector.broadcast %cst_21 : f32 to vector<1x128x16xf32>
    %68 = arith.addf %66, %67 : vector<1x128x16xf32>
    %cst_22 = arith.constant 2.000000e+00 : f32
    %69 = vector.broadcast %cst_22 : f32 to vector<1x128x16xf32>
    %70 = arith.mulf %69, %64 : vector<1x128x16xf32>
    %cst_23 = arith.constant 8.99999984E-4 : f32
    %71 = vector.broadcast %cst_23 : f32 to vector<1x128x16xf32>
    %72 = arith.addf %70, %71 : vector<1x128x16xf32>
    %73 = arith.mulf %68, %72 : vector<1x128x16xf32>
    %74 = arith.addf %59, %60 : vector<1x128x16xf32>
    %cst_24 = arith.constant 9.99999974E-5 : f32
    %75 = vector.broadcast %cst_24 : f32 to vector<1x128x16xf32>
    %76 = arith.addf %74, %75 : vector<1x128x16xf32>
    %77 = arith.addf %62, %63 : vector<1x128x16xf32>
    %cst_25 = arith.constant 8.99999984E-4 : f32
    %78 = vector.broadcast %cst_25 : f32 to vector<1x128x16xf32>
    %79 = arith.addf %77, %78 : vector<1x128x16xf32>
    %80 = arith.mulf %76, %79 : vector<1x128x16xf32>
    %81 = arith.divf %73, %80 : vector<1x128x16xf32>
    %82 = tpu.iota {dimensions = array<i32: 1>} : vector<1x128x16xi32>
    %83 = tpu.iota {dimensions = array<i32: 2>} : vector<1x128x16xi32>
    %c16_i32 = arith.constant 16 : i32
    %84 = vector.broadcast %c16_i32 : i32 to vector<1x128x16xi32>
    %85 = arith.cmpi slt, %82, %84 : vector<1x128x16xi32>
    %c16_i32_26 = arith.constant 16 : i32
    %86 = vector.broadcast %c16_i32_26 : i32 to vector<1x128x16xi32>
    %87 = arith.cmpi slt, %83, %86 : vector<1x128x16xi32>
    %88 = arith.andi %85, %87 : vector<1x128x16xi1>
    %cst_27 = arith.constant 0.000000e+00 : f32
    %89 = vector.broadcast %cst_27 : f32 to vector<1x128x16xf32>
    %90 = arith.select %88, %81, %89 : vector<1x128x16xi1>, vector<1x128x16xf32>
    %91 = arith.subf %1, %3 : vector<1x16x128xf32>
    %92 = vector.shape_cast %90 : vector<1x128x16xf32> to vector<1x1x128x16xf32>
    %cst_28 = arith.constant dense<0.000000e+00> : vector<1xf32>
    %93 = vector.multi_reduction <add>, %92, %cst_28 [1, 2, 3] : vector<1x1x128x16xf32> to vector<1xf32>
    %94 = vector.shape_cast %93 : vector<1xf32> to vector<1x1x1x1xf32>
    %95 = vector.extract %94[0, 0, 0, 0] : f32 from vector<1x1x1x1xf32>
    %96 = vector.broadcast %95 : f32 to vector<1x1x1xf32>
    %c0_29 = arith.constant 0 : index
    %c0_30 = arith.constant 0 : index
    %c0_31 = arith.constant 0 : index
    %97 = vector.load %arg7[%c0_29, %c0_30, %c0_31] : memref<1x1x2xf32, #tpu.memory_space<vmem>>, vector<1x1x1xf32>
    tpu.vector_store %arg7[%c0_29, %c0_30, %c0_31], %96 {strides = array<i32>} : memref<1x1x2xf32, #tpu.memory_space<vmem>>, vector<1x1x1xf32>,
    %98 = arith.mulf %91, %91 : vector<1x16x128xf32>
    %99 = vector.shape_cast %98 : vector<1x16x128xf32> to vector<1x1x16x128xf32>
    %cst_32 = arith.constant dense<0.000000e+00> : vector<1xf32>
    %100 = vector.multi_reduction <add>, %99, %cst_32 [1, 2, 3] : vector<1x1x16x128xf32> to vector<1xf32>
    %101 = vector.shape_cast %100 : vector<1xf32> to vector<1x1x1x1xf32>
    %102 = vector.extract %101[0, 0, 0, 0] : f32 from vector<1x1x1x1xf32>
    %103 = vector.broadcast %102 : f32 to vector<1x1x1xf32>
    %c0_33 = arith.constant 0 : index
    %c0_34 = arith.constant 0 : index
    %c1 = arith.constant 1 : index
    %104 = vector.load %arg7[%c0_33, %c0_34, %c1] : memref<1x1x2xf32, #tpu.memory_space<vmem>>, vector<1x1x1xf32>
    tpu.vector_store %arg7[%c0_33, %c0_34, %c1], %103 {strides = array<i32>} : memref<1x1x2xf32, #tpu.memory_space<vmem>>, vector<1x1x1xf32>,
    return
  }
  func.func @transform_0(%arg0: i32) -> (i32, i32, i32, i32) {
    %c0_i32 = arith.constant 0 : i32
    %c0_i32_0 = arith.constant 0 : i32
    %c0_i32_1 = arith.constant 0 : i32
    %c0_i32_2 = arith.constant 0 : i32
    return %arg0, %c0_i32, %c0_i32_0, %c0_i32_1 : i32, i32, i32, i32
  }
  func.func @transform_1(%arg0: i32) -> (i32, i32, i32, i32) {
    %c0_i32 = arith.constant 0 : i32
    %c0_i32_0 = arith.constant 0 : i32
    %c0_i32_1 = arith.constant 0 : i32
    %c0_i32_2 = arith.constant 0 : i32
    return %arg0, %c0_i32, %c0_i32_0, %c0_i32_1 : i32, i32, i32, i32
  }
  func.func @transform_2(%arg0: i32) -> (i32, i32) {
    %c0_i32 = arith.constant 0 : i32
    %c0_i32_0 = arith.constant 0 : i32
    %c0_i32_1 = arith.constant 0 : i32
    return %c0_i32, %c0_i32_0 : i32, i32
  }
  func.func @transform_3(%arg0: i32) -> (i32, i32) {
    %c0_i32 = arith.constant 0 : i32
    %c0_i32_0 = arith.constant 0 : i32
    %c0_i32_1 = arith.constant 0 : i32
    return %c0_i32, %c0_i32_0 : i32, i32
  }
  func.func @transform_4(%arg0: i32) -> (i32, i32) {
    %c0_i32 = arith.constant 0 : i32
    %c0_i32_0 = arith.constant 0 : i32
    %c0_i32_1 = arith.constant 0 : i32
    return %c0_i32, %c0_i32_0 : i32, i32
  }
  func.func @transform_5(%arg0: i32) -> (i32, i32) {
    %c0_i32 = arith.constant 0 : i32
    %c0_i32_0 = arith.constant 0 : i32
    %c0_i32_1 = arith.constant 0 : i32
    return %c0_i32, %c0_i32_0 : i32, i32
  }
  func.func @transform_6(%arg0: i32) -> (i32, i32, i32) {
    %c0_i32 = arith.constant 0 : i32
    %c0_i32_0 = arith.constant 0 : i32
    %c0_i32_1 = arith.constant 0 : i32
    return %arg0, %c0_i32, %c0_i32_0 : i32, i32, i32
  }
}

</mosaic_0001>

<llo_original>
// kernel: combined_loss.1
$region0: #{combined_loss.1}
  #allocation0 [shape = 'u32[]', space=smem, size = 0x4, offset = 0x4, fixed_abs, tag = 'smem constant byte address 0x4 - core index']
  #allocation1 [shape = 'u32[144,128]{1,0:T(1,128)}', space=vmem, size = 0x12000, scoped, tag = 'internal scratch']
  %s0 = inlined_call_operand.hbm [shape: f32[2,1,16,128], index: 0, kind: input, shape index: {}]
  %s1 = inlined_call_operand.hbm [shape: f32[2,1,16,128], index: 1, kind: input, shape index: {}]
  %s2 = inlined_call_operand.hbm [shape: bf16[16,16], index: 2, kind: input, shape index: {}]
  %s3 = inlined_call_operand.hbm [shape: bf16[16,16], index: 3, kind: input, shape index: {}]
  %s4 = inlined_call_operand.hbm [shape: bf16[128,128], index: 4, kind: input, shape index: {}]
  %s5 = inlined_call_operand.hbm [shape: bf16[128,128], index: 5, kind: input, shape index: {}]
  %s6 = inlined_call_operand.hbm [shape: f32[2,1,2], index: 6, kind: output, shape index: {}]
  %s7 = sld [smem:[#allocation0]]
  $region81: #{combined_loss.1} parent=0
    _
  %s9 = ssub.s32 1, %s7
  %s10 = scalar_select 0, %s9, %s7
  $region1: #{combined_loss.1} parent=0
    #allocation2 [shape = 'u8[16384]{0}', space=vmem, size = 0x4000, scoped, tag = 'input window, operand 0']
    #allocation3 [shape = 's32[2]{0}', space=sflag, size = 0x8, scoped, tag = 'scoped memory for combined_loss.1']
    #allocation4 [shape = 's32[2]{0}', space=sflag, size = 0x8, scoped, tag = 'scoped memory for combined_loss.1']
    #allocation5 [shape = 'u8[16384]{0}', space=vmem, size = 0x4000, scoped, tag = 'input window, operand 1']
    #allocation6 [shape = 's32[2]{0}', space=sflag, size = 0x8, scoped, tag = 'scoped memory for combined_loss.1']
    #allocation7 [shape = 'u8[4096]{0}', space=vmem, size = 0x1000, scoped, tag = 'input window, operand 2, single buffered']
    #allocation8 [shape = 'u8[4096]{0}', space=vmem, size = 0x1000, scoped, tag = 'input window, operand 3, single buffered']
    #allocation9 [shape = 's32[1]{0}', space=sflag, size = 0x4, scoped, tag = 'scoped memory for combined_loss.1']
    #allocation10 [shape = 'u8[32768]{0}', space=vmem, size = 0x8000, scoped, tag = 'input window, operand 4, single buffered']
    #allocation11 [shape = 'u8[32768]{0}', space=vmem, size = 0x8000, scoped, tag = 'input window, operand 5, single buffered']
    #allocation12 [shape = 's32[1]{0}', space=sflag, size = 0x4, scoped, tag = 'scoped memory for combined_loss.1']
    #allocation13 [shape = 'u8[1024]{0}', space=vmem, size = 0x400, scoped, tag = 'output window, operand 0']
    %11 = vsyncpa [#allocation3], 0
    %s12 = scalar_lea.sflag [#allocation3], 1
    %13 = vsyncpa %s12, 0
    %14 = vsyncpa [#allocation6], 0
    %s15 = scalar_lea.sflag [#allocation6], 1
    %16 = vsyncpa %s15, 0
    %17 = vsyncpa [#allocation9], 0
    %18 = vsyncpa [#allocation12], 0
    %19 = vsyncpa [#allocation4], 0
    %s20 = scalar_lea.sflag [#allocation4], 1
    %21 = vsyncpa %s20, 0
    loop: start=0, step=1, limit=4
    $region2: #{combined_loss.1} parent=1 // loop_pre_header
      _
    $region3: #{combined_loss.1} parent=1 // loop_header
      %s23 = sphi 0, %s27
      %p24 = scmp.ge.s32.totalorder %s23, 4
      %s33 = sphi 0, %s35
      %s36 = sphi 0, %s33
      %s37 = sphi 0, %s36
      %s53 = sphi 0, %s37
      %s59 = sphi 0, %s61
      %s62 = sphi 0, %s59
      %s63 = sphi 0, %s62
      %s79 = sphi 0, %s63
      %s83 = sphi 0, %s83
      %s85 = sphi 0, %s83
      %s86 = sphi 0, %s85
      %s100 = sphi 0, %s86
      %s104 = sphi 0, %s104
      %s106 = sphi 0, %s104
      %s107 = sphi 0, %s106
      %s121 = sphi 0, %s107
      %s125 = sphi 0, %s125
      %s127 = sphi 0, %s125
      %s128 = sphi 0, %s127
      %s142 = sphi 0, %s128
      %s146 = sphi 0, %s146
      %s148 = sphi 0, %s146
      %s149 = sphi 0, %s148
      %s163 = sphi 0, %s149
      %s169 = sphi 0, %s171
      %s172 = sphi 0, %s169
      %s173 = sphi 0, %s172
      %s189 = sphi 0, %s173
    $region4: #{combined_loss.1} parent=1 // loop_header_branch
      %26 = sbr.rel (%p24) target = $region8
    $region5: #{combined_loss.1} parent=1 // loop_body
      %s28 = ssub.s32 %s23, 1
      %s29 = ssub.s32 %s23, 2
      %s30 = sadd.s32 %s23, 1
      %s31 = ssub.s32 %s23, %s30
      %p32 = scmp.eq.s32.totalorder %s31, 0
      %s34 = sadd.s32 %s33, 1
      %s35 = scalar_select %p32, %s33, %s34
      %p38 = pneg %p32
      %p39 = scmp.eq.s32.totalorder %s23, 1
      %p40 = por %p38, %p39
      %p41 = scmp.ne.s32.totalorder %s33, %s36
      %p42 = scmp.eq.s32.totalorder %s23, 0
      %p43 = por %p41, %p42
      %p44 = scmp.ne.s32.totalorder %s33, %s36
      %p45 = scmp.eq.s32.totalorder %s28, 1
      %p46 = por %p44, %p45
      %p47 = scmp.ne.s32.totalorder %s36, %s37
      %p48 = scmp.eq.s32.totalorder %s28, 0
      %p49 = por %p47, %p48
      %p50 = scmp.ne.s32.totalorder %s36, %s37
      %p51 = scmp.eq.s32.totalorder %s29, 1
      %p52 = por %p50, %p51
      %p54 = scmp.ne.s32.totalorder %s37, %s53
      %p55 = scmp.eq.s32.totalorder %s29, 0
      %p56 = por %p54, %p55
      %s57 = ssub.s32 %s23, %s30
      %p58 = scmp.eq.s32.totalorder %s57, 0
      %s60 = sadd.s32 %s59, 1
      %s61 = scalar_select %p58, %s59, %s60
      %p64 = pneg %p58
      %p65 = scmp.eq.s32.totalorder %s23, 1
      %p66 = por %p64, %p65
      %p67 = scmp.ne.s32.totalorder %s59, %s62
      %p68 = scmp.eq.s32.totalorder %s23, 0
      %p69 = por %p67, %p68
      %p70 = scmp.ne.s32.totalorder %s59, %s62
      %p71 = scmp.eq.s32.totalorder %s28, 1
      %p72 = por %p70, %p71
      %p73 = scmp.ne.s32.totalorder %s62, %s63
      %p74 = scmp.eq.s32.totalorder %s28, 0
      %p75 = por %p73, %p74
      %p76 = scmp.ne.s32.totalorder %s62, %s63
      %p77 = scmp.eq.s32.totalorder %s29, 1
      %p78 = por %p76, %p77
      %p80 = scmp.ne.s32.totalorder %s63, %s79
      %p81 = scmp.eq.s32.totalorder %s29, 0
      %p82 = por %p80, %p81
      %s84 = sadd.s32 %s83, 1
      %p87 = scmp.eq.s32.totalorder %s23, 1
      %p88 = scmp.ne.s32.totalorder %s83, %s85
      %p89 = scmp.eq.s32.totalorder %s23, 0
      %p90 = por %p88, %p89
      %p91 = scmp.ne.s32.totalorder %s83, %s85
      %p92 = scmp.eq.s32.totalorder %s28, 1
      %p93 = por %p91, %p92
      %p94 = scmp.ne.s32.totalorder %s85, %s86
      %p95 = scmp.eq.s32.totalorder %s28, 0
      %p96 = por %p94, %p95
      %p97 = scmp.ne.s32.totalorder %s85, %s86
      %p98 = scmp.eq.s32.totalorder %s29, 1
      %p99 = por %p97, %p98
      %p101 = scmp.ne.s32.totalorder %s86, %s100
      %p102 = scmp.eq.s32.totalorder %s29, 0
      %p103 = por %p101, %p102
      %s105 = sadd.s32 %s104, 1
      %p108 = scmp.eq.s32.totalorder %s23, 1
      %p109 = scmp.ne.s32.totalorder %s104, %s106
      %p110 = scmp.eq.s32.totalorder %s23, 0
      %p111 = por %p109, %p110
      %p112 = scmp.ne.s32.totalorder %s104, %s106
      %p113 = scmp.eq.s32.totalorder %s28, 1
      %p114 = por %p112, %p113
      %p115 = scmp.ne.s32.totalorder %s106, %s107
      %p116 = scmp.eq.s32.totalorder %s28, 0
      %p117 = por %p115, %p116
      %p118 = scmp.ne.s32.totalorder %s106, %s107
      %p119 = scmp.eq.s32.totalorder %s29, 1
      %p120 = por %p118, %p119
      %p122 = scmp.ne.s32.totalorder %s107, %s121
      %p123 = scmp.eq.s32.totalorder %s29, 0
      %p124 = por %p122, %p123
      %s126 = sadd.s32 %s125, 1
      %p129 = scmp.eq.s32.totalorder %s23, 1
      %p130 = scmp.ne.s32.totalorder %s125, %s127
      %p131 = scmp.eq.s32.totalorder %s23, 0
      %p132 = por %p130, %p131
      %p133 = scmp.ne.s32.totalorder %s125, %s127
      %p134 = scmp.eq.s32.totalorder %s28, 1
      %p135 = por %p133, %p134
      %p136 = scmp.ne.s32.totalorder %s127, %s128
      %p137 = scmp.eq.s32.totalorder %s28, 0
      %p138 = por %p136, %p137
      %p139 = scmp.ne.s32.totalorder %s127, %s128
      %p140 = scmp.eq.s32.totalorder %s29, 1
      %p141 = por %p139, %p140
      %p143 = scmp.ne.s32.totalorder %s128, %s142
      %p144 = scmp.eq.s32.totalorder %s29, 0
      %p145 = por %p143, %p144
      %s147 = sadd.s32 %s146, 1
      %p150 = scmp.eq.s32.totalorder %s23, 1
      %p151 = scmp.ne.s32.totalorder %s146, %s148
      %p152 = scmp.eq.s32.totalorder %s23, 0
      %p153 = por %p151, %p152
      %p154 = scmp.ne.s32.totalorder %s146, %s148
      %p155 = scmp.eq.s32.totalorder %s28, 1
      %p156 = por %p154, %p155
      %p157 = scmp.ne.s32.totalorder %s148, %s149
      %p158 = scmp.eq.s32.totalorder %s28, 0
      %p159 = por %p157, %p158
      %p160 = scmp.ne.s32.totalorder %s148, %s149
      %p161 = scmp.eq.s32.totalorder %s29, 1
      %p162 = por %p160, %p161
      %p164 = scmp.ne.s32.totalorder %s149, %s163
      %p165 = scmp.eq.s32.totalorder %s29, 0
      %p166 = por %p164, %p165
      %s167 = ssub.s32 %s23, %s30
      %p168 = scmp.eq.s32.totalorder %s167, 0
      %s170 = sadd.s32 %s169, 1
      %s171 = scalar_select %p168, %s169, %s170
      %p174 = pneg %p168
      %p175 = scmp.eq.s32.totalorder %s23, 1
      %p176 = por %p174, %p175
      %p177 = scmp.ne.s32.totalorder %s169, %s172
      %p178 = scmp.eq.s32.totalorder %s23, 0
      %p179 = por %p177, %p178
      %p180 = scmp.ne.s32.totalorder %s169, %s172
      %p181 = scmp.eq.s32.totalorder %s28, 1
      %p182 = por %p180, %p181
      %p183 = scmp.ne.s32.totalorder %s172, %s173
      %p184 = scmp.eq.s32.totalorder %s28, 0
      %p185 = por %p183, %p184
      %p186 = scmp.ne.s32.totalorder %s172, %s173
      %p187 = scmp.eq.s32.totalorder %s29, 1
      %p188 = por %p186, %p187
      %p190 = scmp.ne.s32.totalorder %s173, %s189
      %p191 = scmp.eq.s32.totalorder %s29, 0
      %p192 = por %p190, %p191
      %p193 = scmp.le.s32.totalorder 1, %s23
      %p194 = scmp.lt.s32.totalorder %s23, 3
      %p195 = pnand %p193, %p194
      %p196 = pneg %p195
      // Predicated region
      $region9: #{combined_loss.1} parent=5 // pred_check
        _
      $region10: #{combined_loss.1} parent=5 // pred_check_branch
        %198 = sbr.rel (%p195) target = $region12
      $region11: #{combined_loss.1} parent=5 // pred_region
        %s199 = ssub.s32 %s23, 1
        // Predicated region
        $region13: #{combined_loss.1} parent=11 // pred_check
          %p200 = pneg %p96
        $region14: #{combined_loss.1} parent=11 // pred_check_branch
          %202 = sbr.rel (%p200) target = $region16
        $region15: #{combined_loss.1} parent=11 // pred_region
          %s204 = ssub.s32 128, 128
          %205 = vsyncadd [#allocation6], %s204
          %s206 = sshll.u32 [#allocation7], 4
          %s207 = int_to_ptr.vmem [resolvable:$true] %s206
          %212 = dma.hbm_to_vmem [thread:$0]  %s2, 128, %s207, [#allocation6], 64, 64, 4
        $region16: #{combined_loss.1} parent=11 // pred_fallthru
          _
        // Predicated region
        $region17: #{combined_loss.1} parent=11 // pred_check
          %p213 = pneg %p117
        $region18: #{combined_loss.1} parent=11 // pred_check_branch
          %215 = sbr.rel (%p213) target = $region20
        $region19: #{combined_loss.1} parent=11 // pred_region
          %s217 = ssub.s32 128, 128
          %218 = vsyncadd [#allocation9], %s217
          %s219 = sshll.u32 [#allocation8], 4
          %s220 = int_to_ptr.vmem [resolvable:$true] %s219
          %225 = dma.hbm_to_vmem [thread:$0]  %s3, 128, %s220, [#allocation9], 64, 64, 4
        $region20: #{combined_loss.1} parent=11 // pred_fallthru
          _
        // Predicated region
        $region21: #{combined_loss.1} parent=11 // pred_check
          %p226 = pneg %p138
        $region22: #{combined_loss.1} parent=11 // pred_check_branch
          %228 = sbr.rel (%p226) target = $region24
        $region23: #{combined_loss.1} parent=11 // pred_region
          %s230 = ssub.s32 1024, 1024
          %231 = vsyncadd [#allocation9], %s230
          %s232 = sshll.u32 [#allocation10], 4
          %s233 = int_to_ptr.vmem [resolvable:$true] %s232
          %238 = dma.hbm_to_vmem [thread:$0]  %s4, 1024, %s233, [#allocation9], 64, 64, 4
        $region24: #{combined_loss.1} parent=11 // pred_fallthru
          _
        // Predicated region
        $region25: #{combined_loss.1} parent=11 // pred_check
          %p239 = pneg %p159
        $region26: #{combined_loss.1} parent=11 // pred_check_branch
          %241 = sbr.rel (%p239) target = $region28
        $region27: #{combined_loss.1} parent=11 // pred_region
          %s243 = ssub.s32 1024, 1024
          %244 = vsyncadd [#allocation12], %s243
          %s245 = sshll.u32 [#allocation11], 4
          %s246 = int_to_ptr.vmem [resolvable:$true] %s245
          %251 = dma.hbm_to_vmem [thread:$0]  %s5, 1024, %s246, [#allocation12], 64, 64, 4
        $region28: #{combined_loss.1} parent=11 // pred_fallthru
          _
      $region12: #{combined_loss.1} parent=5 // pred_fallthru
        _
      %p252 = scmp.lt.s32.totalorder %s23, 2
      // Predicated region
      $region29: #{combined_loss.1} parent=5 // pred_check
        %p253 = pneg %p252
      $region30: #{combined_loss.1} parent=5 // pred_check_branch
        %255 = sbr.rel (%p253) target = $region32
      $region31: #{combined_loss.1} parent=5 // pred_region
        // Predicated region
        $region33: #{combined_loss.1} parent=31 // pred_check
          %p256 = pneg %p43
        $region34: #{combined_loss.1} parent=31 // pred_check_branch
          %258 = sbr.rel (%p256) target = $region36
        $region35: #{combined_loss.1} parent=31 // pred_region
          %s259 = sand.u32 %s33, 1
          %s260 = scalar_lea.sflag [#allocation3], %s259
          %s261 = sand.u32 %s33, 1
          %s262 = smul.addr %s261, 16
          %s263 = scalar_lea.vmem [#allocation2], %s262
          %s265 = ssub.s32 256, 256
          %266 = vsyncadd %s260, %s265
          %s267 = smul.addr %s23, 2
          %s268 = smul.addr %s267, 128
          %s269 = scalar_lea.hbm %s0, %s268
          %s270 = sshll.u32 %s263, 4
          %s271 = int_to_ptr.vmem [resolvable:$true] %s270
          %276 = dma.hbm_to_vmem [thread:$0]  %s269, 256, %s271, %s260, 128, 128, 8
        $region36: #{combined_loss.1} parent=31 // pred_fallthru
          _
        // Predicated region
        $region37: #{combined_loss.1} parent=31 // pred_check
          %p277 = pneg %p69
        $region38: #{combined_loss.1} parent=31 // pred_check_branch
          %279 = sbr.rel (%p277) target = $region40
        $region39: #{combined_loss.1} parent=31 // pred_region
          %s280 = sand.u32 %s23, 1
          %s281 = scalar_lea.sflag [#allocation6], %s280
          %s282 = sand.u32 %s59, 1
          %s283 = smul.addr %s282, 16
          %s284 = scalar_lea.vmem [#allocation5], %s283
          %s286 = ssub.s32 256, 256
          %287 = vsyncadd %s281, %s286
          %s288 = smul.addr %s23, 2
          %s289 = smul.addr %s288, 128
          %s290 = scalar_lea.hbm %s1, %s289
          %s291 = sshll.u32 %s284, 4
          %s292 = int_to_ptr.vmem [resolvable:$true] %s291
          %297 = dma.hbm_to_vmem [thread:$0]  %s290, 256, %s292, %s281, 128, 128, 8
        $region40: #{combined_loss.1} parent=31 // pred_fallthru
          _
      $region32: #{combined_loss.1} parent=5 // pred_fallthru
        _
      %p298 = scmp.le.s32.totalorder 1, %s23
      %p299 = scmp.lt.s32.totalorder %s23, 3
      %p300 = pnand %p298, %p299
      %p301 = pneg %p300
      // Predicated region
      $region41: #{combined_loss.1} parent=5 // pred_check
        _
      $region42: #{combined_loss.1} parent=5 // pred_check_branch
        %303 = sbr.rel (%p300) target = $region44
      $region43: #{combined_loss.1} parent=5 // pred_region
        %s304 = ssub.s32 %s23, 1
        %s305 = sand.u32 %s36, 1
        %s306 = scalar_lea.sflag [#allocation3], %s305
        %s307 = sand.u32 %s36, 1
        %s308 = smul.addr %s307, 16
        %s309 = scalar_lea.vmem [#allocation2], %s308
        // Predicated region
        $region45: #{combined_loss.1} parent=43 // pred_check
          %p310 = pneg %p49
        $region46: #{combined_loss.1} parent=43 // pred_check_branch
          %312 = sbr.rel (%p310) target = $region48
        $region47: #{combined_loss.1} parent=43 // pred_region
          %313 = dma.done %s306, 256
        $region48: #{combined_loss.1} parent=43 // pred_fallthru
          _
        %s314 = sand.u32 %s28, 1
        %s315 = scalar_lea.sflag [#allocation6], %s314
        %s316 = sand.u32 %s62, 1
        %s317 = smul.addr %s316, 16
        %s318 = scalar_lea.vmem [#allocation5], %s317
        // Predicated region
        $region49: #{combined_loss.1} parent=43 // pred_check
          %p319 = pneg %p75
        $region50: #{combined_loss.1} parent=43 // pred_check_branch
          %321 = sbr.rel (%p319) target = $region52
        $region51: #{combined_loss.1} parent=43 // pred_region
          %322 = dma.done %s315, 256
        $region52: #{combined_loss.1} parent=43 // pred_fallthru
          _
        // Predicated region
        $region53: #{combined_loss.1} parent=43 // pred_check
          %p323 = pneg %p96
        $region54: #{combined_loss.1} parent=43 // pred_check_branch
          %325 = sbr.rel (%p323) target = $region56
        $region55: #{combined_loss.1} parent=43 // pred_region
          %326 = dma.done [#allocation6], 128
        $region56: #{combined_loss.1} parent=43 // pred_fallthru
          _
        // Predicated region
        $region57: #{combined_loss.1} parent=43 // pred_check
          %p327 = pneg %p117
        $region58: #{combined_loss.1} parent=43 // pred_check_branch
          %329 = sbr.rel (%p327) target = $region60
        $region59: #{combined_loss.1} parent=43 // pred_region
          %330 = dma.done [#allocation9], 128
        $region60: #{combined_loss.1} parent=43 // pred_fallthru
          _
        // Predicated region
        $region61: #{combined_loss.1} parent=43 // pred_check
          %p331 = pneg %p138
        $region62: #{combined_loss.1} parent=43 // pred_check_branch
          %333 = sbr.rel (%p331) target = $region64
        $region63: #{combined_loss.1} parent=43 // pred_region
          %334 = dma.done [#allocation9], 1024
        $region64: #{combined_loss.1} parent=43 // pred_fallthru
          _
        // Predicated region
        $region65: #{combined_loss.1} parent=43 // pred_check
          %p335 = pneg %p159
        $region66: #{combined_loss.1} parent=43 // pred_check_branch
          %337 = sbr.rel (%p335) target = $region68
        $region67: #{combined_loss.1} parent=43 // pred_region
          %338 = dma.done [#allocation12], 1024
        $region68: #{combined_loss.1} parent=43 // pred_fallthru
          _
        %s339 = sand.u32 %s36, 1
        %s340 = scalar_lea.sflag [#allocation3], %s339
        %s341 = sand.u32 %s36, 1
        %s342 = smul.addr %s341, 16
        %s343 = scalar_lea.vmem [#allocation2], %s342
        %p344 = pneg %p49
        %p345 = pneg %p46
        %s346 = sand.u32 %s28, 1
        %s347 = scalar_lea.sflag [#allocation6], %s346
        %s348 = sand.u32 %s62, 1
        %s349 = smul.addr %s348, 16
        %s350 = scalar_lea.vmem [#allocation5], %s349
        %p351 = pneg %p75
        %p352 = pneg %p72
        %p353 = pneg %p96
        %p354 = pneg %p93
        %p355 = pneg %p117
        %p356 = pneg %p114
        %p357 = pneg %p138
        %p358 = pneg %p135
        %p359 = pneg %p159
        %p360 = pneg %p156
        %p361 = pneg %p185
        %p362 = pneg %p182
        %s363 = sand.u32 %s172, 1
        %s364 = scalar_lea.sflag [#allocation4], %s363
        %s365 = sand.u32 %s172, 1
        %s366 = scalar_lea.vmem [#allocation13], %s365
        %v368 = vld [vmem:[%s309] sm:$0xff]
        %v369 = vld [vmem:[%s309 + $0x8] sm:$0xff]
        %v370 = vld [vmem:[%s318] sm:$0xff]
        %v371 = vld [vmem:[%s318 + $0x8] sm:$0xff]
        %v372 = vmul.f32 %v368, %v368
        %v373 = vmul.f32 %v369, %v369
        %v374 = vmul.f32 %v370, %v370
        %v375 = vmul.f32 %v371, %v371
        %v376 = vmul.f32 %v368, %v370
        %v377 = vmul.f32 %v369, %v371
        %v378 = vpack.c.bf16 %v369, %v368
        %v379 = vunpack.c.l.bf16 %v378
        %v380 = vunpack.c.h.bf16 %v378
        %v381 = vsub.f32 %v368, %v379
        %v382 = vsub.f32 %v369, %v380
        %v383 = vpack.c.bf16 %v382, %v381
        %v384 = vpack.c.bf16 %v371, %v370
        %v385 = vunpack.c.l.bf16 %v384
        %v386 = vunpack.c.h.bf16 %v384
        %v387 = vsub.f32 %v370, %v385
        %v388 = vsub.f32 %v371, %v386
        %v389 = vpack.c.bf16 %v388, %v387
        %v390 = vpack.c.bf16 %v373, %v372
        %v391 = vunpack.c.l.bf16 %v390
        %v392 = vunpack.c.h.bf16 %v390
        %v393 = vsub.f32 %v372, %v391
        %v394 = vsub.f32 %v373, %v392
        %v395 = vpack.c.bf16 %v394, %v393
        %v396 = vpack.c.bf16 %v375, %v374
        %v397 = vunpack.c.l.bf16 %v396
        %v398 = vunpack.c.h.bf16 %v396
        %v399 = vsub.f32 %v374, %v397
        %v400 = vsub.f32 %v375, %v398
        %v401 = vpack.c.bf16 %v400, %v399
        %v402 = vpack.c.bf16 %v377, %v376
        %v403 = vunpack.c.l.bf16 %v402
        %v404 = vunpack.c.h.bf16 %v402
        %v405 = vsub.f32 %v376, %v403
        %v406 = vsub.f32 %v377, %v404
        %v407 = vpack.c.bf16 %v406, %v405
        %v408 = vld [vmem:[#allocation10] sm:$0xf]
        %v409 = vld [vmem:[#allocation10 + $0x4] sm:$0xf]
        %v410 = vld [vmem:[#allocation10 + $0x8] sm:$0xf]
        %v411 = vld [vmem:[#allocation10 + $0xc] sm:$0xf]
        %v412 = vld [vmem:[#allocation10 + $0x10] sm:$0xf]
        %v413 = vld [vmem:[#allocation10 + $0x14] sm:$0xf]
        %v414 = vld [vmem:[#allocation10 + $0x18] sm:$0xf]
        %v415 = vld [vmem:[#allocation10 + $0x1c] sm:$0xf]
        %v416 = vld [vmem:[#allocation10 + $0x20] sm:$0xf]
        %v417 = vld [vmem:[#allocation10 + $0x24] sm:$0xf]
        %v418 = vld [vmem:[#allocation10 + $0x28] sm:$0xf]
        %v419 = vld [vmem:[#allocation10 + $0x2c] sm:$0xf]
        %v420 = vld [vmem:[#allocation10 + $0x30] sm:$0xf]
        %v421 = vld [vmem:[#allocation10 + $0x34] sm:$0xf]
        %v422 = vld [vmem:[#allocation10 + $0x38] sm:$0xf]
        %v423 = vld [vmem:[#allocation10 + $0x3c] sm:$0xf]
        %v424 = vld [vmem:[#allocation11] sm:$0xf]
        %v425 = vld [vmem:[#allocation11 + $0x4] sm:$0xf]
        %v426 = vld [vmem:[#allocation11 + $0x8] sm:$0xf]
        %v427 = vld [vmem:[#allocation11 + $0xc] sm:$0xf]
        %v428 = vld [vmem:[#allocation11 + $0x10] sm:$0xf]
        %v429 = vld [vmem:[#allocation11 + $0x14] sm:$0xf]
        %v430 = vld [vmem:[#allocation11 + $0x18] sm:$0xf]
        %v431 = vld [vmem:[#allocation11 + $0x1c] sm:$0xf]
        %v432 = vld [vmem:[#allocation11 + $0x20] sm:$0xf]
        %v433 = vld [vmem:[#allocation11 + $0x24] sm:$0xf]
        %v434 = vld [vmem:[#allocation11 + $0x28] sm:$0xf]
        %v435 = vld [vmem:[#allocation11 + $0x2c] sm:$0xf]
        %v436 = vld [vmem:[#allocation11 + $0x30] sm:$0xf]
        %v437 = vld [vmem:[#allocation11 + $0x34] sm:$0xf]
        %v438 = vld [vmem:[#allocation11 + $0x38] sm:$0xf]
        %v439 = vld [vmem:[#allocation11 + $0x3c] sm:$0xf]
        %v456 = vunpack.c.l.b16 %v424
        %v457 = vunpack.c.l.b16 %v425
        %v458 = vunpack.c.l.b16 %v426
        %v459 = vunpack.c.l.b16 %v427
        %v460 = vunpack.c.l.b16 %v428
        %v461 = vunpack.c.l.b16 %v429
        %v462 = vunpack.c.l.b16 %v430
        %v463 = vunpack.c.l.b16 %v431
        %v464 = vunpack.c.l.b16 %v432
        %v465 = vunpack.c.l.b16 %v433
        %v466 = vunpack.c.l.b16 %v434
        %v467 = vunpack.c.l.b16 %v435
        %v468 = vunpack.c.l.b16 %v436
        %v469 = vunpack.c.l.b16 %v437
        %v470 = vunpack.c.l.b16 %v438
        %v471 = vunpack.c.l.b16 %v439
        %v472 = vpack.c.b16 %v457, %v456
        %v473 = vpack.c.b16 %v459, %v458
        %v474 = vpack.c.b16 %v461, %v460
        %v475 = vpack.c.b16 %v463, %v462
        %v476 = vpack.c.b16 %v465, %v464
        %v477 = vpack.c.b16 %v467, %v466
        %v478 = vpack.c.b16 %v469, %v468
        %v479 = vpack.c.b16 %v471, %v470
        %488 = vmatprep.subr.bf16.mxu0 0
        %489 = vmatpush1.bf16.msra.mxu0 %v472
        %490 = vmatprep.subr.bf16.mxu0 0
        %491 = vmatpush1.bf16.msra.mxu0 %v473
        %492 = vmatprep.subr.bf16.mxu0 0
        %493 = vmatpush1.bf16.msra.mxu0 %v474
        %494 = vmatprep.subr.bf16.mxu0 0
        %495 = vmatpush1.bf16.msra.mxu0 %v475
        %496 = vmatprep.subr.bf16.mxu0 0
        %497 = vmatpush1.bf16.msra.mxu0 %v476
        %498 = vmatprep.subr.bf16.mxu0 0
        %499 = vmatpush1.bf16.msra.mxu0 %v477
        %500 = vmatprep.subr.bf16.mxu0 0
        %501 = vmatpush1.bf16.msra.mxu0 %v478
        %502 = vmatprep.subr.bf16.mxu0 0
        %503 = vmatpush1.bf16.msra.mxu0 %v479
        %504 = vmatprep.subr.bf16.mxu0 0
        %505 = vmatpush1.bf16.msra.mxu0 0
        %506 = vmatprep.subr.bf16.mxu0 0
        %507 = vmatpush1.bf16.msra.mxu0 0
        %508 = vmatprep.subr.bf16.mxu0 0
        %509 = vmatpush1.bf16.msra.mxu0 0
        %510 = vmatprep.subr.bf16.mxu0 0
        %511 = vmatpush1.bf16.msra.mxu0 0
        %512 = vmatprep.subr.bf16.mxu0 0
        %513 = vmatpush1.bf16.msra.mxu0 0
        %514 = vmatprep.subr.bf16.mxu0 0
        %515 = vmatpush1.bf16.msra.mxu0 0
        %516 = vmatprep.subr.bf16.mxu0 0
        %517 = vmatpush1.bf16.msra.mxu0 0
        %518 = vmatprep.subr.bf16.mxu0 0
        %519 = vmatpush1.bf16.msra.mxu0 0
        %520 = vmatprep.mubr.bf16.mxu0 0
        %521 = vmatmul.mubr.bf16.gmra.mrb[0].mxu0 %v378
        %v522 = vpop.f32.mrb[0].mxu0
        %v523 = vadd.f32 0.0, %v522
        %v524 = vpop.f32.mrb[0].mxu0
        %v525 = vpop.f32.mrb[0].mxu0
        %v526 = vadd.f32 0.0, %v525
        %v527 = vpop.f32.mrb[0].mxu0
        %528 = vmatprep.mubr.bf16.mxu0 0
        %529 = vmatmul.mubr.bf16.gmra.mrb[0].mxu0 %v384
        %v530 = vpop.f32.mrb[0].mxu0
        %v531 = vadd.f32 0.0, %v530
        %v532 = vpop.f32.mrb[0].mxu0
        %v533 = vpop.f32.mrb[0].mxu0
        %v534 = vadd.f32 0.0, %v533
        %v535 = vpop.f32.mrb[0].mxu0
        %536 = vmatprep.mubr.bf16.mxu0 0
        %537 = vmatmul.mubr.bf16.gmra.mrb[0].mxu0 %v390
        %v538 = vpop.f32.mrb[0].mxu0
        %v539 = vadd.f32 0.0, %v538
        %v540 = vpop.f32.mrb[0].mxu0
        %v541 = vpop.f32.mrb[0].mxu0
        %v542 = vadd.f32 0.0, %v541
        %v543 = vpop.f32.mrb[0].mxu0
        %544 = vmatprep.mubr.bf16.mxu0 0
        %545 = vmatmul.mubr.bf16.gmra.mrb[0].mxu0 %v396
        %v546 = vpop.f32.mrb[0].mxu0
        %v547 = vadd.f32 0.0, %v546
        %v548 = vpop.f32.mrb[0].mxu0
        %v549 = vpop.f32.mrb[0].mxu0
        %v550 = vadd.f32 0.0, %v549
        %v551 = vpop.f32.mrb[0].mxu0
        %552 = vmatprep.mubr.bf16.mxu0 0
        %553 = vmatmul.mubr.bf16.gmra.mrb[0].mxu0 %v402
        %v554 = vpop.f32.mrb[0].mxu0
        %v555 = vadd.f32 0.0, %v554
        %v556 = vpop.f32.mrb[0].mxu0
        %v557 = vpop.f32.mrb[0].mxu0
        %v558 = vadd.f32 0.0, %v557
        %v559 = vpop.f32.mrb[0].mxu0
        %560 = vdwg.mxu0
        %v577 = vunpack.c.l.b16 %v408
        %v578 = vunpack.c.l.b16 %v409
        %v579 = vunpack.c.l.b16 %v410
        %v580 = vunpack.c.l.b16 %v411
        %v581 = vunpack.c.l.b16 %v412
        %v582 = vunpack.c.l.b16 %v413
        %v583 = vunpack.c.l.b16 %v414
        %v584 = vunpack.c.l.b16 %v415
        %v585 = vunpack.c.l.b16 %v416
        %v586 = vunpack.c.l.b16 %v417
        %v587 = vunpack.c.l.b16 %v418
        %v588 = vunpack.c.l.b16 %v419
        %v589 = vunpack.c.l.b16 %v420
        %v590 = vunpack.c.l.b16 %v421
        %v591 = vunpack.c.l.b16 %v422
        %v592 = vunpack.c.l.b16 %v423
        %v593 = vpack.c.b16 %v578, %v577
        %v594 = vpack.c.b16 %v580, %v579
        %v595 = vpack.c.b16 %v582, %v581
        %v596 = vpack.c.b16 %v584, %v583
        %v597 = vpack.c.b16 %v586, %v585
        %v598 = vpack.c.b16 %v588, %v587
        %v599 = vpack.c.b16 %v590, %v589
        %v600 = vpack.c.b16 %v592, %v591
        %609 = vmatprep.subr.bf16.mxu0 0
        %610 = vmatpush1.bf16.msra.mxu0 %v593
        %611 = vmatprep.subr.bf16.mxu0 0
        %612 = vmatpush1.bf16.msra.mxu0 %v594
        %613 = vmatprep.subr.bf16.mxu0 0
        %614 = vmatpush1.bf16.msra.mxu0 %v595
        %615 = vmatprep.subr.bf16.mxu0 0
        %616 = vmatpush1.bf16.msra.mxu0 %v596
        %617 = vmatprep.subr.bf16.mxu0 0
        %618 = vmatpush1.bf16.msra.mxu0 %v597
        %619 = vmatprep.subr.bf16.mxu0 0
        %620 = vmatpush1.bf16.msra.mxu0 %v598
        %621 = vmatprep.subr.bf16.mxu0 0
        %622 = vmatpush1.bf16.msra.mxu0 %v599
        %623 = vmatprep.subr.bf16.mxu0 0
        %624 = vmatpush1.bf16.msra.mxu0 %v600
        %625 = vmatprep.subr.bf16.mxu0 0
        %626 = vmatpush1.bf16.msra.mxu0 0
        %627 = vmatprep.subr.bf16.mxu0 0
        %628 = vmatpush1.bf16.msra.mxu0 0
        %629 = vmatprep.subr.bf16.mxu0 0
        %630 = vmatpush1.bf16.msra.mxu0 0
        %631 = vmatprep.subr.bf16.mxu0 0
        %632 = vmatpush1.bf16.msra.mxu0 0
        %633 = vmatprep.subr.bf16.mxu0 0
        %634 = vmatpush1.bf16.msra.mxu0 0
        %635 = vmatprep.subr.bf16.mxu0 0
        %636 = vmatpush1.bf16.msra.mxu0 0
        %637 = vmatprep.subr.bf16.mxu0 0
        %638 = vmatpush1.bf16.msra.mxu0 0
        %639 = vmatprep.subr.bf16.mxu0 0
        %640 = vmatpush1.bf16.msra.mxu0 0
        %641 = vmatprep.mubr.bf16.mxu0 0
        %642 = vmatmul.mubr.bf16.gmra.mrb[0].mxu0 %v378
        %v643 = vpop.f32.mrb[0].mxu0
        %v644 = vadd.f32 %v523, %v643
        %v645 = vpop.f32.mrb[0].mxu0
        %v646 = vpop.f32.mrb[0].mxu0
        %v647 = vadd.f32 %v526, %v646
        %v648 = vpop.f32.mrb[0].mxu0
        %649 = vmatprep.mubr.bf16.mxu0 0
        %650 = vmatmul.mubr.bf16.gmra.mrb[0].mxu0 %v384
        %v651 = vpop.f32.mrb[0].mxu0
        %v652 = vadd.f32 %v531, %v651
        %v653 = vpop.f32.mrb[0].mxu0
        %v654 = vpop.f32.mrb[0].mxu0
        %v655 = vadd.f32 %v534, %v654
        %v656 = vpop.f32.mrb[0].mxu0
        %657 = vmatprep.mubr.bf16.mxu0 0
        %658 = vmatmul.mubr.bf16.gmra.mrb[0].mxu0 %v390
        %v659 = vpop.f32.mrb[0].mxu0
        %v660 = vadd.f32 %v539, %v659
        %v661 = vpop.f32.mrb[0].mxu0
        %v662 = vpop.f32.mrb[0].mxu0
        %v663 = vadd.f32 %v542, %v662
        %v664 = vpop.f32.mrb[0].mxu0
        %665 = vmatprep.mubr.bf16.mxu0 0
        %666 = vmatmul.mubr.bf16.gmra.mrb[0].mxu0 %v396
        %v667 = vpop.f32.mrb[0].mxu0
        %v668 = vadd.f32 %v547, %v667
        %v669 = vpop.f32.mrb[0].mxu0
        %v670 = vpop.f32.mrb[0].mxu0
        %v671 = vadd.f32 %v550, %v670
        %v672 = vpop.f32.mrb[0].mxu0
        %673 = vmatprep.mubr.bf16.mxu0 0
        %674 = vmatmul.mubr.bf16.gmra.mrb[0].mxu0 %v402
        %v675 = vpop.f32.mrb[0].mxu0
        %v676 = vadd.f32 %v555, %v675
        %v677 = vpop.f32.mrb[0].mxu0
        %v678 = vpop.f32.mrb[0].mxu0
        %v679 = vadd.f32 %v558, %v678
        %v680 = vpop.f32.mrb[0].mxu0
        %681 = vdwg.mxu0
        %682 = vmatprep.subr.bf16.mxu0 0
        %683 = vmatpush1.bf16.msra.mxu0 %v593
        %684 = vmatprep.subr.bf16.mxu0 0
        %685 = vmatpush1.bf16.msra.mxu0 %v594
        %686 = vmatprep.subr.bf16.mxu0 0
        %687 = vmatpush1.bf16.msra.mxu0 %v595
        %688 = vmatprep.subr.bf16.mxu0 0
        %689 = vmatpush1.bf16.msra.mxu0 %v596
        %690 = vmatprep.subr.bf16.mxu0 0
        %691 = vmatpush1.bf16.msra.mxu0 %v597
        %692 = vmatprep.subr.bf16.mxu0 0
        %693 = vmatpush1.bf16.msra.mxu0 %v598
        %694 = vmatprep.subr.bf16.mxu0 0
        %695 = vmatpush1.bf16.msra.mxu0 %v599
        %696 = vmatprep.subr.bf16.mxu0 0
        %697 = vmatpush1.bf16.msra.mxu0 %v600
        %698 = vmatprep.subr.bf16.mxu0 0
        %699 = vmatpush1.bf16.msra.mxu0 0
        %700 = vmatprep.subr.bf16.mxu0 0
        %701 = vmatpush1.bf16.msra.mxu0 0
        %702 = vmatprep.subr.bf16.mxu0 0
        %703 = vmatpush1.bf16.msra.mxu0 0
        %704 = vmatprep.subr.bf16.mxu0 0
        %705 = vmatpush1.bf16.msra.mxu0 0
        %706 = vmatprep.subr.bf16.mxu0 0
        %707 = vmatpush1.bf16.msra.mxu0 0
        %708 = vmatprep.subr.bf16.mxu0 0
        %709 = vmatpush1.bf16.msra.mxu0 0
        %710 = vmatprep.subr.bf16.mxu0 0
        %711 = vmatpush1.bf16.msra.mxu0 0
        %712 = vmatprep.subr.bf16.mxu0 0
        %713 = vmatpush1.bf16.msra.mxu0 0
        %714 = vmatprep.mubr.bf16.mxu0 0
        %715 = vmatmul.mubr.bf16.gmra.mrb[0].mxu0 %v383
        %v716 = vpop.f32.mrb[0].mxu0
        %v717 = vadd.f32 0.0, %v716
        %v718 = vpop.f32.mrb[0].mxu0
        %v719 = vpop.f32.mrb[0].mxu0
        %v720 = vadd.f32 0.0, %v719
        %v721 = vpop.f32.mrb[0].mxu0
        %722 = vmatprep.mubr.bf16.mxu0 0
        %723 = vmatmul.mubr.bf16.gmra.mrb[0].mxu0 %v389
        %v724 = vpop.f32.mrb[0].mxu0
        %v725 = vadd.f32 0.0, %v724
        %v726 = vpop.f32.mrb[0].mxu0
        %v727 = vpop.f32.mrb[0].mxu0
        %v728 = vadd.f32 0.0, %v727
        %v729 = vpop.f32.mrb[0].mxu0
        %730 = vmatprep.mubr.bf16.mxu0 0
        %731 = vmatmul.mubr.bf16.gmra.mrb[0].mxu0 %v395
        %v732 = vpop.f32.mrb[0].mxu0
        %v733 = vadd.f32 0.0, %v732
        %v734 = vpop.f32.mrb[0].mxu0
        %v735 = vpop.f32.mrb[0].mxu0
        %v736 = vadd.f32 0.0, %v735
        %v737 = vpop.f32.mrb[0].mxu0
        %738 = vmatprep.mubr.bf16.mxu0 0
        %739 = vmatmul.mubr.bf16.gmra.mrb[0].mxu0 %v401
        %v740 = vpop.f32.mrb[0].mxu0
        %v741 = vadd.f32 0.0, %v740
        %v742 = vpop.f32.mrb[0].mxu0
        %v743 = vpop.f32.mrb[0].mxu0
        %v744 = vadd.f32 0.0, %v743
        %v745 = vpop.f32.mrb[0].mxu0
        %746 = vmatprep.mubr.bf16.mxu0 0
        %747 = vmatmul.mubr.bf16.gmra.mrb[0].mxu0 %v407
        %v748 = vpop.f32.mrb[0].mxu0
        %v749 = vadd.f32 0.0, %v748
        %v750 = vpop.f32.mrb[0].mxu0
        %v751 = vpop.f32.mrb[0].mxu0
        %v752 = vadd.f32 0.0, %v751
        %v753 = vpop.f32.mrb[0].mxu0
        %754 = vdwg.mxu0
        %v755 = vadd.f32 %v644, %v717
        %v756 = vadd.f32 %v647, %v720
        %v757 = vadd.f32 %v652, %v725
        %v758 = vadd.f32 %v655, %v728
        %v759 = vadd.f32 %v660, %v733
        %v760 = vadd.f32 %v663, %v736
        %v761 = vadd.f32 %v668, %v741
        %v762 = vadd.f32 %v671, %v744
        %v763 = vadd.f32 %v676, %v749
        %v764 = vadd.f32 %v679, %v752
        %765 = vxpose.xlu0.b32.start [1/16] %v755, 128
        %766 = vxpose.xlu0.b32.cont [2/16] %v756, 128
        %767 = vxpose.xlu0.b32.cont [3/16] 0.0, 128
        %768 = vxpose.xlu0.b32.cont [4/16] 0.0, 128
        %769 = vxpose.xlu0.b32.cont [5/16] 0.0, 128
        %770 = vxpose.xlu0.b32.cont [6/16] 0.0, 128
        %771 = vxpose.xlu0.b32.cont [7/16] 0.0, 128
        %772 = vxpose.xlu0.b32.cont [8/16] 0.0, 128
        %773 = vxpose.xlu0.b32.cont [9/16] 0.0, 128
        %774 = vxpose.xlu0.b32.cont [10/16] 0.0, 128
        %775 = vxpose.xlu0.b32.cont [11/16] 0.0, 128
        %776 = vxpose.xlu0.b32.cont [12/16] 0.0, 128
        %777 = vxpose.xlu0.b32.cont [13/16] 0.0, 128
        %778 = vxpose.xlu0.b32.cont [14/16] 0.0, 128
        %779 = vxpose.xlu0.b32.cont [15/16] 0.0, 128
        %780 = vxpose.xlu0.b32.end [16/16] 0.0, 128
        %v781 = vpop.trf.xlu0
        %v782 = vpop.trf.xlu0
        %v783 = vpop.trf.xlu0
        %v784 = vpop.trf.xlu0
        %v785 = vpop.trf.xlu0
        %v786 = vpop.trf.xlu0
        %v787 = vpop.trf.xlu0
        %v788 = vpop.trf.xlu0
        %v789 = vpop.trf.xlu0
        %v790 = vpop.trf.xlu0
        %v791 = vpop.trf.xlu0
        %v792 = vpop.trf.xlu0
        %v793 = vpop.trf.xlu0
        %v794 = vpop.trf.xlu0
        %v795 = vpop.trf.xlu0
        %v796 = vpop.trf.xlu0
        %797 = vxpose.xlu0.b32.start [1/16] %v757, 128
        %798 = vxpose.xlu0.b32.cont [2/16] %v758, 128
        %799 = vxpose.xlu0.b32.cont [3/16] 0.0, 128
        %800 = vxpose.xlu0.b32.cont [4/16] 0.0, 128
        %801 = vxpose.xlu0.b32.cont [5/16] 0.0, 128
        %802 = vxpose.xlu0.b32.cont [6/16] 0.0, 128
        %803 = vxpose.xlu0.b32.cont [7/16] 0.0, 128
        %804 = vxpose.xlu0.b32.cont [8/16] 0.0, 128
        %805 = vxpose.xlu0.b32.cont [9/16] 0.0, 128
        %806 = vxpose.xlu0.b32.cont [10/16] 0.0, 128
        %807 = vxpose.xlu0.b32.cont [11/16] 0.0, 128
        %808 = vxpose.xlu0.b32.cont [12/16] 0.0, 128
        %809 = vxpose.xlu0.b32.cont [13/16] 0.0, 128
        %810 = vxpose.xlu0.b32.cont [14/16] 0.0, 128
        %811 = vxpose.xlu0.b32.cont [15/16] 0.0, 128
        %812 = vxpose.xlu0.b32.end [16/16] 0.0, 128
        %v813 = vpop.trf.xlu0
        %v814 = vpop.trf.xlu0
        %v815 = vpop.trf.xlu0
        %v816 = vpop.trf.xlu0
        %v817 = vpop.trf.xlu0
        %v818 = vpop.trf.xlu0
        %v819 = vpop.trf.xlu0
        %v820 = vpop.trf.xlu0
        %v821 = vpop.trf.xlu0
        %v822 = vpop.trf.xlu0
        %v823 = vpop.trf.xlu0
        %v824 = vpop.trf.xlu0
        %v825 = vpop.trf.xlu0
        %v826 = vpop.trf.xlu0
        %v827 = vpop.trf.xlu0
        %v828 = vpop.trf.xlu0
        %829 = vxpose.xlu0.b32.start [1/16] %v759, 128
        %830 = vxpose.xlu0.b32.cont [2/16] %v760, 128
        %831 = vxpose.xlu0.b32.cont [3/16] 0.0, 128
        %832 = vxpose.xlu0.b32.cont [4/16] 0.0, 128
        %833 = vxpose.xlu0.b32.cont [5/16] 0.0, 128
        %834 = vxpose.xlu0.b32.cont [6/16] 0.0, 128
        %835 = vxpose.xlu0.b32.cont [7/16] 0.0, 128
        %836 = vxpose.xlu0.b32.cont [8/16] 0.0, 128
        %837 = vxpose.xlu0.b32.cont [9/16] 0.0, 128
        %838 = vxpose.xlu0.b32.cont [10/16] 0.0, 128
        %839 = vxpose.xlu0.b32.cont [11/16] 0.0, 128
        %840 = vxpose.xlu0.b32.cont [12/16] 0.0, 128
        %841 = vxpose.xlu0.b32.cont [13/16] 0.0, 128
        %842 = vxpose.xlu0.b32.cont [14/16] 0.0, 128
        %843 = vxpose.xlu0.b32.cont [15/16] 0.0, 128
        %844 = vxpose.xlu0.b32.end [16/16] 0.0, 128
        %v845 = vpop.trf.xlu0
        %v846 = vpop.trf.xlu0
        %v847 = vpop.trf.xlu0
        %v848 = vpop.trf.xlu0
        %v849 = vpop.trf.xlu0
        %v850 = vpop.trf.xlu0
        %v851 = vpop.trf.xlu0
        %v852 = vpop.trf.xlu0
        %v853 = vpop.trf.xlu0
        %v854 = vpop.trf.xlu0
        %v855 = vpop.trf.xlu0
        %v856 = vpop.trf.xlu0
        %v857 = vpop.trf.xlu0
        %v858 = vpop.trf.xlu0
        %v859 = vpop.trf.xlu0
        %v860 = vpop.trf.xlu0
        %861 = vxpose.xlu0.b32.start [1/16] %v761, 128
        %862 = vxpose.xlu0.b32.cont [2/16] %v762, 128
        %863 = vxpose.xlu0.b32.cont [3/16] 0.0, 128
        %864 = vxpose.xlu0.b32.cont [4/16] 0.0, 128
        %865 = vxpose.xlu0.b32.cont [5/16] 0.0, 128
        %866 = vxpose.xlu0.b32.cont [6/16] 0.0, 128
        %867 = vxpose.xlu0.b32.cont [7/16] 0.0, 128
        %868 = vxpose.xlu0.b32.cont [8/16] 0.0, 128
        %869 = vxpose.xlu0.b32.cont [9/16] 0.0, 128
        %870 = vxpose.xlu0.b32.cont [10/16] 0.0, 128
        %871 = vxpose.xlu0.b32.cont [11/16] 0.0, 128
        %872 = vxpose.xlu0.b32.cont [12/16] 0.0, 128
        %873 = vxpose.xlu0.b32.cont [13/16] 0.0, 128
        %874 = vxpose.xlu0.b32.cont [14/16] 0.0, 128
        %875 = vxpose.xlu0.b32.cont [15/16] 0.0, 128
        %876 = vxpose.xlu0.b32.end [16/16] 0.0, 128
        %v877 = vpop.trf.xlu0
        %v878 = vpop.trf.xlu0
        %v879 = vpop.trf.xlu0
        %v880 = vpop.trf.xlu0
        %v881 = vpop.trf.xlu0
        %v882 = vpop.trf.xlu0
        %v883 = vpop.trf.xlu0
        %v884 = vpop.trf.xlu0
        %v885 = vpop.trf.xlu0
        %v886 = vpop.trf.xlu0
        %v887 = vpop.trf.xlu0
        %v888 = vpop.trf.xlu0
        %v889 = vpop.trf.xlu0
        %v890 = vpop.trf.xlu0
        %v891 = vpop.trf.xlu0
        %v892 = vpop.trf.xlu0
        %893 = vxpose.xlu0.b32.start [1/16] %v763, 128
        %894 = vxpose.xlu0.b32.cont [2/16] %v764, 128
        %895 = vxpose.xlu0.b32.cont [3/16] 0.0, 128
        %896 = vxpose.xlu0.b32.cont [4/16] 0.0, 128
        %897 = vxpose.xlu0.b32.cont [5/16] 0.0, 128
        %898 = vxpose.xlu0.b32.cont [6/16] 0.0, 128
        %899 = vxpose.xlu0.b32.cont [7/16] 0.0, 128
        %900 = vxpose.xlu0.b32.cont [8/16] 0.0, 128
        %901 = vxpose.xlu0.b32.cont [9/16] 0.0, 128
        %902 = vxpose.xlu0.b32.cont [10/16] 0.0, 128
        %903 = vxpose.xlu0.b32.cont [11/16] 0.0, 128
        %904 = vxpose.xlu0.b32.cont [12/16] 0.0, 128
        %905 = vxpose.xlu0.b32.cont [13/16] 0.0, 128
        %906 = vxpose.xlu0.b32.cont [14/16] 0.0, 128
        %907 = vxpose.xlu0.b32.cont [15/16] 0.0, 128
        %908 = vxpose.xlu0.b32.end [16/16] 0.0, 128
        %v909 = vpop.trf.xlu0
        %v910 = vpop.trf.xlu0
        %v911 = vpop.trf.xlu0
        %v912 = vpop.trf.xlu0
        %v913 = vpop.trf.xlu0
        %v914 = vpop.trf.xlu0
        %v915 = vpop.trf.xlu0
        %v916 = vpop.trf.xlu0
        %v917 = vpop.trf.xlu0
        %v918 = vpop.trf.xlu0
        %v919 = vpop.trf.xlu0
        %v920 = vpop.trf.xlu0
        %v921 = vpop.trf.xlu0
        %v922 = vpop.trf.xlu0
        %v923 = vpop.trf.xlu0
        %v924 = vpop.trf.xlu0
        %v925 = vpack.c.bf16 %v782, %v781
        %v926 = vpack.c.bf16 %v784, %v783
        %v927 = vpack.c.bf16 %v786, %v785
        %v928 = vpack.c.bf16 %v788, %v787
        %v929 = vpack.c.bf16 %v790, %v789
        %v930 = vpack.c.bf16 %v792, %v791
        %v931 = vpack.c.bf16 %v794, %v793
        %v932 = vpack.c.bf16 %v796, %v795
        %v933 = vpack.c.bf16 %v814, %v813
        %v934 = vpack.c.bf16 %v816, %v815
        %v935 = vpack.c.bf16 %v818, %v817
        %v936 = vpack.c.bf16 %v820, %v819
        %v937 = vpack.c.bf16 %v822, %v821
        %v938 = vpack.c.bf16 %v824, %v823
        %v939 = vpack.c.bf16 %v826, %v825
        %v940 = vpack.c.bf16 %v828, %v827
        %v941 = vpack.c.bf16 %v846, %v845
        %v942 = vpack.c.bf16 %v848, %v847
        %v943 = vpack.c.bf16 %v850, %v849
        %v944 = vpack.c.bf16 %v852, %v851
        %v945 = vpack.c.bf16 %v854, %v853
        %v946 = vpack.c.bf16 %v856, %v855
        %v947 = vpack.c.bf16 %v858, %v857
        %v948 = vpack.c.bf16 %v860, %v859
        %v949 = vpack.c.bf16 %v878, %v877
        %v950 = vpack.c.bf16 %v880, %v879
        %v951 = vpack.c.bf16 %v882, %v881
        %v952 = vpack.c.bf16 %v884, %v883
        %v953 = vpack.c.bf16 %v886, %v885
        %v954 = vpack.c.bf16 %v888, %v887
        %v955 = vpack.c.bf16 %v890, %v889
        %v956 = vpack.c.bf16 %v892, %v891
        %v957 = vpack.c.bf16 %v910, %v909
        %v958 = vpack.c.bf16 %v912, %v911
        %v959 = vpack.c.bf16 %v914, %v913
        %v960 = vpack.c.bf16 %v916, %v915
        %v961 = vpack.c.bf16 %v918, %v917
        %v962 = vpack.c.bf16 %v920, %v919
        %v963 = vpack.c.bf16 %v922, %v921
        %v964 = vpack.c.bf16 %v924, %v923
        %v965 = vunpack.c.l.bf16 %v925
        %v966 = vunpack.c.h.bf16 %v925
        %v967 = vunpack.c.l.bf16 %v926
        %v968 = vunpack.c.h.bf16 %v926
        %v969 = vunpack.c.l.bf16 %v927
        %v970 = vunpack.c.h.bf16 %v927
        %v971 = vunpack.c.l.bf16 %v928
        %v972 = vunpack.c.h.bf16 %v928
        %v973 = vunpack.c.l.bf16 %v929
        %v974 = vunpack.c.h.bf16 %v929
        %v975 = vunpack.c.l.bf16 %v930
        %v976 = vunpack.c.h.bf16 %v930
        %v977 = vunpack.c.l.bf16 %v931
        %v978 = vunpack.c.h.bf16 %v931
        %v979 = vunpack.c.l.bf16 %v932
        %v980 = vunpack.c.h.bf16 %v932
        %v981 = vunpack.c.l.bf16 %v933
        %v982 = vunpack.c.h.bf16 %v933
        %v983 = vunpack.c.l.bf16 %v934
        %v984 = vunpack.c.h.bf16 %v934
        %v985 = vunpack.c.l.bf16 %v935
        %v986 = vunpack.c.h.bf16 %v935
        %v987 = vunpack.c.l.bf16 %v936
        %v988 = vunpack.c.h.bf16 %v936
        %v989 = vunpack.c.l.bf16 %v937
        %v990 = vunpack.c.h.bf16 %v937
        %v991 = vunpack.c.l.bf16 %v938
        %v992 = vunpack.c.h.bf16 %v938
        %v993 = vunpack.c.l.bf16 %v939
        %v994 = vunpack.c.h.bf16 %v939
        %v995 = vunpack.c.l.bf16 %v940
        %v996 = vunpack.c.h.bf16 %v940
        %v997 = vunpack.c.l.bf16 %v941
        %v998 = vunpack.c.h.bf16 %v941
        %v999 = vunpack.c.l.bf16 %v942
        %v1000 = vunpack.c.h.bf16 %v942
        %v1001 = vunpack.c.l.bf16 %v943
        %v1002 = vunpack.c.h.bf16 %v943
        %v1003 = vunpack.c.l.bf16 %v944
        %v1004 = vunpack.c.h.bf16 %v944
        %v1005 = vunpack.c.l.bf16 %v945
        %v1006 = vunpack.c.h.bf16 %v945
        %v1007 = vunpack.c.l.bf16 %v946
        %v1008 = vunpack.c.h.bf16 %v946
        %v1009 = vunpack.c.l.bf16 %v947
        %v1010 = vunpack.c.h.bf16 %v947
        %v1011 = vunpack.c.l.bf16 %v948
        %v1012 = vunpack.c.h.bf16 %v948
        %v1013 = vunpack.c.l.bf16 %v949
        %v1014 = vunpack.c.h.bf16 %v949
        %v1015 = vunpack.c.l.bf16 %v950
        %v1016 = vunpack.c.h.bf16 %v950
        %v1017 = vunpack.c.l.bf16 %v951
        %v1018 = vunpack.c.h.bf16 %v951
        %v1019 = vunpack.c.l.bf16 %v952
        %v1020 = vunpack.c.h.bf16 %v952
        %v1021 = vunpack.c.l.bf16 %v953
        %v1022 = vunpack.c.h.bf16 %v953
        %v1023 = vunpack.c.l.bf16 %v954
        %v1024 = vunpack.c.h.bf16 %v954
        %v1025 = vunpack.c.l.bf16 %v955
        %v1026 = vunpack.c.h.bf16 %v955
        %v1027 = vunpack.c.l.bf16 %v956
        %v1028 = vunpack.c.h.bf16 %v956
        %v1029 = vunpack.c.l.bf16 %v957
        %v1030 = vunpack.c.h.bf16 %v957
        %v1031 = vunpack.c.l.bf16 %v958
        %v1032 = vunpack.c.h.bf16 %v958
        %v1033 = vunpack.c.l.bf16 %v959
        %v1034 = vunpack.c.h.bf16 %v959
        %v1035 = vunpack.c.l.bf16 %v960
        %v1036 = vunpack.c.h.bf16 %v960
        %v1037 = vunpack.c.l.bf16 %v961
        %v1038 = vunpack.c.h.bf16 %v961
        %v1039 = vunpack.c.l.bf16 %v962
        %v1040 = vunpack.c.h.bf16 %v962
        %v1041 = vunpack.c.l.bf16 %v963
        %v1042 = vunpack.c.h.bf16 %v963
        %v1043 = vunpack.c.l.bf16 %v964
        %v1044 = vunpack.c.h.bf16 %v964
        %v1045 = vsub.f32 %v781, %v965
        %v1046 = vsub.f32 %v782, %v966
        %v1047 = vsub.f32 %v783, %v967
        %v1048 = vsub.f32 %v784, %v968
        %v1049 = vsub.f32 %v785, %v969
        %v1050 = vsub.f32 %v786, %v970
        %v1051 = vsub.f32 %v787, %v971
        %v1052 = vsub.f32 %v788, %v972
        %v1053 = vsub.f32 %v789, %v973
        %v1054 = vsub.f32 %v790, %v974
        %v1055 = vsub.f32 %v791, %v975
        %v1056 = vsub.f32 %v792, %v976
        %v1057 = vsub.f32 %v793, %v977
        %v1058 = vsub.f32 %v794, %v978
        %v1059 = vsub.f32 %v795, %v979
        %v1060 = vsub.f32 %v796, %v980
        %v1061 = vsub.f32 %v813, %v981
        %v1062 = vsub.f32 %v814, %v982
        %v1063 = vsub.f32 %v815, %v983
        %v1064 = vsub.f32 %v816, %v984
        %v1065 = vsub.f32 %v817, %v985
        %v1066 = vsub.f32 %v818, %v986
        %v1067 = vsub.f32 %v819, %v987
        %v1068 = vsub.f32 %v820, %v988
        %v1069 = vsub.f32 %v821, %v989
        %v1070 = vsub.f32 %v822, %v990
        %v1071 = vsub.f32 %v823, %v991
        %v1072 = vsub.f32 %v824, %v992
        %v1073 = vsub.f32 %v825, %v993
        %v1074 = vsub.f32 %v826, %v994
        %v1075 = vsub.f32 %v827, %v995
        %v1076 = vsub.f32 %v828, %v996
        %v1077 = vsub.f32 %v845, %v997
        %v1078 = vsub.f32 %v846, %v998
        %v1079 = vsub.f32 %v847, %v999
        %v1080 = vsub.f32 %v848, %v1000
        %v1081 = vsub.f32 %v849, %v1001
        %v1082 = vsub.f32 %v850, %v1002
        %v1083 = vsub.f32 %v851, %v1003
        %v1084 = vsub.f32 %v852, %v1004
        %v1085 = vsub.f32 %v853, %v1005
        %v1086 = vsub.f32 %v854, %v1006
        %v1087 = vsub.f32 %v855, %v1007
        %v1088 = vsub.f32 %v856, %v1008
        %v1089 = vsub.f32 %v857, %v1009
        %v1090 = vsub.f32 %v858, %v1010
        %v1091 = vsub.f32 %v859, %v1011
        %v1092 = vsub.f32 %v860, %v1012
        %v1093 = vsub.f32 %v877, %v1013
        %v1094 = vsub.f32 %v878, %v1014
        %v1095 = vsub.f32 %v879, %v1015
        %v1096 = vsub.f32 %v880, %v1016
        %v1097 = vsub.f32 %v881, %v1017
        %v1098 = vsub.f32 %v882, %v1018
        %v1099 = vsub.f32 %v883, %v1019
        %v1100 = vsub.f32 %v884, %v1020
        %v1101 = vsub.f32 %v885, %v1021
        %v1102 = vsub.f32 %v886, %v1022
        %v1103 = vsub.f32 %v887, %v1023
        %v1104 = vsub.f32 %v888, %v1024
        %v1105 = vsub.f32 %v889, %v1025
        %v1106 = vsub.f32 %v890, %v1026
        %v1107 = vsub.f32 %v891, %v1027
        %v1108 = vsub.f32 %v892, %v1028
        %v1109 = vsub.f32 %v909, %v1029
        %v1110 = vsub.f32 %v910, %v1030
        %v1111 = vsub.f32 %v911, %v1031
        %v1112 = vsub.f32 %v912, %v1032
        %v1113 = vsub.f32 %v913, %v1033
        %v1114 = vsub.f32 %v914, %v1034
        %v1115 = vsub.f32 %v915, %v1035
        %v1116 = vsub.f32 %v916, %v1036
        %v1117 = vsub.f32 %v917, %v1037
        %v1118 = vsub.f32 %v918, %v1038
        %v1119 = vsub.f32 %v919, %v1039
        %v1120 = vsub.f32 %v920, %v1040
        %v1121 = vsub.f32 %v921, %v1041
        %v1122 = vsub.f32 %v922, %v1042
        %v1123 = vsub.f32 %v923, %v1043
        %v1124 = vsub.f32 %v924, %v1044
        %v1125 = vpack.c.bf16 %v1046, %v1045
        %v1126 = vpack.c.bf16 %v1048, %v1047
        %v1127 = vpack.c.bf16 %v1050, %v1049
        %v1128 = vpack.c.bf16 %v1052, %v1051
        %v1129 = vpack.c.bf16 %v1054, %v1053
        %v1130 = vpack.c.bf16 %v1056, %v1055
        %v1131 = vpack.c.bf16 %v1058, %v1057
        %v1132 = vpack.c.bf16 %v1060, %v1059
        %v1133 = vpack.c.bf16 %v1062, %v1061
        %v1134 = vpack.c.bf16 %v1064, %v1063
        %v1135 = vpack.c.bf16 %v1066, %v1065
        %v1136 = vpack.c.bf16 %v1068, %v1067
        %v1137 = vpack.c.bf16 %v1070, %v1069
        %v1138 = vpack.c.bf16 %v1072, %v1071
        %v1139 = vpack.c.bf16 %v1074, %v1073
        %v1140 = vpack.c.bf16 %v1076, %v1075
        %v1141 = vpack.c.bf16 %v1078, %v1077
        %v1142 = vpack.c.bf16 %v1080, %v1079
        %v1143 = vpack.c.bf16 %v1082, %v1081
        %v1144 = vpack.c.bf16 %v1084, %v1083
        %v1145 = vpack.c.bf16 %v1086, %v1085
        %v1146 = vpack.c.bf16 %v1088, %v1087
        %v1147 = vpack.c.bf16 %v1090, %v1089
        %v1148 = vpack.c.bf16 %v1092, %v1091
        %v1149 = vpack.c.bf16 %v1094, %v1093
        %v1150 = vpack.c.bf16 %v1096, %v1095
        %v1151 = vpack.c.bf16 %v1098, %v1097
        %v1152 = vpack.c.bf16 %v1100, %v1099
        %v1153 = vpack.c.bf16 %v1102, %v1101
        %v1154 = vpack.c.bf16 %v1104, %v1103
        %v1155 = vpack.c.bf16 %v1106, %v1105
        %v1156 = vpack.c.bf16 %v1108, %v1107
        %v1157 = vpack.c.bf16 %v1110, %v1109
        %v1158 = vpack.c.bf16 %v1112, %v1111
        %v1159 = vpack.c.bf16 %v1114, %v1113
        %v1160 = vpack.c.bf16 %v1116, %v1115
        %v1161 = vpack.c.bf16 %v1118, %v1117
        %v1162 = vpack.c.bf16 %v1120, %v1119
        %v1163 = vpack.c.bf16 %v1122, %v1121
        %v1164 = vpack.c.bf16 %v1124, %v1123
        %v1165 = vld [vmem:[#allocation7] sm:$0xf]
        %v1166 = vld [vmem:[#allocation7 + $0x4] sm:$0xf]
        %v1167 = vld [vmem:[#allocation8] sm:$0xf]
        %v1168 = vld [vmem:[#allocation8 + $0x4] sm:$0xf]
        %v1171 = vunpack.c.l.b16 %v1167
        %v1172 = vunpack.c.l.b16 %v1168
        %v1173 = vpack.c.b16 %v1172, %v1171
        %vm1175 = vcmask 130048
        %v1177 = vsel %vm1175, %v925, 0
        %v1180 = vsel %vm1175, %v926, 0
        %v1183 = vsel %vm1175, %v927, 0
        %v1186 = vsel %vm1175, %v928, 0
        %v1189 = vsel %vm1175, %v929, 0
        %v1192 = vsel %vm1175, %v930, 0
        %v1195 = vsel %vm1175, %v931, 0
        %v1198 = vsel %vm1175, %v932, 0
        %v1201 = vsel %vm1175, %v933, 0
        %v1204 = vsel %vm1175, %v934, 0
        %v1207 = vsel %vm1175, %v935, 0
        %v1210 = vsel %vm1175, %v936, 0
        %v1213 = vsel %vm1175, %v937, 0
        %v1216 = vsel %vm1175, %v938, 0
        %v1219 = vsel %vm1175, %v939, 0
        %v1222 = vsel %vm1175, %v940, 0
        %v1225 = vsel %vm1175, %v941, 0
        %v1228 = vsel %vm1175, %v942, 0
        %v1231 = vsel %vm1175, %v943, 0
        %v1234 = vsel %vm1175, %v944, 0
        %v1237 = vsel %vm1175, %v945, 0
        %v1240 = vsel %vm1175, %v946, 0
        %v1243 = vsel %vm1175, %v947, 0
        %v1246 = vsel %vm1175, %v948, 0
        %v1249 = vsel %vm1175, %v949, 0
        %v1252 = vsel %vm1175, %v950, 0
        %v1255 = vsel %vm1175, %v951, 0
        %v1258 = vsel %vm1175, %v952, 0
        %v1261 = vsel %vm1175, %v953, 0
        %v1264 = vsel %vm1175, %v954, 0
        %v1267 = vsel %vm1175, %v955, 0
        %v1270 = vsel %vm1175, %v956, 0
        %v1273 = vsel %vm1175, %v957, 0
        %v1276 = vsel %vm1175, %v958, 0
        %v1279 = vsel %vm1175, %v959, 0
        %v1282 = vsel %vm1175, %v960, 0
        %v1285 = vsel %vm1175, %v961, 0
        %v1288 = vsel %vm1175, %v962, 0
        %v1291 = vsel %vm1175, %v963, 0
        %v1294 = vsel %vm1175, %v964, 0
        %1296 = vmatprep.subr.bf16.mxu0 0
        %1297 = vmatpush1.bf16.msra.mxu0 %v1173
        %1298 = vmatprep.subr.bf16.mxu0 0
        %1299 = vmatpush1.bf16.msra.mxu0 0
        %1300 = vmatprep.subr.bf16.mxu0 0
        %1301 = vmatpush1.bf16.msra.mxu0 0
        %1302 = vmatprep.subr.bf16.mxu0 0
        %1303 = vmatpush1.bf16.msra.mxu0 0
        %1304 = vmatprep.subr.bf16.mxu0 0
        %1305 = vmatpush1.bf16.msra.mxu0 0
        %1306 = vmatprep.subr.bf16.mxu0 0
        %1307 = vmatpush1.bf16.msra.mxu0 0
        %1308 = vmatprep.subr.bf16.mxu0 0
        %1309 = vmatpush1.bf16.msra.mxu0 0
        %1310 = vmatprep.subr.bf16.mxu0 0
        %1311 = vmatpush1.bf16.msra.mxu0 0
        %1312 = vmatprep.subr.bf16.mxu0 0
        %1313 = vmatpush1.bf16.msra.mxu0 0
        %1314 = vmatprep.subr.bf16.mxu0 0
        %1315 = vmatpush1.bf16.msra.mxu0 0
        %1316 = vmatprep.subr.bf16.mxu0 0
        %1317 = vmatpush1.bf16.msra.mxu0 0
        %1318 = vmatprep.subr.bf16.mxu0 0
        %1319 = vmatpush1.bf16.msra.mxu0 0
        %1320 = vmatprep.subr.bf16.mxu0 0
        %1321 = vmatpush1.bf16.msra.mxu0 0
        %1322 = vmatprep.subr.bf16.mxu0 0
        %1323 = vmatpush1.bf16.msra.mxu0 0
        %1324 = vmatprep.subr.bf16.mxu0 0
        %1325 = vmatpush1.bf16.msra.mxu0 0
        %1326 = vmatprep.subr.bf16.mxu0 0
        %1327 = vmatpush1.bf16.msra.mxu0 0
        %1328 = vmatprep.mubr.bf16.mxu0 0
        %1329 = vmatmul.mubr.bf16.gmra.mrb[0].mxu0 %v1177
        %v1330 = vpop.f32.mrb[0].mxu0
        %v1331 = vadd.f32 0.0, %v1330
        %v1332 = vpop.f32.mrb[0].mxu0
        %v1333 = vpop.f32.mrb[0].mxu0
        %v1334 = vadd.f32 0.0, %v1333
        %v1335 = vpop.f32.mrb[0].mxu0
        %1336 = vmatprep.mubr.bf16.mxu0 0
        %1337 = vmatmul.mubr.bf16.gmra.mrb[0].mxu0 %v1180
        %v1338 = vpop.f32.mrb[0].mxu0
        %v1339 = vadd.f32 0.0, %v1338
        %v1340 = vpop.f32.mrb[0].mxu0
        %v1341 = vpop.f32.mrb[0].mxu0
        %v1342 = vadd.f32 0.0, %v1341
        %v1343 = vpop.f32.mrb[0].mxu0
        %1344 = vmatprep.mubr.bf16.mxu0 0
        %1345 = vmatmul.mubr.bf16.gmra.mrb[0].mxu0 %v1183
        %v1346 = vpop.f32.mrb[0].mxu0
        %v1347 = vadd.f32 0.0, %v1346
        %v1348 = vpop.f32.mrb[0].mxu0
        %v1349 = vpop.f32.mrb[0].mxu0
        %v1350 = vadd.f32 0.0, %v1349
        %v1351 = vpop.f32.mrb[0].mxu0
        %1352 = vmatprep.mubr.bf16.mxu0 0
        %1353 = vmatmul.mubr.bf16.gmra.mrb[0].mxu0 %v1186
        %v1354 = vpop.f32.mrb[0].mxu0
        %v1355 = vadd.f32 0.0, %v1354
        %v1356 = vpop.f32.mrb[0].mxu0
        %v1357 = vpop.f32.mrb[0].mxu0
        %v1358 = vadd.f32 0.0, %v1357
        %v1359 = vpop.f32.mrb[0].mxu0
        %1360 = vmatprep.mubr.bf16.mxu0 0
        %1361 = vmatmul.mubr.bf16.gmra.mrb[0].mxu0 %v1189
        %v1362 = vpop.f32.mrb[0].mxu0
        %v1363 = vadd.f32 0.0, %v1362
        %v1364 = vpop.f32.mrb[0].mxu0
        %v1365 = vpop.f32.mrb[0].mxu0
        %v1366 = vadd.f32 0.0, %v1365
        %v1367 = vpop.f32.mrb[0].mxu0
        %1368 = vmatprep.mubr.bf16.mxu0 0
        %1369 = vmatmul.mubr.bf16.gmra.mrb[0].mxu0 %v1192
        %v1370 = vpop.f32.mrb[0].mxu0
        %v1371 = vadd.f32 0.0, %v1370
        %v1372 = vpop.f32.mrb[0].mxu0
        %v1373 = vpop.f32.mrb[0].mxu0
        %v1374 = vadd.f32 0.0, %v1373
        %v1375 = vpop.f32.mrb[0].mxu0
        %1376 = vmatprep.mubr.bf16.mxu0 0
        %1377 = vmatmul.mubr.bf16.gmra.mrb[0].mxu0 %v1195
        %v1378 = vpop.f32.mrb[0].mxu0
        %v1379 = vadd.f32 0.0, %v1378
        %v1380 = vpop.f32.mrb[0].mxu0
        %v1381 = vpop.f32.mrb[0].mxu0
        %v1382 = vadd.f32 0.0, %v1381
        %v1383 = vpop.f32.mrb[0].mxu0
        %1384 = vmatprep.mubr.bf16.mxu0 0
        %1385 = vmatmul.mubr.bf16.gmra.mrb[0].mxu0 %v1198
        %v1386 = vpop.f32.mrb[0].mxu0
        %v1387 = vadd.f32 0.0, %v1386
        %v1388 = vpop.f32.mrb[0].mxu0
        %v1389 = vpop.f32.mrb[0].mxu0
        %v1390 = vadd.f32 0.0, %v1389
        %v1391 = vpop.f32.mrb[0].mxu0
        %1392 = vmatprep.mubr.bf16.mxu0 0
        %1393 = vmatmul.mubr.bf16.gmra.mrb[0].mxu0 %v1201
        %v1394 = vpop.f32.mrb[0].mxu0
        %v1395 = vadd.f32 0.0, %v1394
        %v1396 = vpop.f32.mrb[0].mxu0
        %v1397 = vpop.f32.mrb[0].mxu0
        %v1398 = vadd.f32 0.0, %v1397
        %v1399 = vpop.f32.mrb[0].mxu0
        %1400 = vmatprep.mubr.bf16.mxu0 0
        %1401 = vmatmul.mubr.bf16.gmra.mrb[0].mxu0 %v1204
        %v1402 = vpop.f32.mrb[0].mxu0
        %v1403 = vadd.f32 0.0, %v1402
        %v1404 = vpop.f32.mrb[0].mxu0
        %v1405 = vpop.f32.mrb[0].mxu0
        %v1406 = vadd.f32 0.0, %v1405
        %v1407 = vpop.f32.mrb[0].mxu0
        %1408 = vmatprep.mubr.bf16.mxu0 0
        %1409 = vmatmul.mubr.bf16.gmra.mrb[0].mxu0 %v1207
        %v1410 = vpop.f32.mrb[0].mxu0
        %v1411 = vadd.f32 0.0, %v1410
        %v1412 = vpop.f32.mrb[0].mxu0
        %v1413 = vpop.f32.mrb[0].mxu0
        %v1414 = vadd.f32 0.0, %v1413
        %v1415 = vpop.f32.mrb[0].mxu0
        %1416 = vmatprep.mubr.bf16.mxu0 0
        %1417 = vmatmul.mubr.bf16.gmra.mrb[0].mxu0 %v1210
        %v1418 = vpop.f32.mrb[0].mxu0
        %v1419 = vadd.f32 0.0, %v1418
        %v1420 = vpop.f32.mrb[0].mxu0
        %v1421 = vpop.f32.mrb[0].mxu0
        %v1422 = vadd.f32 0.0, %v1421
        %v1423 = vpop.f32.mrb[0].mxu0
        %1424 = vmatprep.mubr.bf16.mxu0 0
        %1425 = vmatmul.mubr.bf16.gmra.mrb[0].mxu0 %v1213
        %v1426 = vpop.f32.mrb[0].mxu0
        %v1427 = vadd.f32 0.0, %v1426
        %v1428 = vpop.f32.mrb[0].mxu0
        %v1429 = vpop.f32.mrb[0].mxu0
        %v1430 = vadd.f32 0.0, %v1429
        %v1431 = vpop.f32.mrb[0].mxu0
        %1432 = vmatprep.mubr.bf16.mxu0 0
        %1433 = vmatmul.mubr.bf16.gmra.mrb[0].mxu0 %v1216
        %v1434 = vpop.f32.mrb[0].mxu0
        %v1435 = vadd.f32 0.0, %v1434
        %v1436 = vpop.f32.mrb[0].mxu0
        %v1437 = vpop.f32.mrb[0].mxu0
        %v1438 = vadd.f32 0.0, %v1437
        %v1439 = vpop.f32.mrb[0].mxu0
        %1440 = vmatprep.mubr.bf16.mxu0 0
        %1441 = vmatmul.mubr.bf16.gmra.mrb[0].mxu0 %v1219
        %v1442 = vpop.f32.mrb[0].mxu0
        %v1443 = vadd.f32 0.0, %v1442
        %v1444 = vpop.f32.mrb[0].mxu0
        %v1445 = vpop.f32.mrb[0].mxu0
        %v1446 = vadd.f32 0.0, %v1445
        %v1447 = vpop.f32.mrb[0].mxu0
        %1448 = vmatprep.mubr.bf16.mxu0 0
        %1449 = vmatmul.mubr.bf16.gmra.mrb[0].mxu0 %v1222
        %v1450 = vpop.f32.mrb[0].mxu0
        %v1451 = vadd.f32 0.0, %v1450
        %v1452 = vpop.f32.mrb[0].mxu0
        %v1453 = vpop.f32.mrb[0].mxu0
        %v1454 = vadd.f32 0.0, %v1453
        %v1455 = vpop.f32.mrb[0].mxu0
        %1456 = vmatprep.mubr.bf16.mxu0 0
        %1457 = vmatmul.mubr.bf16.gmra.mrb[0].mxu0 %v1225
        %v1458 = vpop.f32.mrb[0].mxu0
        %v1459 = vadd.f32 0.0, %v1458
        %v1460 = vpop.f32.mrb[0].mxu0
        %v1461 = vpop.f32.mrb[0].mxu0
        %v1462 = vadd.f32 0.0, %v1461
        %v1463 = vpop.f32.mrb[0].mxu0
        %1464 = vmatprep.mubr.bf16.mxu0 0
        %1465 = vmatmul.mubr.bf16.gmra.mrb[0].mxu0 %v1228
        %v1466 = vpop.f32.mrb[0].mxu0
        %v1467 = vadd.f32 0.0, %v1466
        %v1468 = vpop.f32.mrb[0].mxu0
        %v1469 = vpop.f32.mrb[0].mxu0
        %v1470 = vadd.f32 0.0, %v1469
        %v1471 = vpop.f32.mrb[0].mxu0
        %1472 = vmatprep.mubr.bf16.mxu0 0
        %1473 = vmatmul.mubr.bf16.gmra.mrb[0].mxu0 %v1231
        %v1474 = vpop.f32.mrb[0].mxu0
        %v1475 = vadd.f32 0.0, %v1474
        %v1476 = vpop.f32.mrb[0].mxu0
        %v1477 = vpop.f32.mrb[0].mxu0
        %v1478 = vadd.f32 0.0, %v1477
        %v1479 = vpop.f32.mrb[0].mxu0
        %1480 = vmatprep.mubr.bf16.mxu0 0
        %1481 = vmatmul.mubr.bf16.gmra.mrb[0].mxu0 %v1234
        %v1482 = vpop.f32.mrb[0].mxu0
        %v1483 = vadd.f32 0.0, %v1482
        %v1484 = vpop.f32.mrb[0].mxu0
        %v1485 = vpop.f32.mrb[0].mxu0
        %v1486 = vadd.f32 0.0, %v1485
        %v1487 = vpop.f32.mrb[0].mxu0
        %1488 = vmatprep.mubr.bf16.mxu0 0
        %1489 = vmatmul.mubr.bf16.gmra.mrb[0].mxu0 %v1237
        %v1490 = vpop.f32.mrb[0].mxu0
        %v1491 = vadd.f32 0.0, %v1490
        %v1492 = vpop.f32.mrb[0].mxu0
        %v1493 = vpop.f32.mrb[0].mxu0
        %v1494 = vadd.f32 0.0, %v1493
        %v1495 = vpop.f32.mrb[0].mxu0
        %1496 = vmatprep.mubr.bf16.mxu0 0
        %1497 = vmatmul.mubr.bf16.gmra.mrb[0].mxu0 %v1240
        %v1498 = vpop.f32.mrb[0].mxu0
        %v1499 = vadd.f32 0.0, %v1498
        %v1500 = vpop.f32.mrb[0].mxu0
        %v1501 = vpop.f32.mrb[0].mxu0
        %v1502 = vadd.f32 0.0, %v1501
        %v1503 = vpop.f32.mrb[0].mxu0
        %1504 = vmatprep.mubr.bf16.mxu0 0
        %1505 = vmatmul.mubr.bf16.gmra.mrb[0].mxu0 %v1243
        %v1506 = vpop.f32.mrb[0].mxu0
        %v1507 = vadd.f32 0.0, %v1506
        %v1508 = vpop.f32.mrb[0].mxu0
        %v1509 = vpop.f32.mrb[0].mxu0
        %v1510 = vadd.f32 0.0, %v1509
        %v1511 = vpop.f32.mrb[0].mxu0
        %1512 = vmatprep.mubr.bf16.mxu0 0
        %1513 = vmatmul.mubr.bf16.gmra.mrb[0].mxu0 %v1246
        %v1514 = vpop.f32.mrb[0].mxu0
        %v1515 = vadd.f32 0.0, %v1514
        %v1516 = vpop.f32.mrb[0].mxu0
        %v1517 = vpop.f32.mrb[0].mxu0
        %v1518 = vadd.f32 0.0, %v1517
        %v1519 = vpop.f32.mrb[0].mxu0
        %1520 = vmatprep.mubr.bf16.mxu0 0
        %1521 = vmatmul.mubr.bf16.gmra.mrb[0].mxu0 %v1249
        %v1522 = vpop.f32.mrb[0].mxu0
        %v1523 = vadd.f32 0.0, %v1522
        %v1524 = vpop.f32.mrb[0].mxu0
        %v1525 = vpop.f32.mrb[0].mxu0
        %v1526 = vadd.f32 0.0, %v1525
        %v1527 = vpop.f32.mrb[0].mxu0
        %1528 = vmatprep.mubr.bf16.mxu0 0
        %1529 = vmatmul.mubr.bf16.gmra.mrb[0].mxu0 %v1252
        %v1530 = vpop.f32.mrb[0].mxu0
        %v1531 = vadd.f32 0.0, %v1530
        %v1532 = vpop.f32.mrb[0].mxu0
        %v1533 = vpop.f32.mrb[0].mxu0
        %v1534 = vadd.f32 0.0, %v1533
        %v1535 = vpop.f32.mrb[0].mxu0
        %1536 = vmatprep.mubr.bf16.mxu0 0
        %1537 = vmatmul.mubr.bf16.gmra.mrb[0].mxu0 %v1255
        %v1538 = vpop.f32.mrb[0].mxu0
        %v1539 = vadd.f32 0.0, %v1538
        %v1540 = vpop.f32.mrb[0].mxu0
        %v1541 = vpop.f32.mrb[0].mxu0
        %v1542 = vadd.f32 0.0, %v1541
        %v1543 = vpop.f32.mrb[0].mxu0
        %1544 = vmatprep.mubr.bf16.mxu0 0
        %1545 = vmatmul.mubr.bf16.gmra.mrb[0].mxu0 %v1258
        %v1546 = vpop.f32.mrb[0].mxu0
        %v1547 = vadd.f32 0.0, %v1546
        %v1548 = vpop.f32.mrb[0].mxu0
        %v1549 = vpop.f32.mrb[0].mxu0
        %v1550 = vadd.f32 0.0, %v1549
        %v1551 = vpop.f32.mrb[0].mxu0
        %1552 = vmatprep.mubr.bf16.mxu0 0
        %1553 = vmatmul.mubr.bf16.gmra.mrb[0].mxu0 %v1261
        %v1554 = vpop.f32.mrb[0].mxu0
        %v1555 = vadd.f32 0.0, %v1554
        %v1556 = vpop.f32.mrb[0].mxu0
        %v1557 = vpop.f32.mrb[0].mxu0
        %v1558 = vadd.f32 0.0, %v1557
        %v1559 = vpop.f32.mrb[0].mxu0
        %1560 = vmatprep.mubr.bf16.mxu0 0
        %1561 = vmatmul.mubr.bf16.gmra.mrb[0].mxu0 %v1264
        %v1562 = vpop.f32.mrb[0].mxu0
        %v1563 = vadd.f32 0.0, %v1562
        %v1564 = vpop.f32.mrb[0].mxu0
        %v1565 = vpop.f32.mrb[0].mxu0
        %v1566 = vadd.f32 0.0, %v1565
        %v1567 = vpop.f32.mrb[0].mxu0
        %1568 = vmatprep.mubr.bf16.mxu0 0
        %1569 = vmatmul.mubr.bf16.gmra.mrb[0].mxu0 %v1267
        %v1570 = vpop.f32.mrb[0].mxu0
        %v1571 = vadd.f32 0.0, %v1570
        %v1572 = vpop.f32.mrb[0].mxu0
        %v1573 = vpop.f32.mrb[0].mxu0
        %v1574 = vadd.f32 0.0, %v1573
        %v1575 = vpop.f32.mrb[0].mxu0
        %1576 = vmatprep.mubr.bf16.mxu0 0
        %1577 = vmatmul.mubr.bf16.gmra.mrb[0].mxu0 %v1270
        %v1578 = vpop.f32.mrb[0].mxu0
        %v1579 = vadd.f32 0.0, %v1578
        %v1580 = vpop.f32.mrb[0].mxu0
        %v1581 = vpop.f32.mrb[0].mxu0
        %v1582 = vadd.f32 0.0, %v1581
        %v1583 = vpop.f32.mrb[0].mxu0
        %1584 = vmatprep.mubr.bf16.mxu0 0
        %1585 = vmatmul.mubr.bf16.gmra.mrb[0].mxu0 %v1273
        %v1586 = vpop.f32.mrb[0].mxu0
        %v1587 = vadd.f32 0.0, %v1586
        %v1588 = vpop.f32.mrb[0].mxu0
        %v1589 = vpop.f32.mrb[0].mxu0
        %v1590 = vadd.f32 0.0, %v1589
        %v1591 = vpop.f32.mrb[0].mxu0
        %1592 = vmatprep.mubr.bf16.mxu0 0
        %1593 = vmatmul.mubr.bf16.gmra.mrb[0].mxu0 %v1276
        %v1594 = vpop.f32.mrb[0].mxu0
        %v1595 = vadd.f32 0.0, %v1594
        %v1596 = vpop.f32.mrb[0].mxu0
        %v1597 = vpop.f32.mrb[0].mxu0
        %v1598 = vadd.f32 0.0, %v1597
        %v1599 = vpop.f32.mrb[0].mxu0
        %1600 = vmatprep.mubr.bf16.mxu0 0
        %1601 = vmatmul.mubr.bf16.gmra.mrb[0].mxu0 %v1279
        %v1602 = vpop.f32.mrb[0].mxu0
        %v1603 = vadd.f32 0.0, %v1602
        %v1604 = vpop.f32.mrb[0].mxu0
        %v1605 = vpop.f32.mrb[0].mxu0
        %v1606 = vadd.f32 0.0, %v1605
        %v1607 = vpop.f32.mrb[0].mxu0
        %1608 = vmatprep.mubr.bf16.mxu0 0
        %1609 = vmatmul.mubr.bf16.gmra.mrb[0].mxu0 %v1282
        %v1610 = vpop.f32.mrb[0].mxu0
        %v1611 = vadd.f32 0.0, %v1610
        %v1612 = vpop.f32.mrb[0].mxu0
        %v1613 = vpop.f32.mrb[0].mxu0
        %v1614 = vadd.f32 0.0, %v1613
        %v1615 = vpop.f32.mrb[0].mxu0
        %1616 = vmatprep.mubr.bf16.mxu0 0
        %1617 = vmatmul.mubr.bf16.gmra.mrb[0].mxu0 %v1285
        %v1618 = vpop.f32.mrb[0].mxu0
        %v1619 = vadd.f32 0.0, %v1618
        %v1620 = vpop.f32.mrb[0].mxu0
        %v1621 = vpop.f32.mrb[0].mxu0
        %v1622 = vadd.f32 0.0, %v1621
        %v1623 = vpop.f32.mrb[0].mxu0
        %1624 = vmatprep.mubr.bf16.mxu0 0
        %1625 = vmatmul.mubr.bf16.gmra.mrb[0].mxu0 %v1288
        %v1626 = vpop.f32.mrb[0].mxu0
        %v1627 = vadd.f32 0.0, %v1626
        %v1628 = vpop.f32.mrb[0].mxu0
        %v1629 = vpop.f32.mrb[0].mxu0
        %v1630 = vadd.f32 0.0, %v1629
        %v1631 = vpop.f32.mrb[0].mxu0
        %1632 = vmatprep.mubr.bf16.mxu0 0
        %1633 = vmatmul.mubr.bf16.gmra.mrb[0].mxu0 %v1291
        %v1634 = vpop.f32.mrb[0].mxu0
        %v1635 = vadd.f32 0.0, %v1634
        %v1636 = vpop.f32.mrb[0].mxu0
        %v1637 = vpop.f32.mrb[0].mxu0
        %v1638 = vadd.f32 0.0, %v1637
        %v1639 = vpop.f32.mrb[0].mxu0
        %1640 = vmatprep.mubr.bf16.mxu0 0
        %1641 = vmatmul.mubr.bf16.gmra.mrb[0].mxu0 %v1294
        %v1642 = vpop.f32.mrb[0].mxu0
        %v1643 = vadd.f32 0.0, %v1642
        %v1644 = vpop.f32.mrb[0].mxu0
        %v1645 = vpop.f32.mrb[0].mxu0
        %v1646 = vadd.f32 0.0, %v1645
        %v1647 = vpop.f32.mrb[0].mxu0
        %1648 = vdwg.mxu0
        %v1651 = vunpack.c.l.b16 %v1165
        %v1652 = vunpack.c.l.b16 %v1166
        %v1653 = vpack.c.b16 %v1652, %v1651
        %1655 = vmatprep.subr.bf16.mxu0 0
        %1656 = vmatpush1.bf16.msra.mxu0 %v1653
        %1657 = vmatprep.subr.bf16.mxu0 0
        %1658 = vmatpush1.bf16.msra.mxu0 0
        %1659 = vmatprep.subr.bf16.mxu0 0
        %1660 = vmatpush1.bf16.msra.mxu0 0
        %1661 = vmatprep.subr.bf16.mxu0 0
        %1662 = vmatpush1.bf16.msra.mxu0 0
        %1663 = vmatprep.subr.bf16.mxu0 0
        %1664 = vmatpush1.bf16.msra.mxu0 0
        %1665 = vmatprep.subr.bf16.mxu0 0
        %1666 = vmatpush1.bf16.msra.mxu0 0
        %1667 = vmatprep.subr.bf16.mxu0 0
        %1668 = vmatpush1.bf16.msra.mxu0 0
        %1669 = vmatprep.subr.bf16.mxu0 0
        %1670 = vmatpush1.bf16.msra.mxu0 0
        %1671 = vmatprep.subr.bf16.mxu0 0
        %1672 = vmatpush1.bf16.msra.mxu0 0
        %1673 = vmatprep.subr.bf16.mxu0 0
        %1674 = vmatpush1.bf16.msra.mxu0 0
        %1675 = vmatprep.subr.bf16.mxu0 0
        %1676 = vmatpush1.bf16.msra.mxu0 0
        %1677 = vmatprep.subr.bf16.mxu0 0
        %1678 = vmatpush1.bf16.msra.mxu0 0
        %1679 = vmatprep.subr.bf16.mxu0 0
        %1680 = vmatpush1.bf16.msra.mxu0 0
        %1681 = vmatprep.subr.bf16.mxu0 0
        %1682 = vmatpush1.bf16.msra.mxu0 0
        %1683 = vmatprep.subr.bf16.mxu0 0
        %1684 = vmatpush1.bf16.msra.mxu0 0
        %1685 = vmatprep.subr.bf16.mxu0 0
        %1686 = vmatpush1.bf16.msra.mxu0 0
        %1687 = vmatprep.mubr.bf16.mxu0 0
        %1688 = vmatmul.mubr.bf16.gmra.mrb[0].mxu0 %v1177
        %v1689 = vpop.f32.mrb[0].mxu0
        %v1690 = vadd.f32 %v1331, %v1689
        %v1691 = vpop.f32.mrb[0].mxu0
        %v1692 = vpop.f32.mrb[0].mxu0
        %v1693 = vadd.f32 %v1334, %v1692
        %v1694 = vpop.f32.mrb[0].mxu0
        %1695 = vmatprep.mubr.bf16.mxu0 0
        %1696 = vmatmul.mubr.bf16.gmra.mrb[0].mxu0 %v1180
        %v1697 = vpop.f32.mrb[0].mxu0
        %v1698 = vadd.f32 %v1339, %v1697
        %v1699 = vpop.f32.mrb[0].mxu0
        %v1700 = vpop.f32.mrb[0].mxu0
        %v1701 = vadd.f32 %v1342, %v1700
        %v1702 = vpop.f32.mrb[0].mxu0
        %1703 = vmatprep.mubr.bf16.mxu0 0
        %1704 = vmatmul.mubr.bf16.gmra.mrb[0].mxu0 %v1183
        %v1705 = vpop.f32.mrb[0].mxu0
        %v1706 = vadd.f32 %v1347, %v1705
        %v1707 = vpop.f32.mrb[0].mxu0
        %v1708 = vpop.f32.mrb[0].mxu0
        %v1709 = vadd.f32 %v1350, %v1708
        %v1710 = vpop.f32.mrb[0].mxu0
        %1711 = vmatprep.mubr.bf16.mxu0 0
        %1712 = vmatmul.mubr.bf16.gmra.mrb[0].mxu0 %v1186
        %v1713 = vpop.f32.mrb[0].mxu0
        %v1714 = vadd.f32 %v1355, %v1713
        %v1715 = vpop.f32.mrb[0].mxu0
        %v1716 = vpop.f32.mrb[0].mxu0
        %v1717 = vadd.f32 %v1358, %v1716
        %v1718 = vpop.f32.mrb[0].mxu0
        %1719 = vmatprep.mubr.bf16.mxu0 0
        %1720 = vmatmul.mubr.bf16.gmra.mrb[0].mxu0 %v1189
        %v1721 = vpop.f32.mrb[0].mxu0
        %v1722 = vadd.f32 %v1363, %v1721
        %v1723 = vpop.f32.mrb[0].mxu0
        %v1724 = vpop.f32.mrb[0].mxu0
        %v1725 = vadd.f32 %v1366, %v1724
        %v1726 = vpop.f32.mrb[0].mxu0
        %1727 = vmatprep.mubr.bf16.mxu0 0
        %1728 = vmatmul.mubr.bf16.gmra.mrb[0].mxu0 %v1192
        %v1729 = vpop.f32.mrb[0].mxu0
        %v1730 = vadd.f32 %v1371, %v1729
        %v1731 = vpop.f32.mrb[0].mxu0
        %v1732 = vpop.f32.mrb[0].mxu0
        %v1733 = vadd.f32 %v1374, %v1732
        %v1734 = vpop.f32.mrb[0].mxu0
        %1735 = vmatprep.mubr.bf16.mxu0 0
        %1736 = vmatmul.mubr.bf16.gmra.mrb[0].mxu0 %v1195
        %v1737 = vpop.f32.mrb[0].mxu0
        %v1738 = vadd.f32 %v1379, %v1737
        %v1739 = vpop.f32.mrb[0].mxu0
        %v1740 = vpop.f32.mrb[0].mxu0
        %v1741 = vadd.f32 %v1382, %v1740
        %v1742 = vpop.f32.mrb[0].mxu0
        %1743 = vmatprep.mubr.bf16.mxu0 0
        %1744 = vmatmul.mubr.bf16.gmra.mrb[0].mxu0 %v1198
        %v1745 = vpop.f32.mrb[0].mxu0
        %v1746 = vadd.f32 %v1387, %v1745
        %v1747 = vpop.f32.mrb[0].mxu0
        %v1748 = vpop.f32.mrb[0].mxu0
        %v1749 = vadd.f32 %v1390, %v1748
        %v1750 = vpop.f32.mrb[0].mxu0
        %1751 = vmatprep.mubr.bf16.mxu0 0
        %1752 = vmatmul.mubr.bf16.gmra.mrb[0].mxu0 %v1201
        %v1753 = vpop.f32.mrb[0].mxu0
        %v1754 = vadd.f32 %v1395, %v1753
        %v1755 = vpop.f32.mrb[0].mxu0
        %v1756 = vpop.f32.mrb[0].mxu0
        %v1757 = vadd.f32 %v1398, %v1756
        %v1758 = vpop.f32.mrb[0].mxu0
        %1759 = vmatprep.mubr.bf16.mxu0 0
        %1760 = vmatmul.mubr.bf16.gmra.mrb[0].mxu0 %v1204
        %v1761 = vpop.f32.mrb[0].mxu0
        %v1762 = vadd.f32 %v1403, %v1761
        %v1763 = vpop.f32.mrb[0].mxu0
        %v1764 = vpop.f32.mrb[0].mxu0
        %v1765 = vadd.f32 %v1406, %v1764
        %v1766 = vpop.f32.mrb[0].mxu0
        %1767 = vmatprep.mubr.bf16.mxu0 0
        %1768 = vmatmul.mubr.bf16.gmra.mrb[0].mxu0 %v1207
        %v1769 = vpop.f32.mrb[0].mxu0
        %v1770 = vadd.f32 %v1411, %v1769
        %v1771 = vpop.f32.mrb[0].mxu0
        %v1772 = vpop.f32.mrb[0].mxu0
        %v1773 = vadd.f32 %v1414, %v1772
        %v1774 = vpop.f32.mrb[0].mxu0
        %1775 = vmatprep.mubr.bf16.mxu0 0
        %1776 = vmatmul.mubr.bf16.gmra.mrb[0].mxu0 %v1210
        %v1777 = vpop.f32.mrb[0].mxu0
        %v1778 = vadd.f32 %v1419, %v1777
        %v1779 = vpop.f32.mrb[0].mxu0
        %v1780 = vpop.f32.mrb[0].mxu0
        %v1781 = vadd.f32 %v1422, %v1780
        %v1782 = vpop.f32.mrb[0].mxu0
        %1783 = vmatprep.mubr.bf16.mxu0 0
        %1784 = vmatmul.mubr.bf16.gmra.mrb[0].mxu0 %v1213
        %v1785 = vpop.f32.mrb[0].mxu0
        %v1786 = vadd.f32 %v1427, %v1785
        %v1787 = vpop.f32.mrb[0].mxu0
        %v1788 = vpop.f32.mrb[0].mxu0
        %v1789 = vadd.f32 %v1430, %v1788
        %v1790 = vpop.f32.mrb[0].mxu0
        %1791 = vmatprep.mubr.bf16.mxu0 0
        %1792 = vmatmul.mubr.bf16.gmra.mrb[0].mxu0 %v1216
        %v1793 = vpop.f32.mrb[0].mxu0
        %v1794 = vadd.f32 %v1435, %v1793
        %v1795 = vpop.f32.mrb[0].mxu0
        %v1796 = vpop.f32.mrb[0].mxu0
        %v1797 = vadd.f32 %v1438, %v1796
        %v1798 = vpop.f32.mrb[0].mxu0
        %1799 = vmatprep.mubr.bf16.mxu0 0
        %1800 = vmatmul.mubr.bf16.gmra.mrb[0].mxu0 %v1219
        %v1801 = vpop.f32.mrb[0].mxu0
        %v1802 = vadd.f32 %v1443, %v1801
        %v1803 = vpop.f32.mrb[0].mxu0
        %v1804 = vpop.f32.mrb[0].mxu0
        %v1805 = vadd.f32 %v1446, %v1804
        %v1806 = vpop.f32.mrb[0].mxu0
        %1807 = vmatprep.mubr.bf16.mxu0 0
        %1808 = vmatmul.mubr.bf16.gmra.mrb[0].mxu0 %v1222
        %v1809 = vpop.f32.mrb[0].mxu0
        %v1810 = vadd.f32 %v1451, %v1809
        %v1811 = vpop.f32.mrb[0].mxu0
        %v1812 = vpop.f32.mrb[0].mxu0
        %v1813 = vadd.f32 %v1454, %v1812
        %v1814 = vpop.f32.mrb[0].mxu0
        %1815 = vmatprep.mubr.bf16.mxu0 0
        %1816 = vmatmul.mubr.bf16.gmra.mrb[0].mxu0 %v1225
        %v1817 = vpop.f32.mrb[0].mxu0
        %v1818 = vadd.f32 %v1459, %v1817
        %v1819 = vpop.f32.mrb[0].mxu0
        %v1820 = vpop.f32.mrb[0].mxu0
        %v1821 = vadd.f32 %v1462, %v1820
        %v1822 = vpop.f32.mrb[0].mxu0
        %1823 = vmatprep.mubr.bf16.mxu0 0
        %1824 = vmatmul.mubr.bf16.gmra.mrb[0].mxu0 %v1228
        %v1825 = vpop.f32.mrb[0].mxu0
        %v1826 = vadd.f32 %v1467, %v1825
        %v1827 = vpop.f32.mrb[0].mxu0
        %v1828 = vpop.f32.mrb[0].mxu0
        %v1829 = vadd.f32 %v1470, %v1828
        %v1830 = vpop.f32.mrb[0].mxu0
        %1831 = vmatprep.mubr.bf16.mxu0 0
        %1832 = vmatmul.mubr.bf16.gmra.mrb[0].mxu0 %v1231
        %v1833 = vpop.f32.mrb[0].mxu0
        %v1834 = vadd.f32 %v1475, %v1833
        %v1835 = vpop.f32.mrb[0].mxu0
        %v1836 = vpop.f32.mrb[0].mxu0
        %v1837 = vadd.f32 %v1478, %v1836
        %v1838 = vpop.f32.mrb[0].mxu0
        %1839 = vmatprep.mubr.bf16.mxu0 0
        %1840 = vmatmul.mubr.bf16.gmra.mrb[0].mxu0 %v1234
        %v1841 = vpop.f32.mrb[0].mxu0
        %v1842 = vadd.f32 %v1483, %v1841
        %v1843 = vpop.f32.mrb[0].mxu0
        %v1844 = vpop.f32.mrb[0].mxu0
        %v1845 = vadd.f32 %v1486, %v1844
        %v1846 = vpop.f32.mrb[0].mxu0
        %1847 = vmatprep.mubr.bf16.mxu0 0
        %1848 = vmatmul.mubr.bf16.gmra.mrb[0].mxu0 %v1237
        %v1849 = vpop.f32.mrb[0].mxu0
        %v1850 = vadd.f32 %v1491, %v1849
        %v1851 = vpop.f32.mrb[0].mxu0
        %v1852 = vpop.f32.mrb[0].mxu0
        %v1853 = vadd.f32 %v1494, %v1852
        %v1854 = vpop.f32.mrb[0].mxu0
        %1855 = vmatprep.mubr.bf16.mxu0 0
        %1856 = vmatmul.mubr.bf16.gmra.mrb[0].mxu0 %v1240
        %v1857 = vpop.f32.mrb[0].mxu0
        %v1858 = vadd.f32 %v1499, %v1857
        %v1859 = vpop.f32.mrb[0].mxu0
        %v1860 = vpop.f32.mrb[0].mxu0
        %v1861 = vadd.f32 %v1502, %v1860
        %v1862 = vpop.f32.mrb[0].mxu0
        %1863 = vmatprep.mubr.bf16.mxu0 0
        %1864 = vmatmul.mubr.bf16.gmra.mrb[0].mxu0 %v1243
        %v1865 = vpop.f32.mrb[0].mxu0
        %v1866 = vadd.f32 %v1507, %v1865
        %v1867 = vpop.f32.mrb[0].mxu0
        %v1868 = vpop.f32.mrb[0].mxu0
        %v1869 = vadd.f32 %v1510, %v1868
        %v1870 = vpop.f32.mrb[0].mxu0
        %1871 = vmatprep.mubr.bf16.mxu0 0
        %1872 = vmatmul.mubr.bf16.gmra.mrb[0].mxu0 %v1246
        %v1873 = vpop.f32.mrb[0].mxu0
        %v1874 = vadd.f32 %v1515, %v1873
        %v1875 = vpop.f32.mrb[0].mxu0
        %v1876 = vpop.f32.mrb[0].mxu0
        %v1877 = vadd.f32 %v1518, %v1876
        %v1878 = vpop.f32.mrb[0].mxu0
        %1879 = vmatprep.mubr.bf16.mxu0 0
        %1880 = vmatmul.mubr.bf16.gmra.mrb[0].mxu0 %v1249
        %v1881 = vpop.f32.mrb[0].mxu0
        %v1882 = vadd.f32 %v1523, %v1881
        %v1883 = vpop.f32.mrb[0].mxu0
        %v1884 = vpop.f32.mrb[0].mxu0
        %v1885 = vadd.f32 %v1526, %v1884
        %v1886 = vpop.f32.mrb[0].mxu0
        %1887 = vmatprep.mubr.bf16.mxu0 0
        %1888 = vmatmul.mubr.bf16.gmra.mrb[0].mxu0 %v1252
        %v1889 = vpop.f32.mrb[0].mxu0
        %v1890 = vadd.f32 %v1531, %v1889
        %v1891 = vpop.f32.mrb[0].mxu0
        %v1892 = vpop.f32.mrb[0].mxu0
        %v1893 = vadd.f32 %v1534, %v1892
        %v1894 = vpop.f32.mrb[0].mxu0
        %1895 = vmatprep.mubr.bf16.mxu0 0
        %1896 = vmatmul.mubr.bf16.gmra.mrb[0].mxu0 %v1255
        %v1897 = vpop.f32.mrb[0].mxu0
        %v1898 = vadd.f32 %v1539, %v1897
        %v1899 = vpop.f32.mrb[0].mxu0
        %v1900 = vpop.f32.mrb[0].mxu0
        %v1901 = vadd.f32 %v1542, %v1900
        %v1902 = vpop.f32.mrb[0].mxu0
        %1903 = vmatprep.mubr.bf16.mxu0 0
        %1904 = vmatmul.mubr.bf16.gmra.mrb[0].mxu0 %v1258
        %v1905 = vpop.f32.mrb[0].mxu0
        %v1906 = vadd.f32 %v1547, %v1905
        %v1907 = vpop.f32.mrb[0].mxu0
        %v1908 = vpop.f32.mrb[0].mxu0
        %v1909 = vadd.f32 %v1550, %v1908
        %v1910 = vpop.f32.mrb[0].mxu0
        %1911 = vmatprep.mubr.bf16.mxu0 0
        %1912 = vmatmul.mubr.bf16.gmra.mrb[0].mxu0 %v1261
        %v1913 = vpop.f32.mrb[0].mxu0
        %v1914 = vadd.f32 %v1555, %v1913
        %v1915 = vpop.f32.mrb[0].mxu0
        %v1916 = vpop.f32.mrb[0].mxu0
        %v1917 = vadd.f32 %v1558, %v1916
        %v1918 = vpop.f32.mrb[0].mxu0
        %1919 = vmatprep.mubr.bf16.mxu0 0
        %1920 = vmatmul.mubr.bf16.gmra.mrb[0].mxu0 %v1264
        %v1921 = vpop.f32.mrb[0].mxu0
        %v1922 = vadd.f32 %v1563, %v1921
        %v1923 = vpop.f32.mrb[0].mxu0
        %v1924 = vpop.f32.mrb[0].mxu0
        %v1925 = vadd.f32 %v1566, %v1924
        %v1926 = vpop.f32.mrb[0].mxu0
        %1927 = vmatprep.mubr.bf16.mxu0 0
        %1928 = vmatmul.mubr.bf16.gmra.mrb[0].mxu0 %v1267
        %v1929 = vpop.f32.mrb[0].mxu0
        %v1930 = vadd.f32 %v1571, %v1929
        %v1931 = vpop.f32.mrb[0].mxu0
        %v1932 = vpop.f32.mrb[0].mxu0
        %v1933 = vadd.f32 %v1574, %v1932
        %v1934 = vpop.f32.mrb[0].mxu0
        %1935 = vmatprep.mubr.bf16.mxu0 0
        %1936 = vmatmul.mubr.bf16.gmra.mrb[0].mxu0 %v1270
        %v1937 = vpop.f32.mrb[0].mxu0
        %v1938 = vadd.f32 %v1579, %v1937
        %v1939 = vpop.f32.mrb[0].mxu0
        %v1940 = vpop.f32.mrb[0].mxu0
        %v1941 = vadd.f32 %v1582, %v1940
        %v1942 = vpop.f32.mrb[0].mxu0
        %1943 = vmatprep.mubr.bf16.mxu0 0
        %1944 = vmatmul.mubr.bf16.gmra.mrb[0].mxu0 %v1273
        %v1945 = vpop.f32.mrb[0].mxu0
        %v1946 = vadd.f32 %v1587, %v1945
        %v1947 = vpop.f32.mrb[0].mxu0
        %v1948 = vpop.f32.mrb[0].mxu0
        %v1949 = vadd.f32 %v1590, %v1948
        %v1950 = vpop.f32.mrb[0].mxu0
        %1951 = vmatprep.mubr.bf16.mxu0 0
        %1952 = vmatmul.mubr.bf16.gmra.mrb[0].mxu0 %v1276
        %v1953 = vpop.f32.mrb[0].mxu0
        %v1954 = vadd.f32 %v1595, %v1953
        %v1955 = vpop.f32.mrb[0].mxu0
        %v1956 = vpop.f32.mrb[0].mxu0
        %v1957 = vadd.f32 %v1598, %v1956
        %v1958 = vpop.f32.mrb[0].mxu0
        %1959 = vmatprep.mubr.bf16.mxu0 0
        %1960 = vmatmul.mubr.bf16.gmra.mrb[0].mxu0 %v1279
        %v1961 = vpop.f32.mrb[0].mxu0
        %v1962 = vadd.f32 %v1603, %v1961
        %v1963 = vpop.f32.mrb[0].mxu0
        %v1964 = vpop.f32.mrb[0].mxu0
        %v1965 = vadd.f32 %v1606, %v1964
        %v1966 = vpop.f32.mrb[0].mxu0
        %1967 = vmatprep.mubr.bf16.mxu0 0
        %1968 = vmatmul.mubr.bf16.gmra.mrb[0].mxu0 %v1282
        %v1969 = vpop.f32.mrb[0].mxu0
        %v1970 = vadd.f32 %v1611, %v1969
        %v1971 = vpop.f32.mrb[0].mxu0
        %v1972 = vpop.f32.mrb[0].mxu0
        %v1973 = vadd.f32 %v1614, %v1972
        %v1974 = vpop.f32.mrb[0].mxu0
        %1975 = vmatprep.mubr.bf16.mxu0 0
        %1976 = vmatmul.mubr.bf16.gmra.mrb[0].mxu0 %v1285
        %v1977 = vpop.f32.mrb[0].mxu0
        %v1978 = vadd.f32 %v1619, %v1977
        %v1979 = vpop.f32.mrb[0].mxu0
        %v1980 = vpop.f32.mrb[0].mxu0
        %v1981 = vadd.f32 %v1622, %v1980
        %v1982 = vpop.f32.mrb[0].mxu0
        %1983 = vmatprep.mubr.bf16.mxu0 0
        %1984 = vmatmul.mubr.bf16.gmra.mrb[0].mxu0 %v1288
        %v1985 = vpop.f32.mrb[0].mxu0
        %v1986 = vadd.f32 %v1627, %v1985
        %v1987 = vpop.f32.mrb[0].mxu0
        %v1988 = vpop.f32.mrb[0].mxu0
        %v1989 = vadd.f32 %v1630, %v1988
        %v1990 = vpop.f32.mrb[0].mxu0
        %1991 = vmatprep.mubr.bf16.mxu0 0
        %1992 = vmatmul.mubr.bf16.gmra.mrb[0].mxu0 %v1291
        %v1993 = vpop.f32.mrb[0].mxu0
        %v1994 = vadd.f32 %v1635, %v1993
        %v1995 = vpop.f32.mrb[0].mxu0
        %v1996 = vpop.f32.mrb[0].mxu0
        %v1997 = vadd.f32 %v1638, %v1996
        %v1998 = vpop.f32.mrb[0].mxu0
        %1999 = vmatprep.mubr.bf16.mxu0 0
        %2000 = vmatmul.mubr.bf16.gmra.mrb[0].mxu0 %v1294
        %v2001 = vpop.f32.mrb[0].mxu0
        %v2002 = vadd.f32 %v1643, %v2001
        %v2003 = vpop.f32.mrb[0].mxu0
        %v2004 = vpop.f32.mrb[0].mxu0
        %v2005 = vadd.f32 %v1646, %v2004
        %v2006 = vpop.f32.mrb[0].mxu0
        %2007 = vdwg.mxu0
        %v2009 = vsel %vm1175, %v1125, 0
        %v2012 = vsel %vm1175, %v1126, 0
        %v2015 = vsel %vm1175, %v1127, 0
        %v2018 = vsel %vm1175, %v1128, 0
        %v2021 = vsel %vm1175, %v1129, 0
        %v2024 = vsel %vm1175, %v1130, 0
        %v2027 = vsel %vm1175, %v1131, 0
        %v2030 = vsel %vm1175, %v1132, 0
        %v2033 = vsel %vm1175, %v1133, 0
        %v2036 = vsel %vm1175, %v1134, 0
        %v2039 = vsel %vm1175, %v1135, 0
        %v2042 = vsel %vm1175, %v1136, 0
        %v2045 = vsel %vm1175, %v1137, 0
        %v2048 = vsel %vm1175, %v1138, 0
        %v2051 = vsel %vm1175, %v1139, 0
        %v2054 = vsel %vm1175, %v1140, 0
        %v2057 = vsel %vm1175, %v1141, 0
        %v2060 = vsel %vm1175, %v1142, 0
        %v2063 = vsel %vm1175, %v1143, 0
        %v2066 = vsel %vm1175, %v1144, 0
        %v2069 = vsel %vm1175, %v1145, 0
        %v2072 = vsel %vm1175, %v1146, 0
        %v2075 = vsel %vm1175, %v1147, 0
        %v2078 = vsel %vm1175, %v1148, 0
        %v2081 = vsel %vm1175, %v1149, 0
        %v2084 = vsel %vm1175, %v1150, 0
        %v2087 = vsel %vm1175, %v1151, 0
        %v2090 = vsel %vm1175, %v1152, 0
        %v2093 = vsel %vm1175, %v1153, 0
        %v2096 = vsel %vm1175, %v1154, 0
        %v2099 = vsel %vm1175, %v1155, 0
        %v2102 = vsel %vm1175, %v1156, 0
        %v2105 = vsel %vm1175, %v1157, 0
        %v2108 = vsel %vm1175, %v1158, 0
        %v2111 = vsel %vm1175, %v1159, 0
        %v2114 = vsel %vm1175, %v1160, 0
        %v2117 = vsel %vm1175, %v1161, 0
        %v2120 = vsel %vm1175, %v1162, 0
        %v2123 = vsel %vm1175, %v1163, 0
        %v2126 = vsel %vm1175, %v1164, 0
        %2128 = vmatprep.subr.bf16.mxu0 0
        %2129 = vmatpush1.bf16.msra.mxu0 %v1653
        %2130 = vmatprep.subr.bf16.mxu0 0
        %2131 = vmatpush1.bf16.msra.mxu0 0
        %2132 = vmatprep.subr.bf16.mxu0 0
        %2133 = vmatpush1.bf16.msra.mxu0 0
        %2134 = vmatprep.subr.bf16.mxu0 0
        %2135 = vmatpush1.bf16.msra.mxu0 0
        %2136 = vmatprep.subr.bf16.mxu0 0
        %2137 = vmatpush1.bf16.msra.mxu0 0
        %2138 = vmatprep.subr.bf16.mxu0 0
        %2139 = vmatpush1.bf16.msra.mxu0 0
        %2140 = vmatprep.subr.bf16.mxu0 0
        %2141 = vmatpush1.bf16.msra.mxu0 0
        %2142 = vmatprep.subr.bf16.mxu0 0
        %2143 = vmatpush1.bf16.msra.mxu0 0
        %2144 = vmatprep.subr.bf16.mxu0 0
        %2145 = vmatpush1.bf16.msra.mxu0 0
        %2146 = vmatprep.subr.bf16.mxu0 0
        %2147 = vmatpush1.bf16.msra.mxu0 0
        %2148 = vmatprep.subr.bf16.mxu0 0
        %2149 = vmatpush1.bf16.msra.mxu0 0
        %2150 = vmatprep.subr.bf16.mxu0 0
        %2151 = vmatpush1.bf16.msra.mxu0 0
        %2152 = vmatprep.subr.bf16.mxu0 0
        %2153 = vmatpush1.bf16.msra.mxu0 0
        %2154 = vmatprep.subr.bf16.mxu0 0
        %2155 = vmatpush1.bf16.msra.mxu0 0
        %2156 = vmatprep.subr.bf16.mxu0 0
        %2157 = vmatpush1.bf16.msra.mxu0 0
        %2158 = vmatprep.subr.bf16.mxu0 0
        %2159 = vmatpush1.bf16.msra.mxu0 0
        %2160 = vmatprep.mubr.bf16.mxu0 0
        %2161 = vmatmul.mubr.bf16.gmra.mrb[0].mxu0 %v2009
        %v2162 = vpop.f32.mrb[0].mxu0
        %v2163 = vadd.f32 0.0, %v2162
        %v2164 = vpop.f32.mrb[0].mxu0
        %v2165 = vpop.f32.mrb[0].mxu0
        %v2166 = vadd.f32 0.0, %v2165
        %v2167 = vpop.f32.mrb[0].mxu0
        %2168 = vmatprep.mubr.bf16.mxu0 0
        %2169 = vmatmul.mubr.bf16.gmra.mrb[0].mxu0 %v2012
        %v2170 = vpop.f32.mrb[0].mxu0
        %v2171 = vadd.f32 0.0, %v2170
        %v2172 = vpop.f32.mrb[0].mxu0
        %v2173 = vpop.f32.mrb[0].mxu0
        %v2174 = vadd.f32 0.0, %v2173
        %v2175 = vpop.f32.mrb[0].mxu0
        %2176 = vmatprep.mubr.bf16.mxu0 0
        %2177 = vmatmul.mubr.bf16.gmra.mrb[0].mxu0 %v2015
        %v2178 = vpop.f32.mrb[0].mxu0
        %v2179 = vadd.f32 0.0, %v2178
        %v2180 = vpop.f32.mrb[0].mxu0
        %v2181 = vpop.f32.mrb[0].mxu0
        %v2182 = vadd.f32 0.0, %v2181
        %v2183 = vpop.f32.mrb[0].mxu0
        %2184 = vmatprep.mubr.bf16.mxu0 0
        %2185 = vmatmul.mubr.bf16.gmra.mrb[0].mxu0 %v2018
        %v2186 = vpop.f32.mrb[0].mxu0
        %v2187 = vadd.f32 0.0, %v2186
        %v2188 = vpop.f32.mrb[0].mxu0
        %v2189 = vpop.f32.mrb[0].mxu0
        %v2190 = vadd.f32 0.0, %v2189
        %v2191 = vpop.f32.mrb[0].mxu0
        %2192 = vmatprep.mubr.bf16.mxu0 0
        %2193 = vmatmul.mubr.bf16.gmra.mrb[0].mxu0 %v2021
        %v2194 = vpop.f32.mrb[0].mxu0
        %v2195 = vadd.f32 0.0, %v2194
        %v2196 = vpop.f32.mrb[0].mxu0
        %v2197 = vpop.f32.mrb[0].mxu0
        %v2198 = vadd.f32 0.0, %v2197
        %v2199 = vpop.f32.mrb[0].mxu0
        %2200 = vmatprep.mubr.bf16.mxu0 0
        %2201 = vmatmul.mubr.bf16.gmra.mrb[0].mxu0 %v2024
        %v2202 = vpop.f32.mrb[0].mxu0
        %v2203 = vadd.f32 0.0, %v2202
        %v2204 = vpop.f32.mrb[0].mxu0
        %v2205 = vpop.f32.mrb[0].mxu0
        %v2206 = vadd.f32 0.0, %v2205
        %v2207 = vpop.f32.mrb[0].mxu0
        %2208 = vmatprep.mubr.bf16.mxu0 0
        %2209 = vmatmul.mubr.bf16.gmra.mrb[0].mxu0 %v2027
        %v2210 = vpop.f32.mrb[0].mxu0
        %v2211 = vadd.f32 0.0, %v2210
        %v2212 = vpop.f32.mrb[0].mxu0
        %v2213 = vpop.f32.mrb[0].mxu0
        %v2214 = vadd.f32 0.0, %v2213
        %v2215 = vpop.f32.mrb[0].mxu0
        %2216 = vmatprep.mubr.bf16.mxu0 0
        %2217 = vmatmul.mubr.bf16.gmra.mrb[0].mxu0 %v2030
        %v2218 = vpop.f32.mrb[0].mxu0
        %v2219 = vadd.f32 0.0, %v2218
        %v2220 = vpop.f32.mrb[0].mxu0
        %v2221 = vpop.f32.mrb[0].mxu0
        %v2222 = vadd.f32 0.0, %v2221
        %v2223 = vpop.f32.mrb[0].mxu0
        %2224 = vmatprep.mubr.bf16.mxu0 0
        %2225 = vmatmul.mubr.bf16.gmra.mrb[0].mxu0 %v2033
        %v2226 = vpop.f32.mrb[0].mxu0
        %v2227 = vadd.f32 0.0, %v2226
        %v2228 = vpop.f32.mrb[0].mxu0
        %v2229 = vpop.f32.mrb[0].mxu0
        %v2230 = vadd.f32 0.0, %v2229
        %v2231 = vpop.f32.mrb[0].mxu0
        %2232 = vmatprep.mubr.bf16.mxu0 0
        %2233 = vmatmul.mubr.bf16.gmra.mrb[0].mxu0 %v2036
        %v2234 = vpop.f32.mrb[0].mxu0
        %v2235 = vadd.f32 0.0, %v2234
        %v2236 = vpop.f32.mrb[0].mxu0
        %v2237 = vpop.f32.mrb[0].mxu0
        %v2238 = vadd.f32 0.0, %v2237
        %v2239 = vpop.f32.mrb[0].mxu0
        %2240 = vmatprep.mubr.bf16.mxu0 0
        %2241 = vmatmul.mubr.bf16.gmra.mrb[0].mxu0 %v2039
        %v2242 = vpop.f32.mrb[0].mxu0
        %v2243 = vadd.f32 0.0, %v2242
        %v2244 = vpop.f32.mrb[0].mxu0
        %v2245 = vpop.f32.mrb[0].mxu0
        %v2246 = vadd.f32 0.0, %v2245
        %v2247 = vpop.f32.mrb[0].mxu0
        %2248 = vmatprep.mubr.bf16.mxu0 0
        %2249 = vmatmul.mubr.bf16.gmra.mrb[0].mxu0 %v2042
        %v2250 = vpop.f32.mrb[0].mxu0
        %v2251 = vadd.f32 0.0, %v2250
        %v2252 = vpop.f32.mrb[0].mxu0
        %v2253 = vpop.f32.mrb[0].mxu0
        %v2254 = vadd.f32 0.0, %v2253
        %v2255 = vpop.f32.mrb[0].mxu0
        %2256 = vmatprep.mubr.bf16.mxu0 0
        %2257 = vmatmul.mubr.bf16.gmra.mrb[0].mxu0 %v2045
        %v2258 = vpop.f32.mrb[0].mxu0
        %v2259 = vadd.f32 0.0, %v2258
        %v2260 = vpop.f32.mrb[0].mxu0
        %v2261 = vpop.f32.mrb[0].mxu0
        %v2262 = vadd.f32 0.0, %v2261
        %v2263 = vpop.f32.mrb[0].mxu0
        %2264 = vmatprep.mubr.bf16.mxu0 0
        %2265 = vmatmul.mubr.bf16.gmra.mrb[0].mxu0 %v2048
        %v2266 = vpop.f32.mrb[0].mxu0
        %v2267 = vadd.f32 0.0, %v2266
        %v2268 = vpop.f32.mrb[0].mxu0
        %v2269 = vpop.f32.mrb[0].mxu0
        %v2270 = vadd.f32 0.0, %v2269
        %v2271 = vpop.f32.mrb[0].mxu0
        %2272 = vmatprep.mubr.bf16.mxu0 0
        %2273 = vmatmul.mubr.bf16.gmra.mrb[0].mxu0 %v2051
        %v2274 = vpop.f32.mrb[0].mxu0
        %v2275 = vadd.f32 0.0, %v2274
        %v2276 = vpop.f32.mrb[0].mxu0
        %v2277 = vpop.f32.mrb[0].mxu0
        %v2278 = vadd.f32 0.0, %v2277
        %v2279 = vpop.f32.mrb[0].mxu0
        %2280 = vmatprep.mubr.bf16.mxu0 0
        %2281 = vmatmul.mubr.bf16.gmra.mrb[0].mxu0 %v2054
        %v2282 = vpop.f32.mrb[0].mxu0
        %v2283 = vadd.f32 0.0, %v2282
        %v2284 = vpop.f32.mrb[0].mxu0
        %v2285 = vpop.f32.mrb[0].mxu0
        %v2286 = vadd.f32 0.0, %v2285
        %v2287 = vpop.f32.mrb[0].mxu0
        %2288 = vmatprep.mubr.bf16.mxu0 0
        %2289 = vmatmul.mubr.bf16.gmra.mrb[0].mxu0 %v2057
        %v2290 = vpop.f32.mrb[0].mxu0
        %v2291 = vadd.f32 0.0, %v2290
        %v2292 = vpop.f32.mrb[0].mxu0
        %v2293 = vpop.f32.mrb[0].mxu0
        %v2294 = vadd.f32 0.0, %v2293
        %v2295 = vpop.f32.mrb[0].mxu0
        %2296 = vmatprep.mubr.bf16.mxu0 0
        %2297 = vmatmul.mubr.bf16.gmra.mrb[0].mxu0 %v2060
        %v2298 = vpop.f32.mrb[0].mxu0
        %v2299 = vadd.f32 0.0, %v2298
        %v2300 = vpop.f32.mrb[0].mxu0
        %v2301 = vpop.f32.mrb[0].mxu0
        %v2302 = vadd.f32 0.0, %v2301
        %v2303 = vpop.f32.mrb[0].mxu0
        %2304 = vmatprep.mubr.bf16.mxu0 0
        %2305 = vmatmul.mubr.bf16.gmra.mrb[0].mxu0 %v2063
        %v2306 = vpop.f32.mrb[0].mxu0
        %v2307 = vadd.f32 0.0, %v2306
        %v2308 = vpop.f32.mrb[0].mxu0
        %v2309 = vpop.f32.mrb[0].mxu0
        %v2310 = vadd.f32 0.0, %v2309
        %v2311 = vpop.f32.mrb[0].mxu0
        %2312 = vmatprep.mubr.bf16.mxu0 0
        %2313 = vmatmul.mubr.bf16.gmra.mrb[0].mxu0 %v2066
        %v2314 = vpop.f32.mrb[0].mxu0
        %v2315 = vadd.f32 0.0, %v2314
        %v2316 = vpop.f32.mrb[0].mxu0
        %v2317 = vpop.f32.mrb[0].mxu0
        %v2318 = vadd.f32 0.0, %v2317
        %v2319 = vpop.f32.mrb[0].mxu0
        %2320 = vmatprep.mubr.bf16.mxu0 0
        %2321 = vmatmul.mubr.bf16.gmra.mrb[0].mxu0 %v2069
        %v2322 = vpop.f32.mrb[0].mxu0
        %v2323 = vadd.f32 0.0, %v2322
        %v2324 = vpop.f32.mrb[0].mxu0
        %v2325 = vpop.f32.mrb[0].mxu0
        %v2326 = vadd.f32 0.0, %v2325
        %v2327 = vpop.f32.mrb[0].mxu0
        %2328 = vmatprep.mubr.bf16.mxu0 0
        %2329 = vmatmul.mubr.bf16.gmra.mrb[0].mxu0 %v2072
        %v2330 = vpop.f32.mrb[0].mxu0
        %v2331 = vadd.f32 0.0, %v2330
        %v2332 = vpop.f32.mrb[0].mxu0
        %v2333 = vpop.f32.mrb[0].mxu0
        %v2334 = vadd.f32 0.0, %v2333
        %v2335 = vpop.f32.mrb[0].mxu0
        %2336 = vmatprep.mubr.bf16.mxu0 0
        %2337 = vmatmul.mubr.bf16.gmra.mrb[0].mxu0 %v2075
        %v2338 = vpop.f32.mrb[0].mxu0
        %v2339 = vadd.f32 0.0, %v2338
        %v2340 = vpop.f32.mrb[0].mxu0
        %v2341 = vpop.f32.mrb[0].mxu0
        %v2342 = vadd.f32 0.0, %v2341
        %v2343 = vpop.f32.mrb[0].mxu0
        %2344 = vmatprep.mubr.bf16.mxu0 0
        %2345 = vmatmul.mubr.bf16.gmra.mrb[0].mxu0 %v2078
        %v2346 = vpop.f32.mrb[0].mxu0
        %v2347 = vadd.f32 0.0, %v2346
        %v2348 = vpop.f32.mrb[0].mxu0
        %v2349 = vpop.f32.mrb[0].mxu0
        %v2350 = vadd.f32 0.0, %v2349
        %v2351 = vpop.f32.mrb[0].mxu0
        %2352 = vmatprep.mubr.bf16.mxu0 0
        %2353 = vmatmul.mubr.bf16.gmra.mrb[0].mxu0 %v2081
        %v2354 = vpop.f32.mrb[0].mxu0
        %v2355 = vadd.f32 0.0, %v2354
        %v2356 = vpop.f32.mrb[0].mxu0
        %v2357 = vpop.f32.mrb[0].mxu0
        %v2358 = vadd.f32 0.0, %v2357
        %v2359 = vpop.f32.mrb[0].mxu0
        %2360 = vmatprep.mubr.bf16.mxu0 0
        %2361 = vmatmul.mubr.bf16.gmra.mrb[0].mxu0 %v2084
        %v2362 = vpop.f32.mrb[0].mxu0
        %v2363 = vadd.f32 0.0, %v2362
        %v2364 = vpop.f32.mrb[0].mxu0
        %v2365 = vpop.f32.mrb[0].mxu0
        %v2366 = vadd.f32 0.0, %v2365
        %v2367 = vpop.f32.mrb[0].mxu0
        %2368 = vmatprep.mubr.bf16.mxu0 0
        %2369 = vmatmul.mubr.bf16.gmra.mrb[0].mxu0 %v2087
        %v2370 = vpop.f32.mrb[0].mxu0
        %v2371 = vadd.f32 0.0, %v2370
        %v2372 = vpop.f32.mrb[0].mxu0
        %v2373 = vpop.f32.mrb[0].mxu0
        %v2374 = vadd.f32 0.0, %v2373
        %v2375 = vpop.f32.mrb[0].mxu0
        %2376 = vmatprep.mubr.bf16.mxu0 0
        %2377 = vmatmul.mubr.bf16.gmra.mrb[0].mxu0 %v2090
        %v2378 = vpop.f32.mrb[0].mxu0
        %v2379 = vadd.f32 0.0, %v2378
        %v2380 = vpop.f32.mrb[0].mxu0
        %v2381 = vpop.f32.mrb[0].mxu0
        %v2382 = vadd.f32 0.0, %v2381
        %v2383 = vpop.f32.mrb[0].mxu0
        %2384 = vmatprep.mubr.bf16.mxu0 0
        %2385 = vmatmul.mubr.bf16.gmra.mrb[0].mxu0 %v2093
        %v2386 = vpop.f32.mrb[0].mxu0
        %v2387 = vadd.f32 0.0, %v2386
        %v2388 = vpop.f32.mrb[0].mxu0
        %v2389 = vpop.f32.mrb[0].mxu0
        %v2390 = vadd.f32 0.0, %v2389
        %v2391 = vpop.f32.mrb[0].mxu0
        %2392 = vmatprep.mubr.bf16.mxu0 0
        %2393 = vmatmul.mubr.bf16.gmra.mrb[0].mxu0 %v2096
        %v2394 = vpop.f32.mrb[0].mxu0
        %v2395 = vadd.f32 0.0, %v2394
        %v2396 = vpop.f32.mrb[0].mxu0
        %v2397 = vpop.f32.mrb[0].mxu0
        %v2398 = vadd.f32 0.0, %v2397
        %v2399 = vpop.f32.mrb[0].mxu0
        %2400 = vmatprep.mubr.bf16.mxu0 0
        %2401 = vmatmul.mubr.bf16.gmra.mrb[0].mxu0 %v2099
        %v2402 = vpop.f32.mrb[0].mxu0
        %v2403 = vadd.f32 0.0, %v2402
        %v2404 = vpop.f32.mrb[0].mxu0
        %v2405 = vpop.f32.mrb[0].mxu0
        %v2406 = vadd.f32 0.0, %v2405
        %v2407 = vpop.f32.mrb[0].mxu0
        %2408 = vmatprep.mubr.bf16.mxu0 0
        %2409 = vmatmul.mubr.bf16.gmra.mrb[0].mxu0 %v2102
        %v2410 = vpop.f32.mrb[0].mxu0
        %v2411 = vadd.f32 0.0, %v2410
        %v2412 = vpop.f32.mrb[0].mxu0
        %v2413 = vpop.f32.mrb[0].mxu0
        %v2414 = vadd.f32 0.0, %v2413
        %v2415 = vpop.f32.mrb[0].mxu0
        %2416 = vmatprep.mubr.bf16.mxu0 0
        %2417 = vmatmul.mubr.bf16.gmra.mrb[0].mxu0 %v2105
        %v2418 = vpop.f32.mrb[0].mxu0
        %v2419 = vadd.f32 0.0, %v2418
        %v2420 = vpop.f32.mrb[0].mxu0
        %v2421 = vpop.f32.mrb[0].mxu0
        %v2422 = vadd.f32 0.0, %v2421
        %v2423 = vpop.f32.mrb[0].mxu0
        %2424 = vmatprep.mubr.bf16.mxu0 0
        %2425 = vmatmul.mubr.bf16.gmra.mrb[0].mxu0 %v2108
        %v2426 = vpop.f32.mrb[0].mxu0
        %v2427 = vadd.f32 0.0, %v2426
        %v2428 = vpop.f32.mrb[0].mxu0
        %v2429 = vpop.f32.mrb[0].mxu0
        %v2430 = vadd.f32 0.0, %v2429
        %v2431 = vpop.f32.mrb[0].mxu0
        %2432 = vmatprep.mubr.bf16.mxu0 0
        %2433 = vmatmul.mubr.bf16.gmra.mrb[0].mxu0 %v2111
        %v2434 = vpop.f32.mrb[0].mxu0
        %v2435 = vadd.f32 0.0, %v2434
        %v2436 = vpop.f32.mrb[0].mxu0
        %v2437 = vpop.f32.mrb[0].mxu0
        %v2438 = vadd.f32 0.0, %v2437
        %v2439 = vpop.f32.mrb[0].mxu0
        %2440 = vmatprep.mubr.bf16.mxu0 0
        %2441 = vmatmul.mubr.bf16.gmra.mrb[0].mxu0 %v2114
        %v2442 = vpop.f32.mrb[0].mxu0
        %v2443 = vadd.f32 0.0, %v2442
        %v2444 = vpop.f32.mrb[0].mxu0
        %v2445 = vpop.f32.mrb[0].mxu0
        %v2446 = vadd.f32 0.0, %v2445
        %v2447 = vpop.f32.mrb[0].mxu0
        %2448 = vmatprep.mubr.bf16.mxu0 0
        %2449 = vmatmul.mubr.bf16.gmra.mrb[0].mxu0 %v2117
        %v2450 = vpop.f32.mrb[0].mxu0
        %v2451 = vadd.f32 0.0, %v2450
        %v2452 = vpop.f32.mrb[0].mxu0
        %v2453 = vpop.f32.mrb[0].mxu0
        %v2454 = vadd.f32 0.0, %v2453
        %v2455 = vpop.f32.mrb[0].mxu0
        %2456 = vmatprep.mubr.bf16.mxu0 0
        %2457 = vmatmul.mubr.bf16.gmra.mrb[0].mxu0 %v2120
        %v2458 = vpop.f32.mrb[0].mxu0
        %v2459 = vadd.f32 0.0, %v2458
        %v2460 = vpop.f32.mrb[0].mxu0
        %v2461 = vpop.f32.mrb[0].mxu0
        %v2462 = vadd.f32 0.0, %v2461
        %v2463 = vpop.f32.mrb[0].mxu0
        %2464 = vmatprep.mubr.bf16.mxu0 0
        %2465 = vmatmul.mubr.bf16.gmra.mrb[0].mxu0 %v2123
        %v2466 = vpop.f32.mrb[0].mxu0
        %v2467 = vadd.f32 0.0, %v2466
        %v2468 = vpop.f32.mrb[0].mxu0
        %v2469 = vpop.f32.mrb[0].mxu0
        %v2470 = vadd.f32 0.0, %v2469
        %v2471 = vpop.f32.mrb[0].mxu0
        %2472 = vmatprep.mubr.bf16.mxu0 0
        %2473 = vmatmul.mubr.bf16.gmra.mrb[0].mxu0 %v2126
        %v2474 = vpop.f32.mrb[0].mxu0
        %v2475 = vadd.f32 0.0, %v2474
        %v2476 = vpop.f32.mrb[0].mxu0
        %v2477 = vpop.f32.mrb[0].mxu0
        %v2478 = vadd.f32 0.0, %v2477
        %v2479 = vpop.f32.mrb[0].mxu0
        %2480 = vdwg.mxu0
        %v2481 = vadd.f32 %v1690, %v2163
        %v2482 = vadd.f32 %v1693, %v2166
        %v2483 = vadd.f32 %v1698, %v2171
        %v2484 = vadd.f32 %v1701, %v2174
        %v2485 = vadd.f32 %v1706, %v2179
        %v2486 = vadd.f32 %v1709, %v2182
        %v2487 = vadd.f32 %v1714, %v2187
        %v2488 = vadd.f32 %v1717, %v2190
        %v2489 = vadd.f32 %v1722, %v2195
        %v2490 = vadd.f32 %v1725, %v2198
        %v2491 = vadd.f32 %v1730, %v2203
        %v2492 = vadd.f32 %v1733, %v2206
        %v2493 = vadd.f32 %v1738, %v2211
        %v2494 = vadd.f32 %v1741, %v2214
        %v2495 = vadd.f32 %v1746, %v2219
        %v2496 = vadd.f32 %v1749, %v2222
        %v2497 = vadd.f32 %v1754, %v2227
        %v2498 = vadd.f32 %v1757, %v2230
        %v2499 = vadd.f32 %v1762, %v2235
        %v2500 = vadd.f32 %v1765, %v2238
        %v2501 = vadd.f32 %v1770, %v2243
        %v2502 = vadd.f32 %v1773, %v2246
        %v2503 = vadd.f32 %v1778, %v2251
        %v2504 = vadd.f32 %v1781, %v2254
        %v2505 = vadd.f32 %v1786, %v2259
        %v2506 = vadd.f32 %v1789, %v2262
        %v2507 = vadd.f32 %v1794, %v2267
        %v2508 = vadd.f32 %v1797, %v2270
        %v2509 = vadd.f32 %v1802, %v2275
        %v2510 = vadd.f32 %v1805, %v2278
        %v2511 = vadd.f32 %v1810, %v2283
        %v2512 = vadd.f32 %v1813, %v2286
        %v2513 = vadd.f32 %v1818, %v2291
        %v2514 = vadd.f32 %v1821, %v2294
        %v2515 = vadd.f32 %v1826, %v2299
        %v2516 = vadd.f32 %v1829, %v2302
        %v2517 = vadd.f32 %v1834, %v2307
        %v2518 = vadd.f32 %v1837, %v2310
        %v2519 = vadd.f32 %v1842, %v2315
        %v2520 = vadd.f32 %v1845, %v2318
        %v2521 = vadd.f32 %v1850, %v2323
        %v2522 = vadd.f32 %v1853, %v2326
        %v2523 = vadd.f32 %v1858, %v2331
        %v2524 = vadd.f32 %v1861, %v2334
        %v2525 = vadd.f32 %v1866, %v2339
        %v2526 = vadd.f32 %v1869, %v2342
        %v2527 = vadd.f32 %v1874, %v2347
        %v2528 = vadd.f32 %v1877, %v2350
        %v2529 = vadd.f32 %v1882, %v2355
        %v2530 = vadd.f32 %v1885, %v2358
        %v2531 = vadd.f32 %v1890, %v2363
        %v2532 = vadd.f32 %v1893, %v2366
        %v2533 = vadd.f32 %v1898, %v2371
        %v2534 = vadd.f32 %v1901, %v2374
        %v2535 = vadd.f32 %v1906, %v2379
        %v2536 = vadd.f32 %v1909, %v2382
        %v2537 = vadd.f32 %v1914, %v2387
        %v2538 = vadd.f32 %v1917, %v2390
        %v2539 = vadd.f32 %v1922, %v2395
        %v2540 = vadd.f32 %v1925, %v2398
        %v2541 = vadd.f32 %v1930, %v2403
        %v2542 = vadd.f32 %v1933, %v2406
        %v2543 = vadd.f32 %v1938, %v2411
        %v2544 = vadd.f32 %v1941, %v2414
        %v2545 = vadd.f32 %v1946, %v2419
        %v2546 = vadd.f32 %v1949, %v2422
        %v2547 = vadd.f32 %v1954, %v2427
        %v2548 = vadd.f32 %v1957, %v2430
        %v2549 = vadd.f32 %v1962, %v2435
        %v2550 = vadd.f32 %v1965, %v2438
        %v2551 = vadd.f32 %v1970, %v2443
        %v2552 = vadd.f32 %v1973, %v2446
        %v2553 = vadd.f32 %v1978, %v2451
        %v2554 = vadd.f32 %v1981, %v2454
        %v2555 = vadd.f32 %v1986, %v2459
        %v2556 = vadd.f32 %v1989, %v2462
        %v2557 = vadd.f32 %v1994, %v2467
        %v2558 = vadd.f32 %v1997, %v2470
        %v2559 = vadd.f32 %v2002, %v2475
        %v2560 = vadd.f32 %v2005, %v2478
        %v2561 = vmul.f32 %v2481, %v2481
        %v2562 = vmul.f32 %v2482, %v2482
        %v2563 = vmul.f32 %v2483, %v2483
        %v2564 = vmul.f32 %v2484, %v2484
        %v2565 = vmul.f32 %v2485, %v2485
        %v2566 = vmul.f32 %v2486, %v2486
        %v2567 = vmul.f32 %v2487, %v2487
        %v2568 = vmul.f32 %v2488, %v2488
        %v2569 = vmul.f32 %v2489, %v2489
        %v2570 = vmul.f32 %v2490, %v2490
        %v2571 = vmul.f32 %v2491, %v2491
        %v2572 = vmul.f32 %v2492, %v2492
        %v2573 = vmul.f32 %v2493, %v2493
        %v2574 = vmul.f32 %v2494, %v2494
        %v2575 = vmul.f32 %v2495, %v2495
        %v2576 = vmul.f32 %v2496, %v2496
        %v2577 = vmul.f32 %v2497, %v2497
        %v2578 = vmul.f32 %v2498, %v2498
        %v2579 = vmul.f32 %v2499, %v2499
        %v2580 = vmul.f32 %v2500, %v2500
        %v2581 = vmul.f32 %v2501, %v2501
        %v2582 = vmul.f32 %v2502, %v2502
        %v2583 = vmul.f32 %v2503, %v2503
        %v2584 = vmul.f32 %v2504, %v2504
        %v2585 = vmul.f32 %v2505, %v2505
        %v2586 = vmul.f32 %v2506, %v2506
        %v2587 = vmul.f32 %v2507, %v2507
        %v2588 = vmul.f32 %v2508, %v2508
        %v2589 = vmul.f32 %v2509, %v2509
        %v2590 = vmul.f32 %v2510, %v2510
        %v2591 = vmul.f32 %v2511, %v2511
        %v2592 = vmul.f32 %v2512, %v2512
        %v2593 = vmul.f32 %v2481, %v2497
        %v2594 = vmul.f32 %v2482, %v2498
        %v2595 = vmul.f32 %v2483, %v2499
        %v2596 = vmul.f32 %v2484, %v2500
        %v2597 = vmul.f32 %v2485, %v2501
        %v2598 = vmul.f32 %v2486, %v2502
        %v2599 = vmul.f32 %v2487, %v2503
        %v2600 = vmul.f32 %v2488, %v2504
        %v2601 = vmul.f32 %v2489, %v2505
        %v2602 = vmul.f32 %v2490, %v2506
        %v2603 = vmul.f32 %v2491, %v2507
        %v2604 = vmul.f32 %v2492, %v2508
        %v2605 = vmul.f32 %v2493, %v2509
        %v2606 = vmul.f32 %v2494, %v2510
        %v2607 = vmul.f32 %v2495, %v2511
        %v2608 = vmul.f32 %v2496, %v2512
        %v2609 = vsub.f32 %v2513, %v2561
        %v2610 = vsub.f32 %v2514, %v2562
        %v2611 = vsub.f32 %v2515, %v2563
        %v2612 = vsub.f32 %v2516, %v2564
        %v2613 = vsub.f32 %v2517, %v2565
        %v2614 = vsub.f32 %v2518, %v2566
        %v2615 = vsub.f32 %v2519, %v2567
        %v2616 = vsub.f32 %v2520, %v2568
        %v2617 = vsub.f32 %v2521, %v2569
        %v2618 = vsub.f32 %v2522, %v2570
        %v2619 = vsub.f32 %v2523, %v2571
        %v2620 = vsub.f32 %v2524, %v2572
        %v2621 = vsub.f32 %v2525, %v2573
        %v2622 = vsub.f32 %v2526, %v2574
        %v2623 = vsub.f32 %v2527, %v2575
        %v2624 = vsub.f32 %v2528, %v2576
        %v2625 = vsub.f32 %v2529, %v2577
        %v2626 = vsub.f32 %v2530, %v2578
        %v2627 = vsub.f32 %v2531, %v2579
        %v2628 = vsub.f32 %v2532, %v2580
        %v2629 = vsub.f32 %v2533, %v2581
        %v2630 = vsub.f32 %v2534, %v2582
        %v2631 = vsub.f32 %v2535, %v2583
        %v2632 = vsub.f32 %v2536, %v2584
        %v2633 = vsub.f32 %v2537, %v2585
        %v2634 = vsub.f32 %v2538, %v2586
        %v2635 = vsub.f32 %v2539, %v2587
        %v2636 = vsub.f32 %v2540, %v2588
        %v2637 = vsub.f32 %v2541, %v2589
        %v2638 = vsub.f32 %v2542, %v2590
        %v2639 = vsub.f32 %v2543, %v2591
        %v2640 = vsub.f32 %v2544, %v2592
        %v2641 = vsub.f32 %v2545, %v2593
        %v2642 = vsub.f32 %v2546, %v2594
        %v2643 = vsub.f32 %v2547, %v2595
        %v2644 = vsub.f32 %v2548, %v2596
        %v2645 = vsub.f32 %v2549, %v2597
        %v2646 = vsub.f32 %v2550, %v2598
        %v2647 = vsub.f32 %v2551, %v2599
        %v2648 = vsub.f32 %v2552, %v2600
        %v2649 = vsub.f32 %v2553, %v2601
        %v2650 = vsub.f32 %v2554, %v2602
        %v2651 = vsub.f32 %v2555, %v2603
        %v2652 = vsub.f32 %v2556, %v2604
        %v2653 = vsub.f32 %v2557, %v2605
        %v2654 = vsub.f32 %v2558, %v2606
        %v2655 = vsub.f32 %v2559, %v2607
        %v2656 = vsub.f32 %v2560, %v2608
        %v2657 = vmul.f32 %v2593, 2.0
        %v2658 = vmul.f32 %v2594, 2.0
        %v2659 = vmul.f32 %v2595, 2.0
        %v2660 = vmul.f32 %v2596, 2.0
        %v2661 = vmul.f32 %v2597, 2.0
        %v2662 = vmul.f32 %v2598, 2.0
        %v2663 = vmul.f32 %v2599, 2.0
        %v2664 = vmul.f32 %v2600, 2.0
        %v2665 = vmul.f32 %v2601, 2.0
        %v2666 = vmul.f32 %v2602, 2.0
        %v2667 = vmul.f32 %v2603, 2.0
        %v2668 = vmul.f32 %v2604, 2.0
        %v2669 = vmul.f32 %v2605, 2.0
        %v2670 = vmul.f32 %v2606, 2.0
        %v2671 = vmul.f32 %v2607, 2.0
        %v2672 = vmul.f32 %v2608, 2.0
        %v2673 = vadd.f32 %v2657, 0.0001
        %v2674 = vadd.f32 %v2658, 0.0001
        %v2675 = vadd.f32 %v2659, 0.0001
        %v2676 = vadd.f32 %v2660, 0.0001
        %v2677 = vadd.f32 %v2661, 0.0001
        %v2678 = vadd.f32 %v2662, 0.0001
        %v2679 = vadd.f32 %v2663, 0.0001
        %v2680 = vadd.f32 %v2664, 0.0001
        %v2681 = vadd.f32 %v2665, 0.0001
        %v2682 = vadd.f32 %v2666, 0.0001
        %v2683 = vadd.f32 %v2667, 0.0001
        %v2684 = vadd.f32 %v2668, 0.0001
        %v2685 = vadd.f32 %v2669, 0.0001
        %v2686 = vadd.f32 %v2670, 0.0001
        %v2687 = vadd.f32 %v2671, 0.0001
        %v2688 = vadd.f32 %v2672, 0.0001
        %v2689 = vmul.f32 %v2641, 2.0
        %v2690 = vmul.f32 %v2642, 2.0
        %v2691 = vmul.f32 %v2643, 2.0
        %v2692 = vmul.f32 %v2644, 2.0
        %v2693 = vmul.f32 %v2645, 2.0
        %v2694 = vmul.f32 %v2646, 2.0
        %v2695 = vmul.f32 %v2647, 2.0
        %v2696 = vmul.f32 %v2648, 2.0
        %v2697 = vmul.f32 %v2649, 2.0
        %v2698 = vmul.f32 %v2650, 2.0
        %v2699 = vmul.f32 %v2651, 2.0
        %v2700 = vmul.f32 %v2652, 2.0
        %v2701 = vmul.f32 %v2653, 2.0
        %v2702 = vmul.f32 %v2654, 2.0
        %v2703 = vmul.f32 %v2655, 2.0
        %v2704 = vmul.f32 %v2656, 2.0
        %v2705 = vadd.f32 %v2689, 0.0009
        %v2706 = vadd.f32 %v2690, 0.0009
        %v2707 = vadd.f32 %v2691, 0.0009
        %v2708 = vadd.f32 %v2692, 0.0009
        %v2709 = vadd.f32 %v2693, 0.0009
        %v2710 = vadd.f32 %v2694, 0.0009
        %v2711 = vadd.f32 %v2695, 0.0009
        %v2712 = vadd.f32 %v2696, 0.0009
        %v2713 = vadd.f32 %v2697, 0.0009
        %v2714 = vadd.f32 %v2698, 0.0009
        %v2715 = vadd.f32 %v2699, 0.0009
        %v2716 = vadd.f32 %v2700, 0.0009
        %v2717 = vadd.f32 %v2701, 0.0009
        %v2718 = vadd.f32 %v2702, 0.0009
        %v2719 = vadd.f32 %v2703, 0.0009
        %v2720 = vadd.f32 %v2704, 0.0009
        %v2721 = vmul.f32 %v2673, %v2705
        %v2722 = vmul.f32 %v2674, %v2706
        %v2723 = vmul.f32 %v2675, %v2707
        %v2724 = vmul.f32 %v2676, %v2708
        %v2725 = vmul.f32 %v2677, %v2709
        %v2726 = vmul.f32 %v2678, %v2710
        %v2727 = vmul.f32 %v2679, %v2711
        %v2728 = vmul.f32 %v2680, %v2712
        %v2729 = vmul.f32 %v2681, %v2713
        %v2730 = vmul.f32 %v2682, %v2714
        %v2731 = vmul.f32 %v2683, %v2715
        %v2732 = vmul.f32 %v2684, %v2716
        %v2733 = vmul.f32 %v2685, %v2717
        %v2734 = vmul.f32 %v2686, %v2718
        %v2735 = vmul.f32 %v2687, %v2719
        %v2736 = vmul.f32 %v2688, %v2720
        %v2737 = vadd.f32 %v2561, %v2577
        %v2738 = vadd.f32 %v2562, %v2578
        %v2739 = vadd.f32 %v2563, %v2579
        %v2740 = vadd.f32 %v2564, %v2580
        %v2741 = vadd.f32 %v2565, %v2581
        %v2742 = vadd.f32 %v2566, %v2582
        %v2743 = vadd.f32 %v2567, %v2583
        %v2744 = vadd.f32 %v2568, %v2584
        %v2745 = vadd.f32 %v2569, %v2585
        %v2746 = vadd.f32 %v2570, %v2586
        %v2747 = vadd.f32 %v2571, %v2587
        %v2748 = vadd.f32 %v2572, %v2588
        %v2749 = vadd.f32 %v2573, %v2589
        %v2750 = vadd.f32 %v2574, %v2590
        %v2751 = vadd.f32 %v2575, %v2591
        %v2752 = vadd.f32 %v2576, %v2592
        %v2753 = vadd.f32 %v2737, 0.0001
        %v2754 = vadd.f32 %v2738, 0.0001
        %v2755 = vadd.f32 %v2739, 0.0001
        %v2756 = vadd.f32 %v2740, 0.0001
        %v2757 = vadd.f32 %v2741, 0.0001
        %v2758 = vadd.f32 %v2742, 0.0001
        %v2759 = vadd.f32 %v2743, 0.0001
        %v2760 = vadd.f32 %v2744, 0.0001
        %v2761 = vadd.f32 %v2745, 0.0001
        %v2762 = vadd.f32 %v2746, 0.0001
        %v2763 = vadd.f32 %v2747, 0.0001
        %v2764 = vadd.f32 %v2748, 0.0001
        %v2765 = vadd.f32 %v2749, 0.0001
        %v2766 = vadd.f32 %v2750, 0.0001
        %v2767 = vadd.f32 %v2751, 0.0001
        %v2768 = vadd.f32 %v2752, 0.0001
        %v2769 = vadd.f32 %v2609, %v2625
        %v2770 = vadd.f32 %v2610, %v2626
        %v2771 = vadd.f32 %v2611, %v2627
        %v2772 = vadd.f32 %v2612, %v2628
        %v2773 = vadd.f32 %v2613, %v2629
        %v2774 = vadd.f32 %v2614, %v2630
        %v2775 = vadd.f32 %v2615, %v2631
        %v2776 = vadd.f32 %v2616, %v2632
        %v2777 = vadd.f32 %v2617, %v2633
        %v2778 = vadd.f32 %v2618, %v2634
        %v2779 = vadd.f32 %v2619, %v2635
        %v2780 = vadd.f32 %v2620, %v2636
        %v2781 = vadd.f32 %v2621, %v2637
        %v2782 = vadd.f32 %v2622, %v2638
        %v2783 = vadd.f32 %v2623, %v2639
        %v2784 = vadd.f32 %v2624, %v2640
        %v2785 = vadd.f32 %v2769, 0.0009
        %v2786 = vadd.f32 %v2770, 0.0009
        %v2787 = vadd.f32 %v2771, 0.0009
        %v2788 = vadd.f32 %v2772, 0.0009
        %v2789 = vadd.f32 %v2773, 0.0009
        %v2790 = vadd.f32 %v2774, 0.0009
        %v2791 = vadd.f32 %v2775, 0.0009
        %v2792 = vadd.f32 %v2776, 0.0009
        %v2793 = vadd.f32 %v2777, 0.0009
        %v2794 = vadd.f32 %v2778, 0.0009
        %v2795 = vadd.f32 %v2779, 0.0009
        %v2796 = vadd.f32 %v2780, 0.0009
        %v2797 = vadd.f32 %v2781, 0.0009
        %v2798 = vadd.f32 %v2782, 0.0009
        %v2799 = vadd.f32 %v2783, 0.0009
        %v2800 = vadd.f32 %v2784, 0.0009
        %v2801 = vmul.f32 %v2753, %v2785
        %v2802 = vmul.f32 %v2754, %v2786
        %v2803 = vmul.f32 %v2755, %v2787
        %v2804 = vmul.f32 %v2756, %v2788
        %v2805 = vmul.f32 %v2757, %v2789
        %v2806 = vmul.f32 %v2758, %v2790
        %v2807 = vmul.f32 %v2759, %v2791
        %v2808 = vmul.f32 %v2760, %v2792
        %v2809 = vmul.f32 %v2761, %v2793
        %v2810 = vmul.f32 %v2762, %v2794
        %v2811 = vmul.f32 %v2763, %v2795
        %v2812 = vmul.f32 %v2764, %v2796
        %v2813 = vmul.f32 %v2765, %v2797
        %v2814 = vmul.f32 %v2766, %v2798
        %v2815 = vmul.f32 %v2767, %v2799
        %v2816 = vmul.f32 %v2768, %v2800
        %v2817 = vrcp.pop %v2801
        %v2818 = vmul.f32 %v2721, %v2817
        %v2819 = vrcp.pop %v2802
        %v2820 = vmul.f32 %v2722, %v2819
        %v2821 = vrcp.pop %v2803
        %v2822 = vmul.f32 %v2723, %v2821
        %v2823 = vrcp.pop %v2804
        %v2824 = vmul.f32 %v2724, %v2823
        %v2825 = vrcp.pop %v2805
        %v2826 = vmul.f32 %v2725, %v2825
        %v2827 = vrcp.pop %v2806
        %v2828 = vmul.f32 %v2726, %v2827
        %v2829 = vrcp.pop %v2807
        %v2830 = vmul.f32 %v2727, %v2829
        %v2831 = vrcp.pop %v2808
        %v2832 = vmul.f32 %v2728, %v2831
        %v2833 = vrcp.pop %v2809
        %v2834 = vmul.f32 %v2729, %v2833
        %v2835 = vrcp.pop %v2810
        %v2836 = vmul.f32 %v2730, %v2835
        %v2837 = vrcp.pop %v2811
        %v2838 = vmul.f32 %v2731, %v2837
        %v2839 = vrcp.pop %v2812
        %v2840 = vmul.f32 %v2732, %v2839
        %v2841 = vrcp.pop %v2813
        %v2842 = vmul.f32 %v2733, %v2841
        %v2843 = vrcp.pop %v2814
        %v2844 = vmul.f32 %v2734, %v2843
        %v2845 = vrcp.pop %v2815
        %v2846 = vmul.f32 %v2735, %v2845
        %v2847 = vrcp.pop %v2816
        %v2848 = vmul.f32 %v2736, %v2847
        %v2849 = vlaneseq
        %v2850 = vshrl.u32 %v2849, 7
        %v2851 = vadd.s32 %v2850, 8
        %v2852 = vadd.s32 %v2850, 16
        %v2853 = vadd.s32 %v2850, 24
        %v2854 = vadd.s32 %v2850, 32
        %v2855 = vadd.s32 %v2850, 40
        %v2856 = vadd.s32 %v2850, 48
        %v2857 = vadd.s32 %v2850, 56
        %v2858 = vadd.s32 %v2850, 64
        %v2859 = vadd.s32 %v2850, 72
        %v2860 = vadd.s32 %v2850, 80
        %v2861 = vadd.s32 %v2850, 88
        %v2862 = vadd.s32 %v2850, 96
        %v2863 = vadd.s32 %v2850, 104
        %v2864 = vadd.s32 %v2850, 112
        %v2865 = vadd.s32 %v2850, 120
        %v2866 = vlaneseq
        %v2867 = vand.u32 %v2866, 127
        %vm2868 = vcmp.lt.s32.totalorder %v2850, 16
        %vm2869 = vcmp.lt.s32.totalorder %v2851, 16
        %vm2870 = vcmp.lt.s32.totalorder %v2852, 16
        %vm2871 = vcmp.lt.s32.totalorder %v2853, 16
        %vm2872 = vcmp.lt.s32.totalorder %v2854, 16
        %vm2873 = vcmp.lt.s32.totalorder %v2855, 16
        %vm2874 = vcmp.lt.s32.totalorder %v2856, 16
        %vm2875 = vcmp.lt.s32.totalorder %v2857, 16
        %vm2876 = vcmp.lt.s32.totalorder %v2858, 16
        %vm2877 = vcmp.lt.s32.totalorder %v2859, 16
        %vm2878 = vcmp.lt.s32.totalorder %v2860, 16
        %vm2879 = vcmp.lt.s32.totalorder %v2861, 16
        %vm2880 = vcmp.lt.s32.totalorder %v2862, 16
        %vm2881 = vcmp.lt.s32.totalorder %v2863, 16
        %vm2882 = vcmp.lt.s32.totalorder %v2864, 16
        %vm2883 = vcmp.lt.s32.totalorder %v2865, 16
        %vm2884 = vcmp.lt.s32.totalorder %v2867, 16
        %vm2885 = vmand %vm2868, %vm2884
        %vm2886 = vmand %vm2869, %vm2884
        %vm2887 = vmand %vm2870, %vm2884
        %vm2888 = vmand %vm2871, %vm2884
        %vm2889 = vmand %vm2872, %vm2884
        %vm2890 = vmand %vm2873, %vm2884
        %vm2891 = vmand %vm2874, %vm2884
        %vm2892 = vmand %vm2875, %vm2884
        %vm2893 = vmand %vm2876, %vm2884
        %vm2894 = vmand %vm2877, %vm2884
        %vm2895 = vmand %vm2878, %vm2884
        %vm2896 = vmand %vm2879, %vm2884
        %vm2897 = vmand %vm2880, %vm2884
        %vm2898 = vmand %vm2881, %vm2884
        %vm2899 = vmand %vm2882, %vm2884
        %vm2900 = vmand %vm2883, %vm2884
        %v2901 = vsel %vm2885, %v2818, 0.0
        %v2902 = vsel %vm2886, %v2820, 0.0
        %v2903 = vsel %vm2887, %v2822, 0.0
        %v2904 = vsel %vm2888, %v2824, 0.0
        %v2905 = vsel %vm2889, %v2826, 0.0
        %v2906 = vsel %vm2890, %v2828, 0.0
        %v2907 = vsel %vm2891, %v2830, 0.0
        %v2908 = vsel %vm2892, %v2832, 0.0
        %v2909 = vsel %vm2893, %v2834, 0.0
        %v2910 = vsel %vm2894, %v2836, 0.0
        %v2911 = vsel %vm2895, %v2838, 0.0
        %v2912 = vsel %vm2896, %v2840, 0.0
        %v2913 = vsel %vm2897, %v2842, 0.0
        %v2914 = vsel %vm2898, %v2844, 0.0
        %v2915 = vsel %vm2899, %v2846, 0.0
        %v2916 = vsel %vm2900, %v2848, 0.0
        %v2917 = vsub.f32 %v368, %v370
        %v2918 = vsub.f32 %v369, %v371
        %v2919 = vsel %vm1175, %v2901, 0.0
        %v2920 = vsel %vm1175, %v2902, 0.0
        %v2921 = vadd.f32 %v2919, %v2920
        %v2922 = vsel %vm1175, %v2903, 0.0
        %v2923 = vadd.f32 %v2921, %v2922
        %v2924 = vsel %vm1175, %v2904, 0.0
        %v2925 = vadd.f32 %v2923, %v2924
        %v2926 = vsel %vm1175, %v2905, 0.0
        %v2927 = vadd.f32 %v2925, %v2926
        %v2928 = vsel %vm1175, %v2906, 0.0
        %v2929 = vadd.f32 %v2927, %v2928
        %v2930 = vsel %vm1175, %v2907, 0.0
        %v2931 = vadd.f32 %v2929, %v2930
        %v2932 = vsel %vm1175, %v2908, 0.0
        %v2933 = vadd.f32 %v2931, %v2932
        %v2934 = vsel %vm1175, %v2909, 0.0
        %v2935 = vadd.f32 %v2933, %v2934
        %v2936 = vsel %vm1175, %v2910, 0.0
        %v2937 = vadd.f32 %v2935, %v2936
        %v2938 = vsel %vm1175, %v2911, 0.0
        %v2939 = vadd.f32 %v2937, %v2938
        %v2940 = vsel %vm1175, %v2912, 0.0
        %v2941 = vadd.f32 %v2939, %v2940
        %v2942 = vsel %vm1175, %v2913, 0.0
        %v2943 = vadd.f32 %v2941, %v2942
        %v2944 = vsel %vm1175, %v2914, 0.0
        %v2945 = vadd.f32 %v2943, %v2944
        %v2946 = vsel %vm1175, %v2915, 0.0
        %v2947 = vadd.f32 %v2945, %v2946
        %v2948 = vsel %vm1175, %v2916, 0.0
        %v2949 = vadd.f32 %v2947, %v2948
        %2950 = vadd.xlane.f32.xlu0 %v2949
        %v2951 = vpop.xlane.xlu0 %2950
        %v2952 = vrot.slane %v2951, 4
        %v2953 = vadd.f32 %v2951, %v2952
        %v2954 = vrot.slane %v2953, 2
        %v2955 = vadd.f32 %v2953, %v2954
        %v2956 = vrot.slane %v2955, 1
        %v2957 = vadd.f32 %v2955, %v2956
        %s2958 = vtos %v2957
        %v2959 = vstv %s2958
        %vm2960 = vcmask 0
        %2961 = vst.msk [vmem:[%s366] sm:$0x1] %vm2960, %v2959
        %v2962 = vmul.f32 %v2917, %v2917
        %v2963 = vmul.f32 %v2918, %v2918
        %v2964 = vadd.f32 %v2962, %v2963
        %2965 = vadd.xlane.f32.xlu0 %v2964
        %v2966 = vpop.xlane.xlu0 %2965
        %v2967 = vrot.slane %v2966, 4
        %v2968 = vadd.f32 %v2966, %v2967
        %v2969 = vrot.slane %v2968, 2
        %v2970 = vadd.f32 %v2968, %v2969
        %v2971 = vrot.slane %v2970, 1
        %v2972 = vadd.f32 %v2970, %v2971
        %s2973 = vtos %v2972
        %v2974 = vstv %s2973
        %vm2975 = vcmask 8200
        %2976 = vst.msk [vmem:[%s366] sm:$0x1] %vm2975, %v2974
        %s2977 = sand.u32 %s172, 1
        %s2978 = scalar_lea.sflag [#allocation4], %s2977
        %s2979 = sand.u32 %s172, 1
        %s2980 = scalar_lea.vmem [#allocation13], %s2979
        // Predicated region
        $region69: #{combined_loss.1} parent=43 // pred_check
          %p2981 = pneg %p182
        $region70: #{combined_loss.1} parent=43 // pred_check_branch
          %2983 = sbr.rel (%p2981) target = $region72
        $region71: #{combined_loss.1} parent=43 // pred_region
          %s2985 = ssub.s32 16, 16
          %2986 = vsyncadd %s2978, %s2985
          %s2987 = smul.addr %s28, 16
          %s2988 = scalar_lea.hbm %s6, %s2987
          %s2990 = sshll.u32 %s2980, 4
          %s2991 = int_to_ptr.vmem [resolvable:$true] %s2990
          %2993 = dma.vmem_to_hbm [thread:$0]  %s2991, 16, %s2988, %s2978
        $region72: #{combined_loss.1} parent=43 // pred_fallthru
          _
      $region44: #{combined_loss.1} parent=5 // pred_fallthru
        _
      %p2994 = scmp.le.s32.totalorder 2, %s23
      // Predicated region
      $region73: #{combined_loss.1} parent=5 // pred_check
        %p2995 = pneg %p2994
      $region74: #{combined_loss.1} parent=5 // pred_check_branch
        %2997 = sbr.rel (%p2995) target = $region76
      $region75: #{combined_loss.1} parent=5 // pred_region
        %s2998 = ssub.s32 %s23, 2
        // Predicated region
        $region77: #{combined_loss.1} parent=75 // pred_check
          %p2999 = pneg %p188
        $region78: #{combined_loss.1} parent=75 // pred_check_branch
          %3001 = sbr.rel (%p2999) target = $region80
        $region79: #{combined_loss.1} parent=75 // pred_region
          %s3002 = sand.u32 %s173, 1
          %s3003 = scalar_lea.sflag [#allocation4], %s3002
          %s3004 = sand.u32 %s173, 1
          %s3005 = scalar_lea.vmem [#allocation13], %s3004
          %3006 = dma.done %s3003, 16
        $region80: #{combined_loss.1} parent=75 // pred_fallthru
          _
      $region76: #{combined_loss.1} parent=5 // pred_fallthru
        _
    $region6: #{combined_loss.1} parent=1 // loop_footer
      %s27 = sadd.s32 1, %s23
    $region7: #{combined_loss.1} parent=1 // loop_footer_branch
      %22 = sbr.rel target = $region3
    $region8: #{combined_loss.1} parent=1 // loop_exit
      _
    %3007 = vsyncpa [#allocation3], 1
    %s3008 = scalar_lea.sflag [#allocation3], 1
    %3009 = vsyncpa %s3008, 1
    %3010 = vsyncpa [#allocation6], 1
    %s3011 = scalar_lea.sflag [#allocation6], 1
    %3012 = vsyncpa %s3011, 1
    %3013 = vsyncpa [#allocation9], 1
    %3014 = vsyncpa [#allocation12], 1
    %3015 = vsyncpa [#allocation4], 1
    %s3016 = scalar_lea.sflag [#allocation4], 1
    %3017 = vsyncpa %s3016, 1

</llo_original>
